<compile_context>
chip_gen: v7x
topology: tpu7x:2x2x1
jax: 0.10.0
libtpu: 0.0.40
codegen_flags: <defaults>
</compile_context>

<pallas_src>
import math
import jax
import jax.numpy as jnp
from jax import lax
from jax.experimental import pallas as pl
from jax.experimental.pallas import tpu as pltpu


def _round_up(x, m):
    return ((x + m - 1) // m) * m


# --------------------------------------------------------------------------
# Kernel A: window + merged DFT + magnitude + hoisted GRU input projection
# --------------------------------------------------------------------------
def stft_gi_kernel(fr_ref, win_ref, dft_ref, wih_ref, bih_ref, spec_ref, gi_ref):
    fr = fr_ref[...] * win_ref[...]                                   # [RT, Wp] f32
    # merged DFT: one matmul producing [re | im] (cos | -sin packed in dft_ref)
    spec = jnp.dot(fr.astype(jnp.bfloat16), dft_ref[...],
                   preferred_element_type=jnp.float32)                # [RT, 2*Fp]
    spec_ref[...] = spec.astype(jnp.bfloat16)                         # bf16 inter-kernel
    Fp = spec.shape[-1] // 2
    re = spec[:, :Fp]
    im = spec[:, Fp:]
    mag = jnp.sqrt(re * re + im * im)                                 # [RT, Fp] f32
    # hoisted GRU input projection (each gate in its own 128-lane slot)
    gi_ref[...] = jnp.dot(mag.astype(jnp.bfloat16), wih_ref[...],
                          preferred_element_type=jnp.float32) + bih_ref[...]


def stft_gi_pallas(frames_flat, win_pad, dft, w_ih, b_ih, row_tile):
    rows_p, Wp = frames_flat.shape
    two_Fp = dft.shape[1]
    Fp = w_ih.shape[0]
    G = w_ih.shape[1]
    return pl.pallas_call(
        stft_gi_kernel,
        out_shape=(jax.ShapeDtypeStruct((rows_p, two_Fp), jnp.bfloat16),
                   jax.ShapeDtypeStruct((rows_p, G), jnp.float32)),
        grid=(rows_p // row_tile,),
        in_specs=[
            pl.BlockSpec((row_tile, Wp), lambda i: (i, 0)),
            pl.BlockSpec((1, Wp), lambda i: (0, 0)),
            pl.BlockSpec((Wp, two_Fp), lambda i: (0, 0)),
            pl.BlockSpec((Fp, G), lambda i: (0, 0)),
            pl.BlockSpec((1, G), lambda i: (0, 0)),
        ],
        out_specs=(
            pl.BlockSpec((row_tile, two_Fp), lambda i: (i, 0)),
            pl.BlockSpec((row_tile, G), lambda i: (i, 0)),
        ),
        compiler_params=pltpu.CompilerParams(dimension_semantics=("parallel",)),
    )(frames_flat, win_pad, dft, w_ih, b_ih)


# --------------------------------------------------------------------------
# Kernel B: fused two-pass GRU recurrence (PyTorch gate order r, z, n).
# grid = (2 passes, T_pad/Tc chunks); h lives in VMEM scratch for the whole grid.
# Pass 0 only advances the state (out block index pinned to 0, never flushed with
# stale data); pass 1 re-runs the recurrence warm-started and emits the sequence.
# Padded hidden lanes (>= H) stay exactly zero by construction.
# --------------------------------------------------------------------------
def _gru_cell(gi, h, w_hh_bf16, b_hh):
    Hp = h.shape[-1]
    gh = jnp.dot(h.astype(jnp.bfloat16), w_hh_bf16,
                 preferred_element_type=jnp.float32) + b_hh           # [Bp, 3*Hp]
    r = jax.nn.sigmoid(gi[:, 0:Hp] + gh[:, 0:Hp])
    z = jax.nn.sigmoid(gi[:, Hp:2 * Hp] + gh[:, Hp:2 * Hp])
    n = jnp.tanh(gi[:, 2 * Hp:3 * Hp] + r * gh[:, 2 * Hp:3 * Hp])
    return (1.0 - z) * n + z * h


def make_gru_fused_kernel(T_real, Tc):
    needs_guard = (T_real % Tc) != 0   # padded timesteps exist only in the last chunk

    def kernel(gi_ref, whh_ref, bhh_ref, out_ref, h_scr):
        p = pl.program_id(0)   # pass index: 0 = state warm-up, 1 = emit sequence
        c = pl.program_id(1)   # chunk index

        @pl.when(jnp.logical_and(p == 0, c == 0))
        def _():
            h_scr[...] = jnp.zeros_like(h_scr)

        whh = whh_ref[...]
        bhh = bhh_ref[...]
        t0 = c * Tc

        def body(i, h):
            h_new = _gru_cell(gi_ref[i], h, whh, bhh)
            if needs_guard:
                # padded timesteps (t >= T_real) must not advance the state
                h_new = jnp.where(t0 + i < T_real, h_new, h)
            out_ref[i] = h_new
            return h_new

        h_scr[...] = lax.fori_loop(0, Tc, body, h_scr[...], unroll=True)

    return kernel


def gru_fused_pallas(gi3, w_hh, b_hh, Tc, T_real):
    T_pad, Bp, G = gi3.shape
    Hp = w_hh.shape[0]
    n_chunks = T_pad // Tc
    kernel = make_gru_fused_kernel(T_real, Tc)
    return pl.pallas_call(
        kernel,
        out_shape=jax.ShapeDtypeStruct((T_pad, Bp, Hp), jnp.float32),
        grid=(2, n_chunks),
        in_specs=[
            pl.BlockSpec((Tc, Bp, G), lambda p, c: (c, 0, 0)),
            pl.BlockSpec((Hp, G), lambda p, c: (0, 0)),
            pl.BlockSpec((1, G), lambda p, c: (0, 0)),
        ],
        # pass 0: pinned to block 0 (resident, fully overwritten by pass-1 chunk 0
        # before it is ever flushed); pass 1: one block per chunk.
        out_specs=pl.BlockSpec((Tc, Bp, Hp), lambda p, c: (c * p, 0, 0)),
        scratch_shapes=[pltpu.VMEM((Bp, Hp), jnp.float32)],
        compiler_params=pltpu.CompilerParams(
            dimension_semantics=("arbitrary", "arbitrary")),
    )(gi3, w_hh, b_hh)


# --------------------------------------------------------------------------
# Kernel C: dense gains + spectral mask + split inverse DFT + synthesis window
# --------------------------------------------------------------------------
def gain_istft_kernel(h_ref, spec_ref, wout_ref, bout_ref, idre_ref, idim_ref,
                      win_ref, out_ref):
    gains = jax.nn.sigmoid(
        jnp.dot(h_ref[...].astype(jnp.bfloat16), wout_ref[...],
                preferred_element_type=jnp.float32) + bout_ref[...])  # [RT, Fp] f32
    spec = spec_ref[...]                                              # [RT, 2*Fp] bf16
    Fp = gains.shape[-1]
    re = (spec[:, :Fp] * gains).astype(jnp.bfloat16)                  # [RT, Fp]
    im = (spec[:, Fp:] * gains).astype(jnp.bfloat16)
    frames = (jnp.dot(re, idre_ref[...], preferred_element_type=jnp.float32)
              + jnp.dot(im, idim_ref[...], preferred_element_type=jnp.float32))
    out_ref[...] = frames * win_ref[...]


def gain_istft_pallas(hidden_flat, spec_flat, w_out, b_out, idft_re, idft_im,
                      win_pad, row_tile):
    rows_p, Hp = hidden_flat.shape
    two_Fp = spec_flat.shape[1]
    Fp = two_Fp // 2
    Wp = idft_re.shape[1]
    return pl.pallas_call(
        gain_istft_kernel,
        out_shape=jax.ShapeDtypeStruct((rows_p, Wp), jnp.float32),
        grid=(rows_p // row_tile,),
        in_specs=[
            pl.BlockSpec((row_tile, Hp), lambda i: (i, 0)),
            pl.BlockSpec((row_tile, two_Fp), lambda i: (i, 0)),
            pl.BlockSpec((Hp, Fp), lambda i: (0, 0)),
            pl.BlockSpec((1, Fp), lambda i: (0, 0)),
            pl.BlockSpec((Fp, Wp), lambda i: (0, 0)),
            pl.BlockSpec((Fp, Wp), lambda i: (0, 0)),
            pl.BlockSpec((1, Wp), lambda i: (0, 0)),
        ],
        out_specs=pl.BlockSpec((row_tile, Wp), lambda i: (i, 0)),
        compiler_params=pltpu.CompilerParams(dimension_semantics=("parallel",)),
    )(hidden_flat, spec_flat, w_out, b_out, idft_re, idft_im, win_pad)


# --------------------------------------------------------------------------
# Parameter / constant preparation (padding + DFT matrices, bf16 weights)
# --------------------------------------------------------------------------
def init_params(key, F, H):
    """Torch-layout params, uniform(-1/sqrt(H), 1/sqrt(H)), gate order [r, z, n]."""
    ks = jax.random.split(key, 6)
    bound = 1.0 / math.sqrt(H)
    u = lambda k, shape: jax.random.uniform(k, shape, jnp.float32, -bound, bound)
    return {
        "w_ih": u(ks[0], (3 * H, F)),     # GRU weight_ih_l0
        "w_hh": u(ks[1], (3 * H, H)),     # GRU weight_hh_l0
        "b_ih": u(ks[2], (3 * H,)),
        "b_hh": u(ks[3], (3 * H,)),
        "w_out": u(ks[4], (F, H)),        # Linear weight [F, H]
        "b_out": u(ks[5], (F,)),
    }


def prepare_params(raw, W):
    F = W // 2 + 1
    H = raw["w_hh"].shape[1]
    Fp = _round_up(F, 128)
    Wp = _round_up(W, 128)
    Hp = _round_up(H, 128)

    w_ih_pad = jnp.zeros((Fp, 3 * Hp), jnp.float32)
    w_hh_pad = jnp.zeros((Hp, 3 * Hp), jnp.float32)
    b_ih_pad = jnp.zeros((1, 3 * Hp), jnp.float32)
    b_hh_pad = jnp.zeros((1, 3 * Hp), jnp.float32)
    for g in range(3):                     # each gate in its own 128-lane slot
        w_ih_pad = w_ih_pad.at[:F, g * Hp:g * Hp + H].set(raw["w_ih"][g * H:(g + 1) * H, :].T)
        w_hh_pad = w_hh_pad.at[:H, g * Hp:g * Hp + H].set(raw["w_hh"][g * H:(g + 1) * H, :].T)
        b_ih_pad = b_ih_pad.at[0, g * Hp:g * Hp + H].set(raw["b_ih"][g * H:(g + 1) * H])
        b_hh_pad = b_hh_pad.at[0, g * Hp:g * Hp + H].set(raw["b_hh"][g * H:(g + 1) * H])

    w_out_pad = jnp.zeros((Hp, Fp), jnp.float32).at[:H, :F].set(raw["w_out"].T)
    b_out_pad = jnp.zeros((1, Fp), jnp.float32).at[0, :F].set(raw["b_out"])

    # merged forward DFT ([cos | -sin]) and split inverse DFT, zero-padded
    k = jnp.arange(F, dtype=jnp.float32)
    n = jnp.arange(W, dtype=jnp.float32)
    ang = 2.0 * math.pi * n[:, None] * k[None, :] / W                 # [W, F]
    dft = jnp.zeros((Wp, 2 * Fp), jnp.float32)
    dft = dft.at[:W, :F].set(jnp.cos(ang)).at[:W, Fp:Fp + F].set(-jnp.sin(ang))

    wk = jnp.ones((F,), jnp.float32).at[1:F - 1].set(2.0)             # rfft fold factors
    iang = 2.0 * math.pi * k[:, None] * n[None, :] / W                # [F, W]
    icos = wk[:, None] * jnp.cos(iang) / W
    isin = wk[:, None] * jnp.sin(iang) / W
    idft_re = jnp.zeros((Fp, Wp), jnp.float32).at[:F, :W].set(icos)
    idft_im = jnp.zeros((Fp, Wp), jnp.float32).at[:F, :W].set(-isin)

    win = 0.5 - 0.5 * jnp.cos(2.0 * math.pi * jnp.arange(W) / W)      # periodic Hann
    win_pad = jnp.zeros((1, Wp), jnp.float32).at[0, :W].set(win)

    return {
        "w_ih_pad": w_ih_pad.astype(jnp.bfloat16),
        "b_ih_pad": b_ih_pad,
        "w_hh_pad": w_hh_pad.astype(jnp.bfloat16),
        "b_hh_pad": b_hh_pad,
        "w_out_pad": w_out_pad.astype(jnp.bfloat16),
        "b_out_pad": b_out_pad,
        "dft": dft.astype(jnp.bfloat16),
        "idft_re": idft_re.astype(jnp.bfloat16),
        "idft_im": idft_im.astype(jnp.bfloat16),
        "win_pad": win_pad,
        "win": win.astype(jnp.float32),
    }


# --------------------------------------------------------------------------
# Full forward pass
# --------------------------------------------------------------------------
def simple_enhancer_forward(waveform, p, W, hop):
    assert W == 2 * hop, "50% overlap assumed"
    B, L = waveform.shape
    T = 1 + (L - W) // hop
    Wp = p["dft"].shape[0]
    Hp = p["w_hh_pad"].shape[0]
    G = 3 * Hp

    # shared flat layout: rows = (timestep, padded batch); one row tile = one GRU chunk
    Bp = _round_up(B, 8)                          # 8 sublanes minimum
    Tc = max(1, min(T, 256 // Bp))                # ~256-row tiles for 256-wide MXU
    row_tile = Tc * Bp
    T_pad = _round_up(T, Tc)
    rows_p = T_pad * Bp

    # ---- framing (XLA gather) ----
    # TODO(synk): build frames inside Kernel A via hop-strided DMA to avoid this copy.
    idx = jnp.arange(T)[:, None] * hop + jnp.arange(W)[None, :]
    frames_tb = jnp.transpose(waveform[:, idx], (1, 0, 2))            # [T, B, W]
    frames_flat = jnp.zeros((T_pad, Bp, Wp), jnp.float32)
    frames_flat = frames_flat.at[:T, :B, :W].set(frames_tb).reshape(rows_p, Wp)

    # ---- Kernel A: window + DFT + |.| + hoisted GRU input projection ----
    spec_flat, gi_flat = stft_gi_pallas(frames_flat, p["win_pad"], p["dft"],
                                        p["w_ih_pad"], p["b_ih_pad"], row_tile)

    # ---- Kernel B: fused two-pass GRU (torch: run once for state, again warm-started) ----
    gi3 = gi_flat.reshape(T_pad, Bp, G)           # pure dimension split (no copy)
    hidden3 = gru_fused_pallas(gi3, p["w_hh_pad"], p["b_hh_pad"], Tc, T)
    hidden_flat = hidden3.reshape(rows_p, Hp)     # pure dimension merge (no copy)

    # ---- Kernel C: gains + mask + inverse DFT + synthesis window ----
    frames_syn_flat = gain_istft_pallas(hidden_flat, spec_flat, p["w_out_pad"],
                                        p["b_out_pad"], p["idft_re"], p["idft_im"],
                                        p["win_pad"], row_tile)
    frames_syn = frames_syn_flat.reshape(T_pad, Bp, Wp)[:T, :B, :W]   # [T, B, W]

    # ---- vectorized overlap-add (50% overlap) + win^2 normalization ----
    halves = frames_syn.reshape(T, B, 2, hop)
    blocks = jnp.zeros((T + 1, B, hop), jnp.float32)
    blocks = blocks.at[:T].add(halves[:, :, 0, :])
    blocks = blocks.at[1:].add(halves[:, :, 1, :])
    recon = jnp.transpose(blocks, (1, 0, 2)).reshape(B, (T + 1) * hop)

    win2 = (p["win"] * p["win"]).reshape(2, hop)
    wblocks = jnp.zeros((T + 1, hop), jnp.float32)
    wblocks = wblocks.at[:T].add(win2[0][None, :])
    wblocks = wblocks.at[1:].add(win2[1][None, :])
    wsum = wblocks.reshape((T + 1) * hop)
    recon = recon / jnp.maximum(wsum, 1e-8)[None, :]

    out_len = (T + 1) * hop
    if out_len < L:                                  # trailing, un-framed samples
        recon = jnp.pad(recon, ((0, 0), (0, L - out_len)))
    return recon


if __name__ == "__main__":
    # module defaults: 16 kHz, 30 ms window -> W = 480, hop = 240, F = 241, H = 24
    samplerate = 16000
    window_ms = 30
    W = samplerate * window_ms // 1000            # 480
    hop = W // 2                                  # 240
    F = W // 2 + 1                                # 241
    H = 24                                        # GRU hidden size
    B = 2                                         # batch
    T = 8                                         # frames
    L = (T - 1) * hop + W                         # 2160 samples

    key = jax.random.PRNGKey(0)
    k_wave, k_params = jax.random.split(key)
    waveform = jax.random.normal(k_wave, (B, L), jnp.float32) * 0.1
    raw_params = init_params(k_params, F, H)
    prepared = prepare_params(raw_params, W)

    fwd = jax.jit(simple_enhancer_forward, static_argnums=(2, 3))
    out = fwd(waveform, prepared, W, hop)
    out = jax.block_until_ready(out)
    assert out.shape == (B, L) and out.dtype == jnp.float32
    print("KERNEL_OK")
</pallas_src>

<mosaic_0001>
module attributes {stable_mosaic.version = 11 : i64} {
  func.func private @main(%arg0: i32) attributes {dimension_semantics = [#tpu.dimension_semantics<core_parallel>], iteration_bounds = array<i64: 2>, tpu.core_type = #tpu.core_type<sc_scalar_subcore>, window_params = []} {
    return
  }
}

module attributes {stable_mosaic.version = 11 : i64} {
  func.func private @main(%arg0: i32) attributes {dimension_semantics = [#tpu.dimension_semantics<core_parallel>], iteration_bounds = array<i64: 2>, tpu.core_type = #tpu.core_type<sc_scalar_subcore>, window_params = []} {
    return
  }
}

module attributes {stable_mosaic.version = 11 : i64} {
  func.func @stft_gi_kernel(%arg0: i32, %arg1: memref<64x512xf32, #tpu.memory_space<vmem>>, %arg2: memref<1x512xf32, #tpu.memory_space<vmem>>, %arg3: memref<512x512xbf16, #tpu.memory_space<vmem>>, %arg4: memref<256x384xbf16, #tpu.memory_space<vmem>>, %arg5: memref<1x384xf32, #tpu.memory_space<vmem>>, %arg6: memref<64x512xbf16, #tpu.memory_space<vmem>>, %arg7: memref<64x384xf32, #tpu.memory_space<vmem>>) attributes {dimension_semantics = [#tpu.dimension_semantics<parallel>], iteration_bounds = array<i64: 1>, scalar_prefetch = 0 : i64, scratch_operands = 0 : i64, tpu.core_type = #tpu.core_type<tc>, window_params = [{transform_indices = @transform_0, window_bounds = array<i64: 64, 512>}, {pipeline_mode = #tpu.pipeline_mode<synchronous>, transform_indices = @transform_1, window_bounds = array<i64: 1, 512>}, {pipeline_mode = #tpu.pipeline_mode<synchronous>, transform_indices = @transform_2, window_bounds = array<i64: 512, 512>}, {pipeline_mode = #tpu.pipeline_mode<synchronous>, transform_indices = @transform_3, window_bounds = array<i64: 256, 384>}, {pipeline_mode = #tpu.pipeline_mode<synchronous>, transform_indices = @transform_4, window_bounds = array<i64: 1, 384>}, {transform_indices = @transform_5, window_bounds = array<i64: 64, 512>}, {transform_indices = @transform_6, window_bounds = array<i64: 64, 384>}]} {
    %c0 = arith.constant 0 : index
    %c0_0 = arith.constant 0 : index
    %0 = vector.load %arg1[%c0, %c0_0] : memref<64x512xf32, #tpu.memory_space<vmem>>, vector<64x512xf32>
    %c0_1 = arith.constant 0 : index
    %c0_2 = arith.constant 0 : index
    %1 = vector.load %arg2[%c0_1, %c0_2] : memref<1x512xf32, #tpu.memory_space<vmem>>, vector<1x512xf32>
    %2 = vector.broadcast %1 : vector<1x512xf32> to vector<64x512xf32>
    %3 = arith.mulf %0, %2 : vector<64x512xf32>
    %4 = arith.truncf %3 : vector<64x512xf32> to vector<64x512xbf16>
    %c0_3 = arith.constant 0 : index
    %c0_4 = arith.constant 0 : index
    %5 = vector.load %arg3[%c0_3, %c0_4] : memref<512x512xbf16, #tpu.memory_space<vmem>>, vector<512x512xbf16>
    %cst = arith.constant dense<0.000000e+00> : vector<64x512xf32>
    %6 = tpu.matmul %4, %5, %cst {dimension_numbers = #tpu.dot_dimension_numbers<[1], [0], [0], [1], [0, 0, 1, 1], [], []>} : vector<64x512xbf16>, vector<512x512xbf16>, vector<64x512xf32> -> vector<64x512xf32>
    %7 = arith.truncf %6 : vector<64x512xf32> to vector<64x512xbf16>
    %c0_5 = arith.constant 0 : index
    %c0_6 = arith.constant 0 : index
    %8 = vector.load %arg6[%c0_5, %c0_6] : memref<64x512xbf16, #tpu.memory_space<vmem>>, vector<64x512xbf16>
    tpu.vector_store %arg6[%c0_5, %c0_6], %7 {strides = array<i32>} : memref<64x512xbf16, #tpu.memory_space<vmem>>, vector<64x512xbf16>,
    %9 = vector.extract_strided_slice %6 {offsets = [0, 0], sizes = [64, 256], strides = [1, 1]} : vector<64x512xf32> to vector<64x256xf32>
    %10 = vector.extract_strided_slice %6 {offsets = [0, 256], sizes = [64, 256], strides = [1, 1]} : vector<64x512xf32> to vector<64x256xf32>
    %11 = arith.mulf %9, %9 : vector<64x256xf32>
    %12 = arith.mulf %10, %10 : vector<64x256xf32>
    %13 = arith.addf %11, %12 : vector<64x256xf32>
    %14 = math.sqrt %13 : vector<64x256xf32>
    %15 = arith.truncf %14 : vector<64x256xf32> to vector<64x256xbf16>
    %c0_7 = arith.constant 0 : index
    %c0_8 = arith.constant 0 : index
    %16 = vector.load %arg4[%c0_7, %c0_8] : memref<256x384xbf16, #tpu.memory_space<vmem>>, vector<256x384xbf16>
    %cst_9 = arith.constant dense<0.000000e+00> : vector<64x384xf32>
    %17 = tpu.matmul %15, %16, %cst_9 {dimension_numbers = #tpu.dot_dimension_numbers<[1], [0], [0], [1], [0, 0, 1, 1], [], []>} : vector<64x256xbf16>, vector<256x384xbf16>, vector<64x384xf32> -> vector<64x384xf32>
    %c0_10 = arith.constant 0 : index
    %c0_11 = arith.constant 0 : index
    %18 = vector.load %arg5[%c0_10, %c0_11] : memref<1x384xf32, #tpu.memory_space<vmem>>, vector<1x384xf32>
    %19 = vector.broadcast %18 : vector<1x384xf32> to vector<64x384xf32>
    %20 = arith.addf %17, %19 : vector<64x384xf32>
    %c0_12 = arith.constant 0 : index
    %c0_13 = arith.constant 0 : index
    %21 = vector.load %arg7[%c0_12, %c0_13] : memref<64x384xf32, #tpu.memory_space<vmem>>, vector<64x384xf32>
    tpu.vector_store %arg7[%c0_12, %c0_13], %20 {strides = array<i32>} : memref<64x384xf32, #tpu.memory_space<vmem>>, vector<64x384xf32>,
    return
  }
  func.func @transform_0(%arg0: i32) -> (i32, i32) {
    %c0_i32 = arith.constant 0 : i32
    %c0_i32_0 = arith.constant 0 : i32
    return %arg0, %c0_i32 : i32, i32
  }
  func.func @transform_1(%arg0: i32) -> (i32, i32) {
    %c0_i32 = arith.constant 0 : i32
    %c0_i32_0 = arith.constant 0 : i32
    %c0_i32_1 = arith.constant 0 : i32
    return %c0_i32, %c0_i32_0 : i32, i32
  }
  func.func @transform_2(%arg0: i32) -> (i32, i32) {
    %c0_i32 = arith.constant 0 : i32
    %c0_i32_0 = arith.constant 0 : i32
    %c0_i32_1 = arith.constant 0 : i32
    return %c0_i32, %c0_i32_0 : i32, i32
  }
  func.func @transform_3(%arg0: i32) -> (i32, i32) {
    %c0_i32 = arith.constant 0 : i32
    %c0_i32_0 = arith.constant 0 : i32
    %c0_i32_1 = arith.constant 0 : i32
    return %c0_i32, %c0_i32_0 : i32, i32
  }
  func.func @transform_4(%arg0: i32) -> (i32, i32) {
    %c0_i32 = arith.constant 0 : i32
    %c0_i32_0 = arith.constant 0 : i32
    %c0_i32_1 = arith.constant 0 : i32
    return %c0_i32, %c0_i32_0 : i32, i32
  }
  func.func @transform_5(%arg0: i32) -> (i32, i32) {
    %c0_i32 = arith.constant 0 : i32
    %c0_i32_0 = arith.constant 0 : i32
    return %arg0, %c0_i32 : i32, i32
  }
  func.func @transform_6(%arg0: i32) -> (i32, i32) {
    %c0_i32 = arith.constant 0 : i32
    %c0_i32_0 = arith.constant 0 : i32
    return %arg0, %c0_i32 : i32, i32
  }
}

module attributes {stable_mosaic.version = 11 : i64} {
  func.func @kernel(%arg0: i32, %arg1: i32, %arg2: memref<8x8x384xf32, #tpu.memory_space<vmem>>, %arg3: memref<128x384xbf16, #tpu.memory_space<vmem>>, %arg4: memref<1x384xf32, #tpu.memory_space<vmem>>, %arg5: memref<8x8x128xf32, #tpu.memory_space<vmem>>, %arg6: memref<8x128xf32, #tpu.memory_space<vmem>>) attributes {dimension_semantics = [#tpu.dimension_semantics<arbitrary>, #tpu.dimension_semantics<arbitrary>], iteration_bounds = array<i64: 2, 1>, scalar_prefetch = 0 : i64, scratch_operands = 1 : i64, tpu.core_type = #tpu.core_type<tc>, window_params = [{transform_indices = @transform_0, window_bounds = array<i64: 8, 8, 384>}, {pipeline_mode = #tpu.pipeline_mode<synchronous>, transform_indices = @transform_1, window_bounds = array<i64: 128, 384>}, {pipeline_mode = #tpu.pipeline_mode<synchronous>, transform_indices = @transform_2, window_bounds = array<i64: 1, 384>}, {transform_indices = @transform_3, window_bounds = array<i64: 8, 8, 128>}]} {
    %c0_i32 = arith.constant 0 : i32
    %0 = arith.cmpi eq, %arg0, %c0_i32 : i32
    %c0_i32_0 = arith.constant 0 : i32
    %1 = arith.cmpi eq, %arg1, %c0_i32_0 : i32
    %2 = arith.andi %0, %1 : i1
    %3 = arith.extui %2 : i1 to i32
    %c0_i32_1 = arith.constant 0 : i32
    %4 = arith.cmpi ne, %3, %c0_i32_1 : i32
    scf.if %4 {
      %cst_73 = arith.constant 0.000000e+00 : f32
      %305 = vector.broadcast %cst_73 : f32 to vector<8x128xf32>
      %c0_74 = arith.constant 0 : index
      %c0_75 = arith.constant 0 : index
      %306 = vector.load %arg6[%c0_74, %c0_75] : memref<8x128xf32, #tpu.memory_space<vmem>>, vector<8x128xf32>
      tpu.vector_store %arg6[%c0_74, %c0_75], %305 {strides = array<i32>} : memref<8x128xf32, #tpu.memory_space<vmem>>, vector<8x128xf32>,
    } else {
    }
    %c0 = arith.constant 0 : index
    %c0_2 = arith.constant 0 : index
    %5 = vector.load %arg3[%c0, %c0_2] : memref<128x384xbf16, #tpu.memory_space<vmem>>, vector<128x384xbf16>
    %c0_3 = arith.constant 0 : index
    %c0_4 = arith.constant 0 : index
    %6 = vector.load %arg4[%c0_3, %c0_4] : memref<1x384xf32, #tpu.memory_space<vmem>>, vector<1x384xf32>
    %c0_5 = arith.constant 0 : index
    %c0_6 = arith.constant 0 : index
    %7 = vector.load %arg6[%c0_5, %c0_6] : memref<8x128xf32, #tpu.memory_space<vmem>>, vector<8x128xf32>
    %c0_i32_7 = arith.constant 0 : i32
    %8 = arith.index_cast %c0_i32_7 : i32 to index
    %c0_8 = arith.constant 0 : index
    %c0_9 = arith.constant 0 : index
    %9 = vector.load %arg2[%8, %c0_8, %c0_9] : memref<8x8x384xf32, #tpu.memory_space<vmem>>, vector<1x8x384xf32>
    %10 = vector.shape_cast %9 : vector<1x8x384xf32> to vector<8x384xf32>
    %11 = arith.truncf %7 : vector<8x128xf32> to vector<8x128xbf16>
    %cst = arith.constant dense<0.000000e+00> : vector<8x384xf32>
    %12 = tpu.matmul %11, %5, %cst {dimension_numbers = #tpu.dot_dimension_numbers<[1], [0], [0], [1], [0, 0, 1, 1], [], []>} : vector<8x128xbf16>, vector<128x384xbf16>, vector<8x384xf32> -> vector<8x384xf32>
    %13 = vector.broadcast %6 : vector<1x384xf32> to vector<8x384xf32>
    %14 = arith.addf %12, %13 : vector<8x384xf32>
    %15 = vector.extract_strided_slice %10 {offsets = [0, 0], sizes = [8, 128], strides = [1, 1]} : vector<8x384xf32> to vector<8x128xf32>
    %16 = vector.extract_strided_slice %14 {offsets = [0, 0], sizes = [8, 128], strides = [1, 1]} : vector<8x384xf32> to vector<8x128xf32>
    %17 = arith.addf %15, %16 : vector<8x128xf32>
    %18 = arith.negf %17 : vector<8x128xf32>
    %19 = math.exp %18 : vector<8x128xf32>
    %cst_10 = arith.constant 1.000000e+00 : f32
    %20 = vector.broadcast %cst_10 : f32 to vector<8x128xf32>
    %21 = arith.addf %20, %19 : vector<8x128xf32>
    %22 = arith.divf %20, %21 : vector<8x128xf32>
    %23 = vector.extract_strided_slice %10 {offsets = [0, 128], sizes = [8, 128], strides = [1, 1]} : vector<8x384xf32> to vector<8x128xf32>
    %24 = vector.extract_strided_slice %14 {offsets = [0, 128], sizes = [8, 128], strides = [1, 1]} : vector<8x384xf32> to vector<8x128xf32>
    %25 = arith.addf %23, %24 : vector<8x128xf32>
    %26 = arith.negf %25 : vector<8x128xf32>
    %27 = math.exp %26 : vector<8x128xf32>
    %cst_11 = arith.constant 1.000000e+00 : f32
    %28 = vector.broadcast %cst_11 : f32 to vector<8x128xf32>
    %29 = arith.addf %28, %27 : vector<8x128xf32>
    %30 = arith.divf %28, %29 : vector<8x128xf32>
    %31 = vector.extract_strided_slice %10 {offsets = [0, 256], sizes = [8, 128], strides = [1, 1]} : vector<8x384xf32> to vector<8x128xf32>
    %32 = vector.extract_strided_slice %14 {offsets = [0, 256], sizes = [8, 128], strides = [1, 1]} : vector<8x384xf32> to vector<8x128xf32>
    %33 = arith.mulf %22, %32 : vector<8x128xf32>
    %34 = arith.addf %31, %33 : vector<8x128xf32>
    %35 = math.tanh %34 : vector<8x128xf32>
    %cst_12 = arith.constant 1.000000e+00 : f32
    %36 = vector.broadcast %cst_12 : f32 to vector<8x128xf32>
    %37 = arith.subf %36, %30 : vector<8x128xf32>
    %38 = arith.mulf %37, %35 : vector<8x128xf32>
    %39 = arith.mulf %30, %7 : vector<8x128xf32>
    %40 = arith.addf %38, %39 : vector<8x128xf32>
    %41 = arith.index_cast %c0_i32_7 : i32 to index
    %c0_13 = arith.constant 0 : index
    %c0_14 = arith.constant 0 : index
    %42 = vector.load %arg5[%41, %c0_13, %c0_14] : memref<8x8x128xf32, #tpu.memory_space<vmem>>, vector<1x8x128xf32>
    %43 = vector.shape_cast %42 : vector<1x8x128xf32> to vector<8x128xf32>
    %44 = vector.shape_cast %40 : vector<8x128xf32> to vector<1x8x128xf32>
    tpu.vector_store %arg5[%41, %c0_13, %c0_14], %44 {strides = array<i32>} : memref<8x8x128xf32, #tpu.memory_space<vmem>>, vector<1x8x128xf32>,
    %c1_i32 = arith.constant 1 : i32
    %45 = arith.index_cast %c1_i32 : i32 to index
    %c0_15 = arith.constant 0 : index
    %c0_16 = arith.constant 0 : index
    %46 = vector.load %arg2[%45, %c0_15, %c0_16] : memref<8x8x384xf32, #tpu.memory_space<vmem>>, vector<1x8x384xf32>
    %47 = vector.shape_cast %46 : vector<1x8x384xf32> to vector<8x384xf32>
    %48 = arith.truncf %40 : vector<8x128xf32> to vector<8x128xbf16>
    %cst_17 = arith.constant dense<0.000000e+00> : vector<8x384xf32>
    %49 = tpu.matmul %48, %5, %cst_17 {dimension_numbers = #tpu.dot_dimension_numbers<[1], [0], [0], [1], [0, 0, 1, 1], [], []>} : vector<8x128xbf16>, vector<128x384xbf16>, vector<8x384xf32> -> vector<8x384xf32>
    %50 = vector.broadcast %6 : vector<1x384xf32> to vector<8x384xf32>
    %51 = arith.addf %49, %50 : vector<8x384xf32>
    %52 = vector.extract_strided_slice %47 {offsets = [0, 0], sizes = [8, 128], strides = [1, 1]} : vector<8x384xf32> to vector<8x128xf32>
    %53 = vector.extract_strided_slice %51 {offsets = [0, 0], sizes = [8, 128], strides = [1, 1]} : vector<8x384xf32> to vector<8x128xf32>
    %54 = arith.addf %52, %53 : vector<8x128xf32>
    %55 = arith.negf %54 : vector<8x128xf32>
    %56 = math.exp %55 : vector<8x128xf32>
    %cst_18 = arith.constant 1.000000e+00 : f32
    %57 = vector.broadcast %cst_18 : f32 to vector<8x128xf32>
    %58 = arith.addf %57, %56 : vector<8x128xf32>
    %59 = arith.divf %57, %58 : vector<8x128xf32>
    %60 = vector.extract_strided_slice %47 {offsets = [0, 128], sizes = [8, 128], strides = [1, 1]} : vector<8x384xf32> to vector<8x128xf32>
    %61 = vector.extract_strided_slice %51 {offsets = [0, 128], sizes = [8, 128], strides = [1, 1]} : vector<8x384xf32> to vector<8x128xf32>
    %62 = arith.addf %60, %61 : vector<8x128xf32>
    %63 = arith.negf %62 : vector<8x128xf32>
    %64 = math.exp %63 : vector<8x128xf32>
    %cst_19 = arith.constant 1.000000e+00 : f32
    %65 = vector.broadcast %cst_19 : f32 to vector<8x128xf32>
    %66 = arith.addf %65, %64 : vector<8x128xf32>
    %67 = arith.divf %65, %66 : vector<8x128xf32>
    %68 = vector.extract_strided_slice %47 {offsets = [0, 256], sizes = [8, 128], strides = [1, 1]} : vector<8x384xf32> to vector<8x128xf32>
    %69 = vector.extract_strided_slice %51 {offsets = [0, 256], sizes = [8, 128], strides = [1, 1]} : vector<8x384xf32> to vector<8x128xf32>
    %70 = arith.mulf %59, %69 : vector<8x128xf32>
    %71 = arith.addf %68, %70 : vector<8x128xf32>
    %72 = math.tanh %71 : vector<8x128xf32>
    %cst_20 = arith.constant 1.000000e+00 : f32
    %73 = vector.broadcast %cst_20 : f32 to vector<8x128xf32>
    %74 = arith.subf %73, %67 : vector<8x128xf32>
    %75 = arith.mulf %74, %72 : vector<8x128xf32>
    %76 = arith.mulf %67, %40 : vector<8x128xf32>
    %77 = arith.addf %75, %76 : vector<8x128xf32>
    %78 = arith.index_cast %c1_i32 : i32 to index
    %c0_21 = arith.constant 0 : index
    %c0_22 = arith.constant 0 : index
    %79 = vector.load %arg5[%78, %c0_21, %c0_22] : memref<8x8x128xf32, #tpu.memory_space<vmem>>, vector<1x8x128xf32>
    %80 = vector.shape_cast %79 : vector<1x8x128xf32> to vector<8x128xf32>
    %81 = vector.shape_cast %77 : vector<8x128xf32> to vector<1x8x128xf32>
    tpu.vector_store %arg5[%78, %c0_21, %c0_22], %81 {strides = array<i32>} : memref<8x8x128xf32, #tpu.memory_space<vmem>>, vector<1x8x128xf32>,
    %c2_i32 = arith.constant 2 : i32
    %82 = arith.index_cast %c2_i32 : i32 to index
    %c0_23 = arith.constant 0 : index
    %c0_24 = arith.constant 0 : index
    %83 = vector.load %arg2[%82, %c0_23, %c0_24] : memref<8x8x384xf32, #tpu.memory_space<vmem>>, vector<1x8x384xf32>
    %84 = vector.shape_cast %83 : vector<1x8x384xf32> to vector<8x384xf32>
    %85 = arith.truncf %77 : vector<8x128xf32> to vector<8x128xbf16>
    %cst_25 = arith.constant dense<0.000000e+00> : vector<8x384xf32>
    %86 = tpu.matmul %85, %5, %cst_25 {dimension_numbers = #tpu.dot_dimension_numbers<[1], [0], [0], [1], [0, 0, 1, 1], [], []>} : vector<8x128xbf16>, vector<128x384xbf16>, vector<8x384xf32> -> vector<8x384xf32>
    %87 = vector.broadcast %6 : vector<1x384xf32> to vector<8x384xf32>
    %88 = arith.addf %86, %87 : vector<8x384xf32>
    %89 = vector.extract_strided_slice %84 {offsets = [0, 0], sizes = [8, 128], strides = [1, 1]} : vector<8x384xf32> to vector<8x128xf32>
    %90 = vector.extract_strided_slice %88 {offsets = [0, 0], sizes = [8, 128], strides = [1, 1]} : vector<8x384xf32> to vector<8x128xf32>
    %91 = arith.addf %89, %90 : vector<8x128xf32>
    %92 = arith.negf %91 : vector<8x128xf32>
    %93 = math.exp %92 : vector<8x128xf32>
    %cst_26 = arith.constant 1.000000e+00 : f32
    %94 = vector.broadcast %cst_26 : f32 to vector<8x128xf32>
    %95 = arith.addf %94, %93 : vector<8x128xf32>
    %96 = arith.divf %94, %95 : vector<8x128xf32>
    %97 = vector.extract_strided_slice %84 {offsets = [0, 128], sizes = [8, 128], strides = [1, 1]} : vector<8x384xf32> to vector<8x128xf32>
    %98 = vector.extract_strided_slice %88 {offsets = [0, 128], sizes = [8, 128], strides = [1, 1]} : vector<8x384xf32> to vector<8x128xf32>
    %99 = arith.addf %97, %98 : vector<8x128xf32>
    %100 = arith.negf %99 : vector<8x128xf32>
    %101 = math.exp %100 : vector<8x128xf32>
    %cst_27 = arith.constant 1.000000e+00 : f32
    %102 = vector.broadcast %cst_27 : f32 to vector<8x128xf32>
    %103 = arith.addf %102, %101 : vector<8x128xf32>
    %104 = arith.divf %102, %103 : vector<8x128xf32>
    %105 = vector.extract_strided_slice %84 {offsets = [0, 256], sizes = [8, 128], strides = [1, 1]} : vector<8x384xf32> to vector<8x128xf32>
    %106 = vector.extract_strided_slice %88 {offsets = [0, 256], sizes = [8, 128], strides = [1, 1]} : vector<8x384xf32> to vector<8x128xf32>
    %107 = arith.mulf %96, %106 : vector<8x128xf32>
    %108 = arith.addf %105, %107 : vector<8x128xf32>
    %109 = math.tanh %108 : vector<8x128xf32>
    %cst_28 = arith.constant 1.000000e+00 : f32
    %110 = vector.broadcast %cst_28 : f32 to vector<8x128xf32>
    %111 = arith.subf %110, %104 : vector<8x128xf32>
    %112 = arith.mulf %111, %109 : vector<8x128xf32>
    %113 = arith.mulf %104, %77 : vector<8x128xf32>
    %114 = arith.addf %112, %113 : vector<8x128xf32>
    %115 = arith.index_cast %c2_i32 : i32 to index
    %c0_29 = arith.constant 0 : index
    %c0_30 = arith.constant 0 : index
    %116 = vector.load %arg5[%115, %c0_29, %c0_30] : memref<8x8x128xf32, #tpu.memory_space<vmem>>, vector<1x8x128xf32>
    %117 = vector.shape_cast %116 : vector<1x8x128xf32> to vector<8x128xf32>
    %118 = vector.shape_cast %114 : vector<8x128xf32> to vector<1x8x128xf32>
    tpu.vector_store %arg5[%115, %c0_29, %c0_30], %118 {strides = array<i32>} : memref<8x8x128xf32, #tpu.memory_space<vmem>>, vector<1x8x128xf32>,
    %c3_i32 = arith.constant 3 : i32
    %119 = arith.index_cast %c3_i32 : i32 to index
    %c0_31 = arith.constant 0 : index
    %c0_32 = arith.constant 0 : index
    %120 = vector.load %arg2[%119, %c0_31, %c0_32] : memref<8x8x384xf32, #tpu.memory_space<vmem>>, vector<1x8x384xf32>
    %121 = vector.shape_cast %120 : vector<1x8x384xf32> to vector<8x384xf32>
    %122 = arith.truncf %114 : vector<8x128xf32> to vector<8x128xbf16>
    %cst_33 = arith.constant dense<0.000000e+00> : vector<8x384xf32>
    %123 = tpu.matmul %122, %5, %cst_33 {dimension_numbers = #tpu.dot_dimension_numbers<[1], [0], [0], [1], [0, 0, 1, 1], [], []>} : vector<8x128xbf16>, vector<128x384xbf16>, vector<8x384xf32> -> vector<8x384xf32>
    %124 = vector.broadcast %6 : vector<1x384xf32> to vector<8x384xf32>
    %125 = arith.addf %123, %124 : vector<8x384xf32>
    %126 = vector.extract_strided_slice %121 {offsets = [0, 0], sizes = [8, 128], strides = [1, 1]} : vector<8x384xf32> to vector<8x128xf32>
    %127 = vector.extract_strided_slice %125 {offsets = [0, 0], sizes = [8, 128], strides = [1, 1]} : vector<8x384xf32> to vector<8x128xf32>
    %128 = arith.addf %126, %127 : vector<8x128xf32>
    %129 = arith.negf %128 : vector<8x128xf32>
    %130 = math.exp %129 : vector<8x128xf32>
    %cst_34 = arith.constant 1.000000e+00 : f32
    %131 = vector.broadcast %cst_34 : f32 to vector<8x128xf32>
    %132 = arith.addf %131, %130 : vector<8x128xf32>
    %133 = arith.divf %131, %132 : vector<8x128xf32>
    %134 = vector.extract_strided_slice %121 {offsets = [0, 128], sizes = [8, 128], strides = [1, 1]} : vector<8x384xf32> to vector<8x128xf32>
    %135 = vector.extract_strided_slice %125 {offsets = [0, 128], sizes = [8, 128], strides = [1, 1]} : vector<8x384xf32> to vector<8x128xf32>
    %136 = arith.addf %134, %135 : vector<8x128xf32>
    %137 = arith.negf %136 : vector<8x128xf32>
    %138 = math.exp %137 : vector<8x128xf32>
    %cst_35 = arith.constant 1.000000e+00 : f32
    %139 = vector.broadcast %cst_35 : f32 to vector<8x128xf32>
    %140 = arith.addf %139, %138 : vector<8x128xf32>
    %141 = arith.divf %139, %140 : vector<8x128xf32>
    %142 = vector.extract_strided_slice %121 {offsets = [0, 256], sizes = [8, 128], strides = [1, 1]} : vector<8x384xf32> to vector<8x128xf32>
    %143 = vector.extract_strided_slice %125 {offsets = [0, 256], sizes = [8, 128], strides = [1, 1]} : vector<8x384xf32> to vector<8x128xf32>
    %144 = arith.mulf %133, %143 : vector<8x128xf32>
    %145 = arith.addf %142, %144 : vector<8x128xf32>
    %146 = math.tanh %145 : vector<8x128xf32>
    %cst_36 = arith.constant 1.000000e+00 : f32
    %147 = vector.broadcast %cst_36 : f32 to vector<8x128xf32>
    %148 = arith.subf %147, %141 : vector<8x128xf32>
    %149 = arith.mulf %148, %146 : vector<8x128xf32>
    %150 = arith.mulf %141, %114 : vector<8x128xf32>
    %151 = arith.addf %149, %150 : vector<8x128xf32>
    %152 = arith.index_cast %c3_i32 : i32 to index
    %c0_37 = arith.constant 0 : index
    %c0_38 = arith.constant 0 : index
    %153 = vector.load %arg5[%152, %c0_37, %c0_38] : memref<8x8x128xf32, #tpu.memory_space<vmem>>, vector<1x8x128xf32>
    %154 = vector.shape_cast %153 : vector<1x8x128xf32> to vector<8x128xf32>
    %155 = vector.shape_cast %151 : vector<8x128xf32> to vector<1x8x128xf32>
    tpu.vector_store %arg5[%152, %c0_37, %c0_38], %155 {strides = array<i32>} : memref<8x8x128xf32, #tpu.memory_space<vmem>>, vector<1x8x128xf32>,
    %c4_i32 = arith.constant 4 : i32
    %156 = arith.index_cast %c4_i32 : i32 to index
    %c0_39 = arith.constant 0 : index
    %c0_40 = arith.constant 0 : index
    %157 = vector.load %arg2[%156, %c0_39, %c0_40] : memref<8x8x384xf32, #tpu.memory_space<vmem>>, vector<1x8x384xf32>
    %158 = vector.shape_cast %157 : vector<1x8x384xf32> to vector<8x384xf32>
    %159 = arith.truncf %151 : vector<8x128xf32> to vector<8x128xbf16>
    %cst_41 = arith.constant dense<0.000000e+00> : vector<8x384xf32>
    %160 = tpu.matmul %159, %5, %cst_41 {dimension_numbers = #tpu.dot_dimension_numbers<[1], [0], [0], [1], [0, 0, 1, 1], [], []>} : vector<8x128xbf16>, vector<128x384xbf16>, vector<8x384xf32> -> vector<8x384xf32>
    %161 = vector.broadcast %6 : vector<1x384xf32> to vector<8x384xf32>
    %162 = arith.addf %160, %161 : vector<8x384xf32>
    %163 = vector.extract_strided_slice %158 {offsets = [0, 0], sizes = [8, 128], strides = [1, 1]} : vector<8x384xf32> to vector<8x128xf32>
    %164 = vector.extract_strided_slice %162 {offsets = [0, 0], sizes = [8, 128], strides = [1, 1]} : vector<8x384xf32> to vector<8x128xf32>
    %165 = arith.addf %163, %164 : vector<8x128xf32>
    %166 = arith.negf %165 : vector<8x128xf32>
    %167 = math.exp %166 : vector<8x128xf32>
    %cst_42 = arith.constant 1.000000e+00 : f32
    %168 = vector.broadcast %cst_42 : f32 to vector<8x128xf32>
    %169 = arith.addf %168, %167 : vector<8x128xf32>
    %170 = arith.divf %168, %169 : vector<8x128xf32>
    %171 = vector.extract_strided_slice %158 {offsets = [0, 128], sizes = [8, 128], strides = [1, 1]} : vector<8x384xf32> to vector<8x128xf32>
    %172 = vector.extract_strided_slice %162 {offsets = [0, 128], sizes = [8, 128], strides = [1, 1]} : vector<8x384xf32> to vector<8x128xf32>
    %173 = arith.addf %171, %172 : vector<8x128xf32>
    %174 = arith.negf %173 : vector<8x128xf32>
    %175 = math.exp %174 : vector<8x128xf32>
    %cst_43 = arith.constant 1.000000e+00 : f32
    %176 = vector.broadcast %cst_43 : f32 to vector<8x128xf32>
    %177 = arith.addf %176, %175 : vector<8x128xf32>
    %178 = arith.divf %176, %177 : vector<8x128xf32>
    %179 = vector.extract_strided_slice %158 {offsets = [0, 256], sizes = [8, 128], strides = [1, 1]} : vector<8x384xf32> to vector<8x128xf32>
    %180 = vector.extract_strided_slice %162 {offsets = [0, 256], sizes = [8, 128], strides = [1, 1]} : vector<8x384xf32> to vector<8x128xf32>
    %181 = arith.mulf %170, %180 : vector<8x128xf32>
    %182 = arith.addf %179, %181 : vector<8x128xf32>
    %183 = math.tanh %182 : vector<8x128xf32>
    %cst_44 = arith.constant 1.000000e+00 : f32
    %184 = vector.broadcast %cst_44 : f32 to vector<8x128xf32>
    %185 = arith.subf %184, %178 : vector<8x128xf32>
    %186 = arith.mulf %185, %183 : vector<8x128xf32>
    %187 = arith.mulf %178, %151 : vector<8x128xf32>
    %188 = arith.addf %186, %187 : vector<8x128xf32>
    %189 = arith.index_cast %c4_i32 : i32 to index
    %c0_45 = arith.constant 0 : index
    %c0_46 = arith.constant 0 : index
    %190 = vector.load %arg5[%189, %c0_45, %c0_46] : memref<8x8x128xf32, #tpu.memory_space<vmem>>, vector<1x8x128xf32>
    %191 = vector.shape_cast %190 : vector<1x8x128xf32> to vector<8x128xf32>
    %192 = vector.shape_cast %188 : vector<8x128xf32> to vector<1x8x128xf32>
    tpu.vector_store %arg5[%189, %c0_45, %c0_46], %192 {strides = array<i32>} : memref<8x8x128xf32, #tpu.memory_space<vmem>>, vector<1x8x128xf32>,
    %c5_i32 = arith.constant 5 : i32
    %193 = arith.index_cast %c5_i32 : i32 to index
    %c0_47 = arith.constant 0 : index
    %c0_48 = arith.constant 0 : index
    %194 = vector.load %arg2[%193, %c0_47, %c0_48] : memref<8x8x384xf32, #tpu.memory_space<vmem>>, vector<1x8x384xf32>
    %195 = vector.shape_cast %194 : vector<1x8x384xf32> to vector<8x384xf32>
    %196 = arith.truncf %188 : vector<8x128xf32> to vector<8x128xbf16>
    %cst_49 = arith.constant dense<0.000000e+00> : vector<8x384xf32>
    %197 = tpu.matmul %196, %5, %cst_49 {dimension_numbers = #tpu.dot_dimension_numbers<[1], [0], [0], [1], [0, 0, 1, 1], [], []>} : vector<8x128xbf16>, vector<128x384xbf16>, vector<8x384xf32> -> vector<8x384xf32>
    %198 = vector.broadcast %6 : vector<1x384xf32> to vector<8x384xf32>
    %199 = arith.addf %197, %198 : vector<8x384xf32>
    %200 = vector.extract_strided_slice %195 {offsets = [0, 0], sizes = [8, 128], strides = [1, 1]} : vector<8x384xf32> to vector<8x128xf32>
    %201 = vector.extract_strided_slice %199 {offsets = [0, 0], sizes = [8, 128], strides = [1, 1]} : vector<8x384xf32> to vector<8x128xf32>
    %202 = arith.addf %200, %201 : vector<8x128xf32>
    %203 = arith.negf %202 : vector<8x128xf32>
    %204 = math.exp %203 : vector<8x128xf32>
    %cst_50 = arith.constant 1.000000e+00 : f32
    %205 = vector.broadcast %cst_50 : f32 to vector<8x128xf32>
    %206 = arith.addf %205, %204 : vector<8x128xf32>
    %207 = arith.divf %205, %206 : vector<8x128xf32>
    %208 = vector.extract_strided_slice %195 {offsets = [0, 128], sizes = [8, 128], strides = [1, 1]} : vector<8x384xf32> to vector<8x128xf32>
    %209 = vector.extract_strided_slice %199 {offsets = [0, 128], sizes = [8, 128], strides = [1, 1]} : vector<8x384xf32> to vector<8x128xf32>
    %210 = arith.addf %208, %209 : vector<8x128xf32>
    %211 = arith.negf %210 : vector<8x128xf32>
    %212 = math.exp %211 : vector<8x128xf32>
    %cst_51 = arith.constant 1.000000e+00 : f32
    %213 = vector.broadcast %cst_51 : f32 to vector<8x128xf32>
    %214 = arith.addf %213, %212 : vector<8x128xf32>
    %215 = arith.divf %213, %214 : vector<8x128xf32>
    %216 = vector.extract_strided_slice %195 {offsets = [0, 256], sizes = [8, 128], strides = [1, 1]} : vector<8x384xf32> to vector<8x128xf32>
    %217 = vector.extract_strided_slice %199 {offsets = [0, 256], sizes = [8, 128], strides = [1, 1]} : vector<8x384xf32> to vector<8x128xf32>
    %218 = arith.mulf %207, %217 : vector<8x128xf32>
    %219 = arith.addf %216, %218 : vector<8x128xf32>
    %220 = math.tanh %219 : vector<8x128xf32>
    %cst_52 = arith.constant 1.000000e+00 : f32
    %221 = vector.broadcast %cst_52 : f32 to vector<8x128xf32>
    %222 = arith.subf %221, %215 : vector<8x128xf32>
    %223 = arith.mulf %222, %220 : vector<8x128xf32>
    %224 = arith.mulf %215, %188 : vector<8x128xf32>
    %225 = arith.addf %223, %224 : vector<8x128xf32>
    %226 = arith.index_cast %c5_i32 : i32 to index
    %c0_53 = arith.constant 0 : index
    %c0_54 = arith.constant 0 : index
    %227 = vector.load %arg5[%226, %c0_53, %c0_54] : memref<8x8x128xf32, #tpu.memory_space<vmem>>, vector<1x8x128xf32>
    %228 = vector.shape_cast %227 : vector<1x8x128xf32> to vector<8x128xf32>
    %229 = vector.shape_cast %225 : vector<8x128xf32> to vector<1x8x128xf32>
    tpu.vector_store %arg5[%226, %c0_53, %c0_54], %229 {strides = array<i32>} : memref<8x8x128xf32, #tpu.memory_space<vmem>>, vector<1x8x128xf32>,
    %c6_i32 = arith.constant 6 : i32
    %230 = arith.index_cast %c6_i32 : i32 to index
    %c0_55 = arith.constant 0 : index
    %c0_56 = arith.constant 0 : index
    %231 = vector.load %arg2[%230, %c0_55, %c0_56] : memref<8x8x384xf32, #tpu.memory_space<vmem>>, vector<1x8x384xf32>
    %232 = vector.shape_cast %231 : vector<1x8x384xf32> to vector<8x384xf32>
    %233 = arith.truncf %225 : vector<8x128xf32> to vector<8x128xbf16>
    %cst_57 = arith.constant dense<0.000000e+00> : vector<8x384xf32>
    %234 = tpu.matmul %233, %5, %cst_57 {dimension_numbers = #tpu.dot_dimension_numbers<[1], [0], [0], [1], [0, 0, 1, 1], [], []>} : vector<8x128xbf16>, vector<128x384xbf16>, vector<8x384xf32> -> vector<8x384xf32>
    %235 = vector.broadcast %6 : vector<1x384xf32> to vector<8x384xf32>
    %236 = arith.addf %234, %235 : vector<8x384xf32>
    %237 = vector.extract_strided_slice %232 {offsets = [0, 0], sizes = [8, 128], strides = [1, 1]} : vector<8x384xf32> to vector<8x128xf32>
    %238 = vector.extract_strided_slice %236 {offsets = [0, 0], sizes = [8, 128], strides = [1, 1]} : vector<8x384xf32> to vector<8x128xf32>
    %239 = arith.addf %237, %238 : vector<8x128xf32>
    %240 = arith.negf %239 : vector<8x128xf32>
    %241 = math.exp %240 : vector<8x128xf32>
    %cst_58 = arith.constant 1.000000e+00 : f32
    %242 = vector.broadcast %cst_58 : f32 to vector<8x128xf32>
    %243 = arith.addf %242, %241 : vector<8x128xf32>
    %244 = arith.divf %242, %243 : vector<8x128xf32>
    %245 = vector.extract_strided_slice %232 {offsets = [0, 128], sizes = [8, 128], strides = [1, 1]} : vector<8x384xf32> to vector<8x128xf32>
    %246 = vector.extract_strided_slice %236 {offsets = [0, 128], sizes = [8, 128], strides = [1, 1]} : vector<8x384xf32> to vector<8x128xf32>
    %247 = arith.addf %245, %246 : vector<8x128xf32>
    %248 = arith.negf %247 : vector<8x128xf32>
    %249 = math.exp %248 : vector<8x128xf32>
    %cst_59 = arith.constant 1.000000e+00 : f32
    %250 = vector.broadcast %cst_59 : f32 to vector<8x128xf32>
    %251 = arith.addf %250, %249 : vector<8x128xf32>
    %252 = arith.divf %250, %251 : vector<8x128xf32>
    %253 = vector.extract_strided_slice %232 {offsets = [0, 256], sizes = [8, 128], strides = [1, 1]} : vector<8x384xf32> to vector<8x128xf32>
    %254 = vector.extract_strided_slice %236 {offsets = [0, 256], sizes = [8, 128], strides = [1, 1]} : vector<8x384xf32> to vector<8x128xf32>
    %255 = arith.mulf %244, %254 : vector<8x128xf32>
    %256 = arith.addf %253, %255 : vector<8x128xf32>
    %257 = math.tanh %256 : vector<8x128xf32>
    %cst_60 = arith.constant 1.000000e+00 : f32
    %258 = vector.broadcast %cst_60 : f32 to vector<8x128xf32>
    %259 = arith.subf %258, %252 : vector<8x128xf32>
    %260 = arith.mulf %259, %257 : vector<8x128xf32>
    %261 = arith.mulf %252, %225 : vector<8x128xf32>
    %262 = arith.addf %260, %261 : vector<8x128xf32>
    %263 = arith.index_cast %c6_i32 : i32 to index
    %c0_61 = arith.constant 0 : index
    %c0_62 = arith.constant 0 : index
    %264 = vector.load %arg5[%263, %c0_61, %c0_62] : memref<8x8x128xf32, #tpu.memory_space<vmem>>, vector<1x8x128xf32>
    %265 = vector.shape_cast %264 : vector<1x8x128xf32> to vector<8x128xf32>
    %266 = vector.shape_cast %262 : vector<8x128xf32> to vector<1x8x128xf32>
    tpu.vector_store %arg5[%263, %c0_61, %c0_62], %266 {strides = array<i32>} : memref<8x8x128xf32, #tpu.memory_space<vmem>>, vector<1x8x128xf32>,
    %c7_i32 = arith.constant 7 : i32
    %267 = arith.index_cast %c7_i32 : i32 to index
    %c0_63 = arith.constant 0 : index
    %c0_64 = arith.constant 0 : index
    %268 = vector.load %arg2[%267, %c0_63, %c0_64] : memref<8x8x384xf32, #tpu.memory_space<vmem>>, vector<1x8x384xf32>
    %269 = vector.shape_cast %268 : vector<1x8x384xf32> to vector<8x384xf32>
    %270 = arith.truncf %262 : vector<8x128xf32> to vector<8x128xbf16>
    %cst_65 = arith.constant dense<0.000000e+00> : vector<8x384xf32>
    %271 = tpu.matmul %270, %5, %cst_65 {dimension_numbers = #tpu.dot_dimension_numbers<[1], [0], [0], [1], [0, 0, 1, 1], [], []>} : vector<8x128xbf16>, vector<128x384xbf16>, vector<8x384xf32> -> vector<8x384xf32>
    %272 = vector.broadcast %6 : vector<1x384xf32> to vector<8x384xf32>
    %273 = arith.addf %271, %272 : vector<8x384xf32>
    %274 = vector.extract_strided_slice %269 {offsets = [0, 0], sizes = [8, 128], strides = [1, 1]} : vector<8x384xf32> to vector<8x128xf32>
    %275 = vector.extract_strided_slice %273 {offsets = [0, 0], sizes = [8, 128], strides = [1, 1]} : vector<8x384xf32> to vector<8x128xf32>
    %276 = arith.addf %274, %275 : vector<8x128xf32>
    %277 = arith.negf %276 : vector<8x128xf32>
    %278 = math.exp %277 : vector<8x128xf32>
    %cst_66 = arith.constant 1.000000e+00 : f32
    %279 = vector.broadcast %cst_66 : f32 to vector<8x128xf32>
    %280 = arith.addf %279, %278 : vector<8x128xf32>
    %281 = arith.divf %279, %280 : vector<8x128xf32>
    %282 = vector.extract_strided_slice %269 {offsets = [0, 128], sizes = [8, 128], strides = [1, 1]} : vector<8x384xf32> to vector<8x128xf32>
    %283 = vector.extract_strided_slice %273 {offsets = [0, 128], sizes = [8, 128], strides = [1, 1]} : vector<8x384xf32> to vector<8x128xf32>
    %284 = arith.addf %282, %283 : vector<8x128xf32>
    %285 = arith.negf %284 : vector<8x128xf32>
    %286 = math.exp %285 : vector<8x128xf32>
    %cst_67 = arith.constant 1.000000e+00 : f32
    %287 = vector.broadcast %cst_67 : f32 to vector<8x128xf32>
    %288 = arith.addf %287, %286 : vector<8x128xf32>
    %289 = arith.divf %287, %288 : vector<8x128xf32>
    %290 = vector.extract_strided_slice %269 {offsets = [0, 256], sizes = [8, 128], strides = [1, 1]} : vector<8x384xf32> to vector<8x128xf32>
    %291 = vector.extract_strided_slice %273 {offsets = [0, 256], sizes = [8, 128], strides = [1, 1]} : vector<8x384xf32> to vector<8x128xf32>
    %292 = arith.mulf %281, %291 : vector<8x128xf32>
    %293 = arith.addf %290, %292 : vector<8x128xf32>
    %294 = math.tanh %293 : vector<8x128xf32>
    %cst_68 = arith.constant 1.000000e+00 : f32
    %295 = vector.broadcast %cst_68 : f32 to vector<8x128xf32>
    %296 = arith.subf %295, %289 : vector<8x128xf32>
    %297 = arith.mulf %296, %294 : vector<8x128xf32>
    %298 = arith.mulf %289, %262 : vector<8x128xf32>
    %299 = arith.addf %297, %298 : vector<8x128xf32>
    %300 = arith.index_cast %c7_i32 : i32 to index
    %c0_69 = arith.constant 0 : index
    %c0_70 = arith.constant 0 : index
    %301 = vector.load %arg5[%300, %c0_69, %c0_70] : memref<8x8x128xf32, #tpu.memory_space<vmem>>, vector<1x8x128xf32>
    %302 = vector.shape_cast %301 : vector<1x8x128xf32> to vector<8x128xf32>
    %303 = vector.shape_cast %299 : vector<8x128xf32> to vector<1x8x128xf32>
    tpu.vector_store %arg5[%300, %c0_69, %c0_70], %303 {strides = array<i32>} : memref<8x8x128xf32, #tpu.memory_space<vmem>>, vector<1x8x128xf32>,
    %c8_i32 = arith.constant 8 : i32
    %c0_71 = arith.constant 0 : index
    %c0_72 = arith.constant 0 : index
    %304 = vector.load %arg6[%c0_71, %c0_72] : memref<8x128xf32, #tpu.memory_space<vmem>>, vector<8x128xf32>
    tpu.vector_store %arg6[%c0_71, %c0_72], %299 {strides = array<i32>} : memref<8x128xf32, #tpu.memory_space<vmem>>, vector<8x128xf32>,
    return
  }
  func.func @transform_0(%arg0: i32, %arg1: i32) -> (i32, i32, i32) {
    %c0_i32 = arith.constant 0 : i32
    %c0_i32_0 = arith.constant 0 : i32
    %c0_i32_1 = arith.constant 0 : i32
    return %arg1, %c0_i32, %c0_i32_0 : i32, i32, i32
  }
  func.func @transform_1(%arg0: i32, %arg1: i32) -> (i32, i32) {
    %c0_i32 = arith.constant 0 : i32
    %c0_i32_0 = arith.constant 0 : i32
    %c0_i32_1 = arith.constant 0 : i32
    return %c0_i32, %c0_i32_0 : i32, i32
  }
  func.func @transform_2(%arg0: i32, %arg1: i32) -> (i32, i32) {
    %c0_i32 = arith.constant 0 : i32
    %c0_i32_0 = arith.constant 0 : i32
    %c0_i32_1 = arith.constant 0 : i32
    return %c0_i32, %c0_i32_0 : i32, i32
  }
  func.func @transform_3(%arg0: i32, %arg1: i32) -> (i32, i32, i32) {
    %0 = arith.muli %arg1, %arg0 : i32
    %c0_i32 = arith.constant 0 : i32
    %c0_i32_0 = arith.constant 0 : i32
    %c0_i32_1 = arith.constant 0 : i32
    return %0, %c0_i32, %c0_i32_0 : i32, i32, i32
  }
}

module attributes {stable_mosaic.version = 11 : i64} {
  func.func @gain_istft_kernel(%arg0: i32, %arg1: memref<64x128xf32, #tpu.memory_space<vmem>>, %arg2: memref<64x512xbf16, #tpu.memory_space<vmem>>, %arg3: memref<128x256xbf16, #tpu.memory_space<vmem>>, %arg4: memref<1x256xf32, #tpu.memory_space<vmem>>, %arg5: memref<256x512xbf16, #tpu.memory_space<vmem>>, %arg6: memref<256x512xbf16, #tpu.memory_space<vmem>>, %arg7: memref<1x512xf32, #tpu.memory_space<vmem>>, %arg8: memref<64x512xf32, #tpu.memory_space<vmem>>) attributes {dimension_semantics = [#tpu.dimension_semantics<parallel>], iteration_bounds = array<i64: 1>, scalar_prefetch = 0 : i64, scratch_operands = 0 : i64, tpu.core_type = #tpu.core_type<tc>, window_params = [{transform_indices = @transform_0, window_bounds = array<i64: 64, 128>}, {transform_indices = @transform_1, window_bounds = array<i64: 64, 512>}, {pipeline_mode = #tpu.pipeline_mode<synchronous>, transform_indices = @transform_2, window_bounds = array<i64: 128, 256>}, {pipeline_mode = #tpu.pipeline_mode<synchronous>, transform_indices = @transform_3, window_bounds = array<i64: 1, 256>}, {pipeline_mode = #tpu.pipeline_mode<synchronous>, transform_indices = @transform_4, window_bounds = array<i64: 256, 512>}, {pipeline_mode = #tpu.pipeline_mode<synchronous>, transform_indices = @transform_5, window_bounds = array<i64: 256, 512>}, {pipeline_mode = #tpu.pipeline_mode<synchronous>, transform_indices = @transform_6, window_bounds = array<i64: 1, 512>}, {transform_indices = @transform_7, window_bounds = array<i64: 64, 512>}]} {
    %c0 = arith.constant 0 : index
    %c0_0 = arith.constant 0 : index
    %0 = vector.load %arg1[%c0, %c0_0] : memref<64x128xf32, #tpu.memory_space<vmem>>, vector<64x128xf32>
    %1 = arith.truncf %0 : vector<64x128xf32> to vector<64x128xbf16>
    %c0_1 = arith.constant 0 : index
    %c0_2 = arith.constant 0 : index
    %2 = vector.load %arg3[%c0_1, %c0_2] : memref<128x256xbf16, #tpu.memory_space<vmem>>, vector<128x256xbf16>
    %cst = arith.constant dense<0.000000e+00> : vector<64x256xf32>
    %3 = tpu.matmul %1, %2, %cst {dimension_numbers = #tpu.dot_dimension_numbers<[1], [0], [0], [1], [0, 0, 1, 1], [], []>} : vector<64x128xbf16>, vector<128x256xbf16>, vector<64x256xf32> -> vector<64x256xf32>
    %c0_3 = arith.constant 0 : index
    %c0_4 = arith.constant 0 : index
    %4 = vector.load %arg4[%c0_3, %c0_4] : memref<1x256xf32, #tpu.memory_space<vmem>>, vector<1x256xf32>
    %5 = vector.broadcast %4 : vector<1x256xf32> to vector<64x256xf32>
    %6 = arith.addf %3, %5 : vector<64x256xf32>
    %7 = arith.negf %6 : vector<64x256xf32>
    %8 = math.exp %7 : vector<64x256xf32>
    %cst_5 = arith.constant 1.000000e+00 : f32
    %9 = vector.broadcast %cst_5 : f32 to vector<64x256xf32>
    %10 = arith.addf %9, %8 : vector<64x256xf32>
    %11 = arith.divf %9, %10 : vector<64x256xf32>
    %c0_6 = arith.constant 0 : index
    %c0_7 = arith.constant 0 : index
    %12 = vector.load %arg2[%c0_6, %c0_7] : memref<64x512xbf16, #tpu.memory_space<vmem>>, vector<64x512xbf16>
    %13 = vector.extract_strided_slice %12 {offsets = [0, 0], sizes = [64, 256], strides = [1, 1]} : vector<64x512xbf16> to vector<64x256xbf16>
    %14 = arith.extf %13 : vector<64x256xbf16> to vector<64x256xf32>
    %15 = arith.mulf %14, %11 : vector<64x256xf32>
    %16 = arith.truncf %15 : vector<64x256xf32> to vector<64x256xbf16>
    %17 = vector.extract_strided_slice %12 {offsets = [0, 256], sizes = [64, 256], strides = [1, 1]} : vector<64x512xbf16> to vector<64x256xbf16>
    %18 = arith.extf %17 : vector<64x256xbf16> to vector<64x256xf32>
    %19 = arith.mulf %18, %11 : vector<64x256xf32>
    %20 = arith.truncf %19 : vector<64x256xf32> to vector<64x256xbf16>
    %c0_8 = arith.constant 0 : index
    %c0_9 = arith.constant 0 : index
    %21 = vector.load %arg5[%c0_8, %c0_9] : memref<256x512xbf16, #tpu.memory_space<vmem>>, vector<256x512xbf16>
    %cst_10 = arith.constant dense<0.000000e+00> : vector<64x512xf32>
    %22 = tpu.matmul %16, %21, %cst_10 {dimension_numbers = #tpu.dot_dimension_numbers<[1], [0], [0], [1], [0, 0, 1, 1], [], []>} : vector<64x256xbf16>, vector<256x512xbf16>, vector<64x512xf32> -> vector<64x512xf32>
    %c0_11 = arith.constant 0 : index
    %c0_12 = arith.constant 0 : index
    %23 = vector.load %arg6[%c0_11, %c0_12] : memref<256x512xbf16, #tpu.memory_space<vmem>>, vector<256x512xbf16>
    %cst_13 = arith.constant dense<0.000000e+00> : vector<64x512xf32>
    %24 = tpu.matmul %20, %23, %cst_13 {dimension_numbers = #tpu.dot_dimension_numbers<[1], [0], [0], [1], [0, 0, 1, 1], [], []>} : vector<64x256xbf16>, vector<256x512xbf16>, vector<64x512xf32> -> vector<64x512xf32>
    %25 = arith.addf %22, %24 : vector<64x512xf32>
    %c0_14 = arith.constant 0 : index
    %c0_15 = arith.constant 0 : index
    %26 = vector.load %arg7[%c0_14, %c0_15] : memref<1x512xf32, #tpu.memory_space<vmem>>, vector<1x512xf32>
    %27 = vector.broadcast %26 : vector<1x512xf32> to vector<64x512xf32>
    %28 = arith.mulf %25, %27 : vector<64x512xf32>
    %c0_16 = arith.constant 0 : index
    %c0_17 = arith.constant 0 : index
    %29 = vector.load %arg8[%c0_16, %c0_17] : memref<64x512xf32, #tpu.memory_space<vmem>>, vector<64x512xf32>
    tpu.vector_store %arg8[%c0_16, %c0_17], %28 {strides = array<i32>} : memref<64x512xf32, #tpu.memory_space<vmem>>, vector<64x512xf32>,
    return
  }
  func.func @transform_0(%arg0: i32) -> (i32, i32) {
    %c0_i32 = arith.constant 0 : i32
    %c0_i32_0 = arith.constant 0 : i32
    return %arg0, %c0_i32 : i32, i32
  }
  func.func @transform_1(%arg0: i32) -> (i32, i32) {
    %c0_i32 = arith.constant 0 : i32
    %c0_i32_0 = arith.constant 0 : i32
    return %arg0, %c0_i32 : i32, i32
  }
  func.func @transform_2(%arg0: i32) -> (i32, i32) {
    %c0_i32 = arith.constant 0 : i32
    %c0_i32_0 = arith.constant 0 : i32
    %c0_i32_1 = arith.constant 0 : i32
    return %c0_i32, %c0_i32_0 : i32, i32
  }
  func.func @transform_3(%arg0: i32) -> (i32, i32) {
    %c0_i32 = arith.constant 0 : i32
    %c0_i32_0 = arith.constant 0 : i32
    %c0_i32_1 = arith.constant 0 : i32
    return %c0_i32, %c0_i32_0 : i32, i32
  }
  func.func @transform_4(%arg0: i32) -> (i32, i32) {
    %c0_i32 = arith.constant 0 : i32
    %c0_i32_0 = arith.constant 0 : i32
    %c0_i32_1 = arith.constant 0 : i32
    return %c0_i32, %c0_i32_0 : i32, i32
  }
  func.func @transform_5(%arg0: i32) -> (i32, i32) {
    %c0_i32 = arith.constant 0 : i32
    %c0_i32_0 = arith.constant 0 : i32
    %c0_i32_1 = arith.constant 0 : i32
    return %c0_i32, %c0_i32_0 : i32, i32
  }
  func.func @transform_6(%arg0: i32) -> (i32, i32) {
    %c0_i32 = arith.constant 0 : i32
    %c0_i32_0 = arith.constant 0 : i32
    %c0_i32_1 = arith.constant 0 : i32
    return %c0_i32, %c0_i32_0 : i32, i32
  }
  func.func @transform_7(%arg0: i32) -> (i32, i32) {
    %c0_i32 = arith.constant 0 : i32
    %c0_i32_0 = arith.constant 0 : i32
    return %arg0, %c0_i32 : i32, i32
  }
}

</mosaic_0001>

<llo_original>
// kernel: mul.3
$region0: #{mul.3}
  #allocation0 [shape = 's32[1]{0}', space=sflag, size = 0x4, scoped, tag = 'scoped memory for mul.3']
  %s0 = inlined_call_operand.vmem [shape: f32[480], index: 0, kind: input, shape index: {}, may-alias: {0,1}]
  %s1 = inlined_call_operand.vmem [shape: f32[480], index: 1, kind: input, shape index: {}, may-alias: {0,1}]
  %s2 = inlined_call_operand.vmem [shape: f32[480], index: 2, kind: output, shape index: {}]
  %v3 = vld [vmem:[%s0] sm:$0xf]
  %v4 = vld [vmem:[%s1] sm:$0xf]
  %5 = xla_tuple %v3, %v4
  %6 = xla_tuple %5
  %v7 = vmul.f32 %v3, %v4
  %8 = xla_tuple %v7
  %9 = vst [vmem:[%s2] sm:$0xf] %v7

// kernel: simple_enhancer_forward.4
$region0: #{simple_enhancer_forward.4}
  #allocation0 [shape = 'u32[]', space=smem, size = 0x4, offset = 0x4, fixed_abs, tag = 'smem constant byte address 0x4 - core index']
  #allocation1 [shape = 'u32[144,128]{1,0:T(1,128)}', space=vmem, size = 0x12000, scoped, tag = 'internal scratch']
  #allocation2 [shape = 'f32[8,128]{1,0:T(8,128)}', space=vmem, size = 0x1000, scoped, tag = 'scratch operand']
  %s0 = inlined_call_operand.vmem [shape: f32[8,8,384], index: 0, kind: input, shape index: {}]
  %s1 = inlined_call_operand.vmem [shape: bf16[128,384], index: 1, kind: input, shape index: {}]
  %s2 = inlined_call_operand.vmem [shape: f32[1,384], index: 2, kind: input, shape index: {}]
  %s3 = inlined_call_operand.vmem [shape: f32[8,8,128], index: 3, kind: output, shape index: {}]
  %s4 = sld [smem:[#allocation0]]
  $region49: #{simple_enhancer_forward.4} parent=0
    _
  %s6 = ssub.s32 1, %s4
  %s7 = scalar_select 0, %s6, %s4
  loop: start=0, step=1, limit=4
  $region2: #{simple_enhancer_forward.4} parent=0 // loop_pre_header
    _
  $region3: #{simple_enhancer_forward.4} parent=0 // loop_header
    %s9 = sphi 0, %s13
    %p10 = scmp.ge.s32.totalorder %s9, 4
    %s16 = sphi 0, %s28
    %s17 = sphi 0, %s24
    %s18 = sphi 0, %s16
    %s19 = sphi 0, %s17
    %s20 = sphi 0, %s18
    %s21 = sphi 0, %s19
    %s31 = sphi 0, %s33
    %s34 = sphi 0, %s31
    %s35 = sphi 0, %s34
    %s51 = sphi 0, %s35
    %s55 = sphi 0, %s55
    %s57 = sphi 0, %s55
    %s58 = sphi 0, %s57
    %s72 = sphi 0, %s58
    %s76 = sphi 0, %s76
    %s78 = sphi 0, %s76
    %s79 = sphi 0, %s78
    %s93 = sphi 0, %s79
    %s101 = sphi 0, %s103
    %s104 = sphi 0, %s101
    %s105 = sphi 0, %s104
    %s121 = sphi 0, %s105
  $region4: #{simple_enhancer_forward.4} parent=0 // loop_header_branch
    %12 = sbr.rel (%p10) target = $region8
  $region5: #{simple_enhancer_forward.4} parent=0 // loop_body
    %s14 = ssub.s32 %s9, 1
    %s15 = ssub.s32 %s9, 2
    %s22 = sadd.s32 1, %s17
    %p23 = scmp.ge.s32.totalorder %s22, 1
    %s24 = scalar_select %p23, 0, %s22
    %s25 = sadd.s32 1, %s16
    %s26 = scalar_select %p23, %s25, %s16
    %p27 = scmp.ge.s32.totalorder %s26, 2
    %s28 = scalar_select %p27, 0, %s26
    %s29 = ssub.s32 %s17, %s24
    %p30 = scmp.eq.s32.totalorder %s29, 0
    %s32 = sadd.s32 %s31, 1
    %s33 = scalar_select %p30, %s31, %s32
    %p36 = pneg %p30
    %p37 = scmp.eq.s32.totalorder %s9, 1
    %p38 = por %p36, %p37
    %p39 = scmp.ne.s32.totalorder %s31, %s34
    %p40 = scmp.eq.s32.totalorder %s9, 0
    %p41 = por %p39, %p40
    %p42 = scmp.ne.s32.totalorder %s31, %s34
    %p43 = scmp.eq.s32.totalorder %s14, 1
    %p44 = por %p42, %p43
    %p45 = scmp.ne.s32.totalorder %s34, %s35
    %p46 = scmp.eq.s32.totalorder %s14, 0
    %p47 = por %p45, %p46
    %p48 = scmp.ne.s32.totalorder %s34, %s35
    %p49 = scmp.eq.s32.totalorder %s15, 1
    %p50 = por %p48, %p49
    %p52 = scmp.ne.s32.totalorder %s35, %s51
    %p53 = scmp.eq.s32.totalorder %s15, 0
    %p54 = por %p52, %p53
    %s56 = sadd.s32 %s55, 1
    %p59 = scmp.eq.s32.totalorder %s9, 1
    %p60 = scmp.ne.s32.totalorder %s55, %s57
    %p61 = scmp.eq.s32.totalorder %s9, 0
    %p62 = por %p60, %p61
    %p63 = scmp.ne.s32.totalorder %s55, %s57
    %p64 = scmp.eq.s32.totalorder %s14, 1
    %p65 = por %p63, %p64
    %p66 = scmp.ne.s32.totalorder %s57, %s58
    %p67 = scmp.eq.s32.totalorder %s14, 0
    %p68 = por %p66, %p67
    %p69 = scmp.ne.s32.totalorder %s57, %s58
    %p70 = scmp.eq.s32.totalorder %s15, 1
    %p71 = por %p69, %p70
    %p73 = scmp.ne.s32.totalorder %s58, %s72
    %p74 = scmp.eq.s32.totalorder %s15, 0
    %p75 = por %p73, %p74
    %s77 = sadd.s32 %s76, 1
    %p80 = scmp.eq.s32.totalorder %s9, 1
    %p81 = scmp.ne.s32.totalorder %s76, %s78
    %p82 = scmp.eq.s32.totalorder %s9, 0
    %p83 = por %p81, %p82
    %p84 = scmp.ne.s32.totalorder %s76, %s78
    %p85 = scmp.eq.s32.totalorder %s14, 1
    %p86 = por %p84, %p85
    %p87 = scmp.ne.s32.totalorder %s78, %s79
    %p88 = scmp.eq.s32.totalorder %s14, 0
    %p89 = por %p87, %p88
    %p90 = scmp.ne.s32.totalorder %s78, %s79
    %p91 = scmp.eq.s32.totalorder %s15, 1
    %p92 = por %p90, %p91
    %p94 = scmp.ne.s32.totalorder %s79, %s93
    %p95 = scmp.eq.s32.totalorder %s15, 0
    %p96 = por %p94, %p95
    %s97 = smul.u32 %s17, %s16
    %s98 = smul.u32 %s24, %s28
    %s99 = ssub.s32 %s97, %s98
    %p100 = scmp.eq.s32.totalorder %s99, 0
    %s102 = sadd.s32 %s101, 1
    %s103 = scalar_select %p100, %s101, %s102
    %p106 = pneg %p100
    %p107 = scmp.eq.s32.totalorder %s9, 1
    %p108 = por %p106, %p107
    %p109 = scmp.ne.s32.totalorder %s101, %s104
    %p110 = scmp.eq.s32.totalorder %s9, 0
    %p111 = por %p109, %p110
    %p112 = scmp.ne.s32.totalorder %s101, %s104
    %p113 = scmp.eq.s32.totalorder %s14, 1
    %p114 = por %p112, %p113
    %p115 = scmp.ne.s32.totalorder %s104, %s105
    %p116 = scmp.eq.s32.totalorder %s14, 0
    %p117 = por %p115, %p116
    %p118 = scmp.ne.s32.totalorder %s104, %s105
    %p119 = scmp.eq.s32.totalorder %s15, 1
    %p120 = por %p118, %p119
    %p122 = scmp.ne.s32.totalorder %s105, %s121
    %p123 = scmp.eq.s32.totalorder %s15, 0
    %p124 = por %p122, %p123
    %p125 = scmp.le.s32.totalorder 1, %s9
    %p126 = scmp.lt.s32.totalorder %s9, 3
    %p127 = pnand %p125, %p126
    %p128 = pneg %p127
    // Predicated region
    $region9: #{simple_enhancer_forward.4} parent=5 // pred_check
      _
    $region10: #{simple_enhancer_forward.4} parent=5 // pred_check_branch
      %130 = sbr.rel (%p127) target = $region12
    $region11: #{simple_enhancer_forward.4} parent=5 // pred_region
      %s131 = ssub.s32 %s9, 1
      // Predicated region
      $region13: #{simple_enhancer_forward.4} parent=11 // pred_check
        %p132 = pneg %p47
      $region14: #{simple_enhancer_forward.4} parent=11 // pred_check_branch
        %134 = sbr.rel (%p132) target = $region16
      $region15: #{simple_enhancer_forward.4} parent=11 // pred_region
        %s135 = smul.u32 8, %s19
        %p136 = scmp.lt.s32.totalorder %s135, 7
        %s137 = scalar_select %p136, %s135, 7
        %s138 = smul.addr %s137, 3
        %s139 = smul.addr %s138, 8
        %s140 = scalar_lea.vmem %s0, %s139
        %s141 = smul.u32 8, %s19
      $region16: #{simple_enhancer_forward.4} parent=11 // pred_fallthru
        _
      // Predicated region
      $region17: #{simple_enhancer_forward.4} parent=11 // pred_check
        %p142 = pneg %p68
      $region18: #{simple_enhancer_forward.4} parent=11 // pred_check_branch
        %144 = sbr.rel (%p142) target = $region20
      $region19: #{simple_enhancer_forward.4} parent=11 // pred_region
        _
      $region20: #{simple_enhancer_forward.4} parent=11 // pred_fallthru
        _
      // Predicated region
      $region21: #{simple_enhancer_forward.4} parent=11 // pred_check
        %p145 = pneg %p89
      $region22: #{simple_enhancer_forward.4} parent=11 // pred_check_branch
        %147 = sbr.rel (%p145) target = $region24
      $region23: #{simple_enhancer_forward.4} parent=11 // pred_region
        _
      $region24: #{simple_enhancer_forward.4} parent=11 // pred_fallthru
        _
    $region12: #{simple_enhancer_forward.4} parent=5 // pred_fallthru
      _
    %p148 = scmp.lt.s32.totalorder %s9, 2
    // Predicated region
    $region25: #{simple_enhancer_forward.4} parent=5 // pred_check
      %p149 = pneg %p148
    $region26: #{simple_enhancer_forward.4} parent=5 // pred_check_branch
      %151 = sbr.rel (%p149) target = $region28
    $region27: #{simple_enhancer_forward.4} parent=5 // pred_region
      _
    $region28: #{simple_enhancer_forward.4} parent=5 // pred_fallthru
      _
    %p152 = scmp.le.s32.totalorder 1, %s9
    %p153 = scmp.lt.s32.totalorder %s9, 3
    %p154 = pnand %p152, %p153
    %p155 = pneg %p154
    // Predicated region
    $region29: #{simple_enhancer_forward.4} parent=5 // pred_check
      _
    $region30: #{simple_enhancer_forward.4} parent=5 // pred_check_branch
      %157 = sbr.rel (%p154) target = $region32
    $region31: #{simple_enhancer_forward.4} parent=5 // pred_region
      %s158 = ssub.s32 %s9, 1
      %s159 = smul.u32 8, %s19
      %p160 = scmp.lt.s32.totalorder %s159, 7
      %s161 = scalar_select %p160, %s159, 7
      %s162 = smul.addr %s161, 3
      %s163 = smul.addr %s162, 8
      %s164 = scalar_lea.vmem %s0, %s163
      %p165 = pneg %p47
      %p166 = pneg %p44
      %p167 = pneg %p68
      %p168 = pneg %p65
      %p169 = pneg %p89
      %p170 = pneg %p86
      %p171 = pneg %p117
      %p172 = pneg %p114
      %s173 = smul.u32 %s19, %s18
      %s174 = smul.u32 8, %s173
      %p175 = scmp.lt.s32.totalorder %s174, 7
      %s176 = scalar_select %p175, %s174, 7
      %s177 = smul.addr %s176, 8
      %s178 = scalar_lea.vmem %s3, %s177
      %s179 = smul.u32 8, %s19
      %p180 = scmp.lt.s32.totalorder %s179, 7
      %s181 = scalar_select %p180, %s179, 7
      %s182 = smul.addr %s181, 3
      %s183 = smul.addr %s182, 8
      %s184 = scalar_lea.vmem %s0, %s183
      %s185 = smul.u32 8, %s19
      %s186 = smul.u32 %s19, %s18
      %s187 = smul.u32 8, %s186
      %p188 = scmp.lt.s32.totalorder %s187, 7
      %s189 = scalar_select %p188, %s187, 7
      %s190 = smul.addr %s189, 8
      %s191 = scalar_lea.vmem %s3, %s190
      %s192 = smul.u32 %s19, %s18
      %s193 = smul.u32 8, %s192
      %p195 = scmp.eq.s32.totalorder %s18, 0
      %p196 = scmp.eq.s32.totalorder %s19, 0
      %p197 = pnand %p195, %p196
      %p198 = pneg %p197
      // Predicated region
      $region33: #{simple_enhancer_forward.4} parent=31 // pred_check
        _
      $region34: #{simple_enhancer_forward.4} parent=31 // pred_check_branch
        %200 = sbr.rel (%p197) target = $region36
      $region35: #{simple_enhancer_forward.4} parent=31 // pred_region
        %201 = vst [vmem:[#allocation2] sm:$0xff] 0.0
      $region36: #{simple_enhancer_forward.4} parent=31 // pred_fallthru
        _
      %v202 = vld [vmem:[%s1] sm:$0xff]
      %v203 = vld [vmem:[%s1 + $0x8] sm:$0xf]
      %v204 = vld [vmem:[%s1 + $0xc] sm:$0xff]
      %v205 = vld [vmem:[%s1 + $0x14] sm:$0xf]
      %v206 = vld [vmem:[%s1 + $0x18] sm:$0xff]
      %v207 = vld [vmem:[%s1 + $0x20] sm:$0xf]
      %v208 = vld [vmem:[%s1 + $0x24] sm:$0xff]
      %v209 = vld [vmem:[%s1 + $0x2c] sm:$0xf]
      %v210 = vld [vmem:[%s1 + $0x30] sm:$0xff]
      %v211 = vld [vmem:[%s1 + $0x38] sm:$0xf]
      %v212 = vld [vmem:[%s1 + $0x3c] sm:$0xff]
      %v213 = vld [vmem:[%s1 + $0x44] sm:$0xf]
      %v214 = vld [vmem:[%s1 + $0x48] sm:$0xff]
      %v215 = vld [vmem:[%s1 + $0x50] sm:$0xf]
      %v216 = vld [vmem:[%s1 + $0x54] sm:$0xff]
      %v217 = vld [vmem:[%s1 + $0x5c] sm:$0xf]
      %v218 = vld [vmem:[%s1 + $0x60] sm:$0xff]
      %v219 = vld [vmem:[%s1 + $0x68] sm:$0xf]
      %v220 = vld [vmem:[%s1 + $0x6c] sm:$0xff]
      %v221 = vld [vmem:[%s1 + $0x74] sm:$0xf]
      %v222 = vld [vmem:[%s1 + $0x78] sm:$0xff]
      %v223 = vld [vmem:[%s1 + $0x80] sm:$0xf]
      %v224 = vld [vmem:[%s1 + $0x84] sm:$0xff]
      %v225 = vld [vmem:[%s1 + $0x8c] sm:$0xf]
      %v226 = vld [vmem:[%s1 + $0x90] sm:$0xff]
      %v227 = vld [vmem:[%s1 + $0x98] sm:$0xf]
      %v228 = vld [vmem:[%s1 + $0x9c] sm:$0xff]
      %v229 = vld [vmem:[%s1 + $0xa4] sm:$0xf]
      %v230 = vld [vmem:[%s1 + $0xa8] sm:$0xff]
      %v231 = vld [vmem:[%s1 + $0xb0] sm:$0xf]
      %v232 = vld [vmem:[%s1 + $0xb4] sm:$0xff]
      %v233 = vld [vmem:[%s1 + $0xbc] sm:$0xf]
      %v234 = vld [vmem:[%s2] sm:$0x7]
      %v235 = vld [vmem:[#allocation2] sm:$0xff]
      %v236 = vld [vmem:[%s184] sm:$0xff]
      %v237 = vld [vmem:[%s184 + $0x8] sm:$0xff]
      %v238 = vld [vmem:[%s184 + $0x10] sm:$0xff]
      %v239 = vpack.c.bf16 %v235, %v235
      %v241 = vlaneseq
      %v242 = vshrl.u32 %v241, 7
      %v243 = vsub.s32 0, %v242
      %v244 = vrot.slane %v234, %v243
      %v245 = vlaneseq
      %v246 = vshrl.u32 %v245, 7
      %v247 = vsub.s32 1, %v246
      %v248 = vrot.slane %v234, %v247
      %v249 = vlaneseq
      %v250 = vshrl.u32 %v249, 7
      %v251 = vsub.s32 2, %v250
      %v252 = vrot.slane %v234, %v251
      %v288 = vunpack.c.l.b16 %v202
      %v289 = vunpack.c.h.b16 %v202
      %v290 = vunpack.c.l.b16 %v203
      %v291 = vunpack.c.l.b16 %v204
      %v292 = vunpack.c.h.b16 %v204
      %v293 = vunpack.c.l.b16 %v205
      %v294 = vunpack.c.l.b16 %v206
      %v295 = vunpack.c.h.b16 %v206
      %v296 = vunpack.c.l.b16 %v207
      %v297 = vunpack.c.l.b16 %v208
      %v298 = vunpack.c.h.b16 %v208
      %v299 = vunpack.c.l.b16 %v209
      %v300 = vunpack.c.l.b16 %v210
      %v301 = vunpack.c.h.b16 %v210
      %v302 = vunpack.c.l.b16 %v211
      %v303 = vunpack.c.l.b16 %v212
      %v304 = vunpack.c.h.b16 %v212
      %v305 = vunpack.c.l.b16 %v213
      %v306 = vunpack.c.l.b16 %v214
      %v307 = vunpack.c.h.b16 %v214
      %v308 = vunpack.c.l.b16 %v215
      %v309 = vunpack.c.l.b16 %v216
      %v310 = vunpack.c.h.b16 %v216
      %v311 = vunpack.c.l.b16 %v217
      %v312 = vunpack.c.l.b16 %v218
      %v313 = vunpack.c.h.b16 %v218
      %v314 = vunpack.c.l.b16 %v219
      %v315 = vunpack.c.l.b16 %v220
      %v316 = vunpack.c.h.b16 %v220
      %v317 = vunpack.c.l.b16 %v221
      %v318 = vunpack.c.l.b16 %v222
      %v319 = vunpack.c.h.b16 %v222
      %v320 = vunpack.c.l.b16 %v223
      %v321 = vunpack.c.l.b16 %v224
      %v322 = vunpack.c.h.b16 %v224
      %v323 = vunpack.c.l.b16 %v225
      %v324 = vunpack.c.l.b16 %v226
      %v325 = vunpack.c.h.b16 %v226
      %v326 = vunpack.c.l.b16 %v227
      %v327 = vunpack.c.l.b16 %v228
      %v328 = vunpack.c.h.b16 %v228
      %v329 = vunpack.c.l.b16 %v229
      %v330 = vunpack.c.l.b16 %v230
      %v331 = vunpack.c.h.b16 %v230
      %v332 = vunpack.c.l.b16 %v231
      %v333 = vunpack.c.l.b16 %v232
      %v334 = vunpack.c.h.b16 %v232
      %v335 = vunpack.c.l.b16 %v233
      %v336 = vpack.c.b16 %v291, %v288
      %v337 = vpack.c.b16 %v292, %v289
      %v338 = vpack.c.b16 %v293, %v290
      %v339 = vpack.c.b16 %v297, %v294
      %v340 = vpack.c.b16 %v298, %v295
      %v341 = vpack.c.b16 %v299, %v296
      %v342 = vpack.c.b16 %v303, %v300
      %v343 = vpack.c.b16 %v304, %v301
      %v344 = vpack.c.b16 %v305, %v302
      %v345 = vpack.c.b16 %v309, %v306
      %v346 = vpack.c.b16 %v310, %v307
      %v347 = vpack.c.b16 %v311, %v308
      %v348 = vpack.c.b16 %v315, %v312
      %v349 = vpack.c.b16 %v316, %v313
      %v350 = vpack.c.b16 %v317, %v314
      %v351 = vpack.c.b16 %v321, %v318
      %v352 = vpack.c.b16 %v322, %v319
      %v353 = vpack.c.b16 %v323, %v320
      %v354 = vpack.c.b16 %v327, %v324
      %v355 = vpack.c.b16 %v328, %v325
      %v356 = vpack.c.b16 %v329, %v326
      %v357 = vpack.c.b16 %v333, %v330
      %v358 = vpack.c.b16 %v334, %v331
      %v359 = vpack.c.b16 %v335, %v332
      %384 = vmatprep.subr.bf16.mxu0 %v337
      %385 = vmatpush1.bf16.msra.mxu0 %v336
      %386 = vmatprep.subr.bf16.mxu0 %v340
      %387 = vmatpush1.bf16.msra.mxu0 %v339
      %388 = vmatprep.subr.bf16.mxu0 %v343
      %389 = vmatpush1.bf16.msra.mxu0 %v342
      %390 = vmatprep.subr.bf16.mxu0 %v346
      %391 = vmatpush1.bf16.msra.mxu0 %v345
      %392 = vmatprep.subr.bf16.mxu0 %v349
      %393 = vmatpush1.bf16.msra.mxu0 %v348
      %394 = vmatprep.subr.bf16.mxu0 %v352
      %395 = vmatpush1.bf16.msra.mxu0 %v351
      %396 = vmatprep.subr.bf16.mxu0 %v355
      %397 = vmatpush1.bf16.msra.mxu0 %v354
      %398 = vmatprep.subr.bf16.mxu0 %v358
      %399 = vmatpush1.bf16.msra.mxu0 %v357
      %400 = vmatprep.subr.bf16.mxu0 0
      %401 = vmatpush1.bf16.msra.mxu0 0
      %402 = vmatprep.subr.bf16.mxu0 0
      %403 = vmatpush1.bf16.msra.mxu0 0
      %404 = vmatprep.subr.bf16.mxu0 0
      %405 = vmatpush1.bf16.msra.mxu0 0
      %406 = vmatprep.subr.bf16.mxu0 0
      %407 = vmatpush1.bf16.msra.mxu0 0
      %408 = vmatprep.subr.bf16.mxu0 0
      %409 = vmatpush1.bf16.msra.mxu0 0
      %410 = vmatprep.subr.bf16.mxu0 0
      %411 = vmatpush1.bf16.msra.mxu0 0
      %412 = vmatprep.subr.bf16.mxu0 0
      %413 = vmatpush1.bf16.msra.mxu0 0
      %414 = vmatprep.subr.bf16.mxu0 0
      %415 = vmatpush1.bf16.msra.mxu0 0
      %416 = vmatprep.mubr.bf16.mxu0 0
      %417 = vmatmul.mubr.bf16.gmra.mrb[0].mxu0 %v239
      %v418 = vpop.f32.mrb[0].mxu0
      %v419 = vadd.f32 %v244, %v418
      %v420 = vpop.f32.mrb[0].mxu0
      %v421 = vadd.f32 %v248, %v420
      %v422 = vpop.f32.mrb[0].mxu0
      %v423 = vpop.f32.mrb[0].mxu0
      %424 = vdwg.mxu0
      %425 = vmatprep.subr.bf16.mxu0 0
      %426 = vmatpush1.bf16.msra.mxu0 %v338
      %427 = vmatprep.subr.bf16.mxu0 0
      %428 = vmatpush1.bf16.msra.mxu0 %v341
      %429 = vmatprep.subr.bf16.mxu0 0
      %430 = vmatpush1.bf16.msra.mxu0 %v344
      %431 = vmatprep.subr.bf16.mxu0 0
      %432 = vmatpush1.bf16.msra.mxu0 %v347
      %433 = vmatprep.subr.bf16.mxu0 0
      %434 = vmatpush1.bf16.msra.mxu0 %v350
      %435 = vmatprep.subr.bf16.mxu0 0
      %436 = vmatpush1.bf16.msra.mxu0 %v353
      %437 = vmatprep.subr.bf16.mxu0 0
      %438 = vmatpush1.bf16.msra.mxu0 %v356
      %439 = vmatprep.subr.bf16.mxu0 0
      %440 = vmatpush1.bf16.msra.mxu0 %v359
      %441 = vmatprep.subr.bf16.mxu0 0
      %442 = vmatpush1.bf16.msra.mxu0 0
      %443 = vmatprep.subr.bf16.mxu0 0
      %444 = vmatpush1.bf16.msra.mxu0 0
      %445 = vmatprep.subr.bf16.mxu0 0
      %446 = vmatpush1.bf16.msra.mxu0 0
      %447 = vmatprep.subr.bf16.mxu0 0
      %448 = vmatpush1.bf16.msra.mxu0 0
      %449 = vmatprep.subr.bf16.mxu0 0
      %450 = vmatpush1.bf16.msra.mxu0 0
      %451 = vmatprep.subr.bf16.mxu0 0
      %452 = vmatpush1.bf16.msra.mxu0 0
      %453 = vmatprep.subr.bf16.mxu0 0
      %454 = vmatpush1.bf16.msra.mxu0 0
      %455 = vmatprep.subr.bf16.mxu0 0
      %456 = vmatpush1.bf16.msra.mxu0 0
      %457 = vmatprep.mubr.bf16.mxu0 0
      %458 = vmatmul.mubr.bf16.gmra.mrb[0].mxu0 %v239
      %v459 = vpop.f32.mrb[0].mxu0
      %v460 = vadd.f32 %v252, %v459
      %v461 = vpop.f32.mrb[0].mxu0
      %v462 = vpop.f32.mrb[0].mxu0
      %v463 = vpop.f32.mrb[0].mxu0
      %464 = vdwg.mxu0
      %v465 = vadd.f32 %v236, %v419
      %v466 = vxor.u32 %v465, 2147483648
      %v467 = vmul.f32 %v466, 1.442695
      %v468 = vpow.pop %v467
      %v469 = vadd.f32 %v468, 1.0
      %v470 = vrcp.pop %v469
      %v471 = vmul.f32 1.0, %v470
      %v472 = vadd.f32 %v237, %v421
      %v473 = vxor.u32 %v472, 2147483648
      %v474 = vmul.f32 %v473, 1.442695
      %v475 = vpow.pop %v474
      %v476 = vadd.f32 %v475, 1.0
      %v477 = vrcp.pop %v476
      %v478 = vmul.f32 1.0, %v477
      %v479 = vmul.f32 %v471, %v460
      %v480 = vadd.f32 %v238, %v479
      %v481 = vtanh.pop %v480
      %v482 = vsub.f32 1.0, %v478
      %v483 = vmul.f32 %v482, %v481
      %v484 = vmul.f32 %v478, %v235
      %v485 = vadd.f32 %v483, %v484
      %486 = vst [vmem:[%s191] sm:$0xff] %v485
      %s487 = scalar_lea.vmem %s184, 24
      %v488 = vld [vmem:[%s487] sm:$0xff]
      %v489 = vld [vmem:[%s487 + $0x8] sm:$0xff]
      %v490 = vld [vmem:[%s487 + $0x10] sm:$0xff]
      %v491 = vpack.c.bf16 %v485, %v485
      %492 = vmatprep.subr.bf16.mxu0 %v337
      %493 = vmatpush1.bf16.msra.mxu0 %v336
      %494 = vmatprep.subr.bf16.mxu0 %v340
      %495 = vmatpush1.bf16.msra.mxu0 %v339
      %496 = vmatprep.subr.bf16.mxu0 %v343
      %497 = vmatpush1.bf16.msra.mxu0 %v342
      %498 = vmatprep.subr.bf16.mxu0 %v346
      %499 = vmatpush1.bf16.msra.mxu0 %v345
      %500 = vmatprep.subr.bf16.mxu0 %v349
      %501 = vmatpush1.bf16.msra.mxu0 %v348
      %502 = vmatprep.subr.bf16.mxu0 %v352
      %503 = vmatpush1.bf16.msra.mxu0 %v351
      %504 = vmatprep.subr.bf16.mxu0 %v355
      %505 = vmatpush1.bf16.msra.mxu0 %v354
      %506 = vmatprep.subr.bf16.mxu0 %v358
      %507 = vmatpush1.bf16.msra.mxu0 %v357
      %508 = vmatprep.subr.bf16.mxu0 0
      %509 = vmatpush1.bf16.msra.mxu0 0
      %510 = vmatprep.subr.bf16.mxu0 0
      %511 = vmatpush1.bf16.msra.mxu0 0
      %512 = vmatprep.subr.bf16.mxu0 0
      %513 = vmatpush1.bf16.msra.mxu0 0
      %514 = vmatprep.subr.bf16.mxu0 0
      %515 = vmatpush1.bf16.msra.mxu0 0
      %516 = vmatprep.subr.bf16.mxu0 0
      %517 = vmatpush1.bf16.msra.mxu0 0
      %518 = vmatprep.subr.bf16.mxu0 0
      %519 = vmatpush1.bf16.msra.mxu0 0
      %520 = vmatprep.subr.bf16.mxu0 0
      %521 = vmatpush1.bf16.msra.mxu0 0
      %522 = vmatprep.subr.bf16.mxu0 0
      %523 = vmatpush1.bf16.msra.mxu0 0
      %524 = vmatprep.mubr.bf16.mxu0 0
      %525 = vmatmul.mubr.bf16.gmra.mrb[0].mxu0 %v491
      %v526 = vpop.f32.mrb[0].mxu0
      %v527 = vadd.f32 %v244, %v526
      %v528 = vpop.f32.mrb[0].mxu0
      %v529 = vadd.f32 %v248, %v528
      %v530 = vpop.f32.mrb[0].mxu0
      %v531 = vpop.f32.mrb[0].mxu0
      %532 = vdwg.mxu0
      %533 = vmatprep.subr.bf16.mxu0 0
      %534 = vmatpush1.bf16.msra.mxu0 %v338
      %535 = vmatprep.subr.bf16.mxu0 0
      %536 = vmatpush1.bf16.msra.mxu0 %v341
      %537 = vmatprep.subr.bf16.mxu0 0
      %538 = vmatpush1.bf16.msra.mxu0 %v344
      %539 = vmatprep.subr.bf16.mxu0 0
      %540 = vmatpush1.bf16.msra.mxu0 %v347
      %541 = vmatprep.subr.bf16.mxu0 0
      %542 = vmatpush1.bf16.msra.mxu0 %v350
      %543 = vmatprep.subr.bf16.mxu0 0
      %544 = vmatpush1.bf16.msra.mxu0 %v353
      %545 = vmatprep.subr.bf16.mxu0 0
      %546 = vmatpush1.bf16.msra.mxu0 %v356
      %547 = vmatprep.subr.bf16.mxu0 0
      %548 = vmatpush1.bf16.msra.mxu0 %v359
      %549 = vmatprep.subr.bf16.mxu0 0
      %550 = vmatpush1.bf16.msra.mxu0 0
      %551 = vmatprep.subr.bf16.mxu0 0
      %552 = vmatpush1.bf16.msra.mxu0 0
      %553 = vmatprep.subr.bf16.mxu0 0
      %554 = vmatpush1.bf16.msra.mxu0 0
      %555 = vmatprep.subr.bf16.mxu0 0
      %556 = vmatpush1.bf16.msra.mxu0 0
      %557 = vmatprep.subr.bf16.mxu0 0
      %558 = vmatpush1.bf16.msra.mxu0 0
      %559 = vmatprep.subr.bf16.mxu0 0
      %560 = vmatpush1.bf16.msra.mxu0 0
      %561 = vmatprep.subr.bf16.mxu0 0
      %562 = vmatpush1.bf16.msra.mxu0 0
      %563 = vmatprep.subr.bf16.mxu0 0
      %564 = vmatpush1.bf16.msra.mxu0 0
      %565 = vmatprep.mubr.bf16.mxu0 0
      %566 = vmatmul.mubr.bf16.gmra.mrb[0].mxu0 %v491
      %v567 = vpop.f32.mrb[0].mxu0
      %v568 = vadd.f32 %v252, %v567
      %v569 = vpop.f32.mrb[0].mxu0
      %v570 = vpop.f32.mrb[0].mxu0
      %v571 = vpop.f32.mrb[0].mxu0
      %572 = vdwg.mxu0
      %v573 = vadd.f32 %v488, %v527
      %v574 = vxor.u32 %v573, 2147483648
      %v575 = vmul.f32 %v574, 1.442695
      %v576 = vpow.pop %v575
      %v577 = vadd.f32 %v576, 1.0
      %v578 = vrcp.pop %v577
      %v579 = vmul.f32 1.0, %v578
      %v580 = vadd.f32 %v489, %v529
      %v581 = vxor.u32 %v580, 2147483648
      %v582 = vmul.f32 %v581, 1.442695
      %v583 = vpow.pop %v582
      %v584 = vadd.f32 %v583, 1.0
      %v585 = vrcp.pop %v584
      %v586 = vmul.f32 1.0, %v585
      %v587 = vmul.f32 %v579, %v568
      %v588 = vadd.f32 %v490, %v587
      %v589 = vtanh.pop %v588
      %v590 = vsub.f32 1.0, %v586
      %v591 = vmul.f32 %v590, %v589
      %v592 = vmul.f32 %v586, %v485
      %v593 = vadd.f32 %v591, %v592
      %s594 = scalar_lea.vmem %s191, 8
      %595 = vst [vmem:[%s594] sm:$0xff] %v593
      %s596 = scalar_lea.vmem %s184, 48
      %v597 = vld [vmem:[%s596] sm:$0xff]
      %v598 = vld [vmem:[%s596 + $0x8] sm:$0xff]
      %v599 = vld [vmem:[%s596 + $0x10] sm:$0xff]
      %v600 = vpack.c.bf16 %v593, %v593
      %601 = vmatprep.subr.bf16.mxu0 %v337
      %602 = vmatpush1.bf16.msra.mxu0 %v336
      %603 = vmatprep.subr.bf16.mxu0 %v340
      %604 = vmatpush1.bf16.msra.mxu0 %v339
      %605 = vmatprep.subr.bf16.mxu0 %v343
      %606 = vmatpush1.bf16.msra.mxu0 %v342
      %607 = vmatprep.subr.bf16.mxu0 %v346
      %608 = vmatpush1.bf16.msra.mxu0 %v345
      %609 = vmatprep.subr.bf16.mxu0 %v349
      %610 = vmatpush1.bf16.msra.mxu0 %v348
      %611 = vmatprep.subr.bf16.mxu0 %v352
      %612 = vmatpush1.bf16.msra.mxu0 %v351
      %613 = vmatprep.subr.bf16.mxu0 %v355
      %614 = vmatpush1.bf16.msra.mxu0 %v354
      %615 = vmatprep.subr.bf16.mxu0 %v358
      %616 = vmatpush1.bf16.msra.mxu0 %v357
      %617 = vmatprep.subr.bf16.mxu0 0
      %618 = vmatpush1.bf16.msra.mxu0 0
      %619 = vmatprep.subr.bf16.mxu0 0
      %620 = vmatpush1.bf16.msra.mxu0 0
      %621 = vmatprep.subr.bf16.mxu0 0
      %622 = vmatpush1.bf16.msra.mxu0 0
      %623 = vmatprep.subr.bf16.mxu0 0
      %624 = vmatpush1.bf16.msra.mxu0 0
      %625 = vmatprep.subr.bf16.mxu0 0
      %626 = vmatpush1.bf16.msra.mxu0 0
      %627 = vmatprep.subr.bf16.mxu0 0
      %628 = vmatpush1.bf16.msra.mxu0 0
      %629 = vmatprep.subr.bf16.mxu0 0
      %630 = vmatpush1.bf16.msra.mxu0 0
      %631 = vmatprep.subr.bf16.mxu0 0
      %632 = vmatpush1.bf16.msra.mxu0 0
      %633 = vmatprep.mubr.bf16.mxu0 0
      %634 = vmatmul.mubr.bf16.gmra.mrb[0].mxu0 %v600
      %v635 = vpop.f32.mrb[0].mxu0
      %v636 = vadd.f32 %v244, %v635
      %v637 = vpop.f32.mrb[0].mxu0
      %v638 = vadd.f32 %v248, %v637
      %v639 = vpop.f32.mrb[0].mxu0
      %v640 = vpop.f32.mrb[0].mxu0
      %641 = vdwg.mxu0
      %642 = vmatprep.subr.bf16.mxu0 0
      %643 = vmatpush1.bf16.msra.mxu0 %v338
      %644 = vmatprep.subr.bf16.mxu0 0
      %645 = vmatpush1.bf16.msra.mxu0 %v341
      %646 = vmatprep.subr.bf16.mxu0 0
      %647 = vmatpush1.bf16.msra.mxu0 %v344
      %648 = vmatprep.subr.bf16.mxu0 0
      %649 = vmatpush1.bf16.msra.mxu0 %v347
      %650 = vmatprep.subr.bf16.mxu0 0
      %651 = vmatpush1.bf16.msra.mxu0 %v350
      %652 = vmatprep.subr.bf16.mxu0 0
      %653 = vmatpush1.bf16.msra.mxu0 %v353
      %654 = vmatprep.subr.bf16.mxu0 0
      %655 = vmatpush1.bf16.msra.mxu0 %v356
      %656 = vmatprep.subr.bf16.mxu0 0
      %657 = vmatpush1.bf16.msra.mxu0 %v359
      %658 = vmatprep.subr.bf16.mxu0 0
      %659 = vmatpush1.bf16.msra.mxu0 0
      %660 = vmatprep.subr.bf16.mxu0 0
      %661 = vmatpush1.bf16.msra.mxu0 0
      %662 = vmatprep.subr.bf16.mxu0 0
      %663 = vmatpush1.bf16.msra.mxu0 0
      %664 = vmatprep.subr.bf16.mxu0 0
      %665 = vmatpush1.bf16.msra.mxu0 0
      %666 = vmatprep.subr.bf16.mxu0 0
      %667 = vmatpush1.bf16.msra.mxu0 0
      %668 = vmatprep.subr.bf16.mxu0 0
      %669 = vmatpush1.bf16.msra.mxu0 0
      %670 = vmatprep.subr.bf16.mxu0 0
      %671 = vmatpush1.bf16.msra.mxu0 0
      %672 = vmatprep.subr.bf16.mxu0 0
      %673 = vmatpush1.bf16.msra.mxu0 0
      %674 = vmatprep.mubr.bf16.mxu0 0
      %675 = vmatmul.mubr.bf16.gmra.mrb[0].mxu0 %v600
      %v676 = vpop.f32.mrb[0].mxu0
      %v677 = vadd.f32 %v252, %v676
      %v678 = vpop.f32.mrb[0].mxu0
      %v679 = vpop.f32.mrb[0].mxu0
      %v680 = vpop.f32.mrb[0].mxu0
      %681 = vdwg.mxu0
      %v682 = vadd.f32 %v597, %v636
      %v683 = vxor.u32 %v682, 2147483648
      %v684 = vmul.f32 %v683, 1.442695
      %v685 = vpow.pop %v684
      %v686 = vadd.f32 %v685, 1.0
      %v687 = vrcp.pop %v686
      %v688 = vmul.f32 1.0, %v687
      %v689 = vadd.f32 %v598, %v638
      %v690 = vxor.u32 %v689, 2147483648
      %v691 = vmul.f32 %v690, 1.442695
      %v692 = vpow.pop %v691
      %v693 = vadd.f32 %v692, 1.0
      %v694 = vrcp.pop %v693
      %v695 = vmul.f32 1.0, %v694
      %v696 = vmul.f32 %v688, %v677
      %v697 = vadd.f32 %v599, %v696
      %v698 = vtanh.pop %v697
      %v699 = vsub.f32 1.0, %v695
      %v700 = vmul.f32 %v699, %v698
      %v701 = vmul.f32 %v695, %v593
      %v702 = vadd.f32 %v700, %v701
      %s703 = scalar_lea.vmem %s191, 16
      %704 = vst [vmem:[%s703] sm:$0xff] %v702
      %s705 = scalar_lea.vmem %s184, 72
      %v706 = vld [vmem:[%s705] sm:$0xff]
      %v707 = vld [vmem:[%s705 + $0x8] sm:$0xff]
      %v708 = vld [vmem:[%s705 + $0x10] sm:$0xff]
      %v709 = vpack.c.bf16 %v702, %v702
      %710 = vmatprep.subr.bf16.mxu0 %v337
      %711 = vmatpush1.bf16.msra.mxu0 %v336
      %712 = vmatprep.subr.bf16.mxu0 %v340
      %713 = vmatpush1.bf16.msra.mxu0 %v339
      %714 = vmatprep.subr.bf16.mxu0 %v343
      %715 = vmatpush1.bf16.msra.mxu0 %v342
      %716 = vmatprep.subr.bf16.mxu0 %v346
      %717 = vmatpush1.bf16.msra.mxu0 %v345
      %718 = vmatprep.subr.bf16.mxu0 %v349
      %719 = vmatpush1.bf16.msra.mxu0 %v348
      %720 = vmatprep.subr.bf16.mxu0 %v352
      %721 = vmatpush1.bf16.msra.mxu0 %v351
      %722 = vmatprep.subr.bf16.mxu0 %v355
      %723 = vmatpush1.bf16.msra.mxu0 %v354
      %724 = vmatprep.subr.bf16.mxu0 %v358
      %725 = vmatpush1.bf16.msra.mxu0 %v357
      %726 = vmatprep.subr.bf16.mxu0 0
      %727 = vmatpush1.bf16.msra.mxu0 0
      %728 = vmatprep.subr.bf16.mxu0 0
      %729 = vmatpush1.bf16.msra.mxu0 0
      %730 = vmatprep.subr.bf16.mxu0 0
      %731 = vmatpush1.bf16.msra.mxu0 0
      %732 = vmatprep.subr.bf16.mxu0 0
      %733 = vmatpush1.bf16.msra.mxu0 0
      %734 = vmatprep.subr.bf16.mxu0 0
      %735 = vmatpush1.bf16.msra.mxu0 0
      %736 = vmatprep.subr.bf16.mxu0 0
      %737 = vmatpush1.bf16.msra.mxu0 0
      %738 = vmatprep.subr.bf16.mxu0 0
      %739 = vmatpush1.bf16.msra.mxu0 0
      %740 = vmatprep.subr.bf16.mxu0 0
      %741 = vmatpush1.bf16.msra.mxu0 0
      %742 = vmatprep.mubr.bf16.mxu0 0
      %743 = vmatmul.mubr.bf16.gmra.mrb[0].mxu0 %v709
      %v744 = vpop.f32.mrb[0].mxu0
      %v745 = vadd.f32 %v244, %v744
      %v746 = vpop.f32.mrb[0].mxu0
      %v747 = vadd.f32 %v248, %v746
      %v748 = vpop.f32.mrb[0].mxu0
      %v749 = vpop.f32.mrb[0].mxu0
      %750 = vdwg.mxu0
      %751 = vmatprep.subr.bf16.mxu0 0
      %752 = vmatpush1.bf16.msra.mxu0 %v338
      %753 = vmatprep.subr.bf16.mxu0 0
      %754 = vmatpush1.bf16.msra.mxu0 %v341
      %755 = vmatprep.subr.bf16.mxu0 0
      %756 = vmatpush1.bf16.msra.mxu0 %v344
      %757 = vmatprep.subr.bf16.mxu0 0
      %758 = vmatpush1.bf16.msra.mxu0 %v347
      %759 = vmatprep.subr.bf16.mxu0 0
      %760 = vmatpush1.bf16.msra.mxu0 %v350
      %761 = vmatprep.subr.bf16.mxu0 0
      %762 = vmatpush1.bf16.msra.mxu0 %v353
      %763 = vmatprep.subr.bf16.mxu0 0
      %764 = vmatpush1.bf16.msra.mxu0 %v356
      %765 = vmatprep.subr.bf16.mxu0 0
      %766 = vmatpush1.bf16.msra.mxu0 %v359
      %767 = vmatprep.subr.bf16.mxu0 0
      %768 = vmatpush1.bf16.msra.mxu0 0
      %769 = vmatprep.subr.bf16.mxu0 0
      %770 = vmatpush1.bf16.msra.mxu0 0
      %771 = vmatprep.subr.bf16.mxu0 0
      %772 = vmatpush1.bf16.msra.mxu0 0
      %773 = vmatprep.subr.bf16.mxu0 0
      %774 = vmatpush1.bf16.msra.mxu0 0
      %775 = vmatprep.subr.bf16.mxu0 0
      %776 = vmatpush1.bf16.msra.mxu0 0
      %777 = vmatprep.subr.bf16.mxu0 0
      %778 = vmatpush1.bf16.msra.mxu0 0
      %779 = vmatprep.subr.bf16.mxu0 0
      %780 = vmatpush1.bf16.msra.mxu0 0
      %781 = vmatprep.subr.bf16.mxu0 0
      %782 = vmatpush1.bf16.msra.mxu0 0
      %783 = vmatprep.mubr.bf16.mxu0 0
      %784 = vmatmul.mubr.bf16.gmra.mrb[0].mxu0 %v709
      %v785 = vpop.f32.mrb[0].mxu0
      %v786 = vadd.f32 %v252, %v785
      %v787 = vpop.f32.mrb[0].mxu0
      %v788 = vpop.f32.mrb[0].mxu0
      %v789 = vpop.f32.mrb[0].mxu0
      %790 = vdwg.mxu0
      %v791 = vadd.f32 %v706, %v745
      %v792 = vxor.u32 %v791, 2147483648
      %v793 = vmul.f32 %v792, 1.442695
      %v794 = vpow.pop %v793
      %v795 = vadd.f32 %v794, 1.0
      %v796 = vrcp.pop %v795
      %v797 = vmul.f32 1.0, %v796
      %v798 = vadd.f32 %v707, %v747
      %v799 = vxor.u32 %v798, 2147483648
      %v800 = vmul.f32 %v799, 1.442695
      %v801 = vpow.pop %v800
      %v802 = vadd.f32 %v801, 1.0
      %v803 = vrcp.pop %v802
      %v804 = vmul.f32 1.0, %v803
      %v805 = vmul.f32 %v797, %v786
      %v806 = vadd.f32 %v708, %v805
      %v807 = vtanh.pop %v806
      %v808 = vsub.f32 1.0, %v804
      %v809 = vmul.f32 %v808, %v807
      %v810 = vmul.f32 %v804, %v702
      %v811 = vadd.f32 %v809, %v810
      %s812 = scalar_lea.vmem %s191, 24
      %813 = vst [vmem:[%s812] sm:$0xff] %v811
      %s814 = scalar_lea.vmem %s184, 96
      %v815 = vld [vmem:[%s814] sm:$0xff]
      %v816 = vld [vmem:[%s814 + $0x8] sm:$0xff]
      %v817 = vld [vmem:[%s814 + $0x10] sm:$0xff]
      %v818 = vpack.c.bf16 %v811, %v811
      %819 = vmatprep.subr.bf16.mxu0 %v337
      %820 = vmatpush1.bf16.msra.mxu0 %v336
      %821 = vmatprep.subr.bf16.mxu0 %v340
      %822 = vmatpush1.bf16.msra.mxu0 %v339
      %823 = vmatprep.subr.bf16.mxu0 %v343
      %824 = vmatpush1.bf16.msra.mxu0 %v342
      %825 = vmatprep.subr.bf16.mxu0 %v346
      %826 = vmatpush1.bf16.msra.mxu0 %v345
      %827 = vmatprep.subr.bf16.mxu0 %v349
      %828 = vmatpush1.bf16.msra.mxu0 %v348
      %829 = vmatprep.subr.bf16.mxu0 %v352
      %830 = vmatpush1.bf16.msra.mxu0 %v351
      %831 = vmatprep.subr.bf16.mxu0 %v355
      %832 = vmatpush1.bf16.msra.mxu0 %v354
      %833 = vmatprep.subr.bf16.mxu0 %v358
      %834 = vmatpush1.bf16.msra.mxu0 %v357
      %835 = vmatprep.subr.bf16.mxu0 0
      %836 = vmatpush1.bf16.msra.mxu0 0
      %837 = vmatprep.subr.bf16.mxu0 0
      %838 = vmatpush1.bf16.msra.mxu0 0
      %839 = vmatprep.subr.bf16.mxu0 0
      %840 = vmatpush1.bf16.msra.mxu0 0
      %841 = vmatprep.subr.bf16.mxu0 0
      %842 = vmatpush1.bf16.msra.mxu0 0
      %843 = vmatprep.subr.bf16.mxu0 0
      %844 = vmatpush1.bf16.msra.mxu0 0
      %845 = vmatprep.subr.bf16.mxu0 0
      %846 = vmatpush1.bf16.msra.mxu0 0
      %847 = vmatprep.subr.bf16.mxu0 0
      %848 = vmatpush1.bf16.msra.mxu0 0
      %849 = vmatprep.subr.bf16.mxu0 0
      %850 = vmatpush1.bf16.msra.mxu0 0
      %851 = vmatprep.mubr.bf16.mxu0 0
      %852 = vmatmul.mubr.bf16.gmra.mrb[0].mxu0 %v818
      %v853 = vpop.f32.mrb[0].mxu0
      %v854 = vadd.f32 %v244, %v853
      %v855 = vpop.f32.mrb[0].mxu0
      %v856 = vadd.f32 %v248, %v855
      %v857 = vpop.f32.mrb[0].mxu0
      %v858 = vpop.f32.mrb[0].mxu0
      %859 = vdwg.mxu0
      %860 = vmatprep.subr.bf16.mxu0 0
      %861 = vmatpush1.bf16.msra.mxu0 %v338
      %862 = vmatprep.subr.bf16.mxu0 0
      %863 = vmatpush1.bf16.msra.mxu0 %v341
      %864 = vmatprep.subr.bf16.mxu0 0
      %865 = vmatpush1.bf16.msra.mxu0 %v344
      %866 = vmatprep.subr.bf16.mxu0 0
      %867 = vmatpush1.bf16.msra.mxu0 %v347
      %868 = vmatprep.subr.bf16.mxu0 0
      %869 = vmatpush1.bf16.msra.mxu0 %v350
      %870 = vmatprep.subr.bf16.mxu0 0
      %871 = vmatpush1.bf16.msra.mxu0 %v353
      %872 = vmatprep.subr.bf16.mxu0 0
      %873 = vmatpush1.bf16.msra.mxu0 %v356
      %874 = vmatprep.subr.bf16.mxu0 0
      %875 = vmatpush1.bf16.msra.mxu0 %v359
      %876 = vmatprep.subr.bf16.mxu0 0
      %877 = vmatpush1.bf16.msra.mxu0 0
      %878 = vmatprep.subr.bf16.mxu0 0
      %879 = vmatpush1.bf16.msra.mxu0 0
      %880 = vmatprep.subr.bf16.mxu0 0
      %881 = vmatpush1.bf16.msra.mxu0 0
      %882 = vmatprep.subr.bf16.mxu0 0
      %883 = vmatpush1.bf16.msra.mxu0 0
      %884 = vmatprep.subr.bf16.mxu0 0
      %885 = vmatpush1.bf16.msra.mxu0 0
      %886 = vmatprep.subr.bf16.mxu0 0
      %887 = vmatpush1.bf16.msra.mxu0 0
      %888 = vmatprep.subr.bf16.mxu0 0
      %889 = vmatpush1.bf16.msra.mxu0 0
      %890 = vmatprep.subr.bf16.mxu0 0
      %891 = vmatpush1.bf16.msra.mxu0 0
      %892 = vmatprep.mubr.bf16.mxu0 0
      %893 = vmatmul.mubr.bf16.gmra.mrb[0].mxu0 %v818
      %v894 = vpop.f32.mrb[0].mxu0
      %v895 = vadd.f32 %v252, %v894
      %v896 = vpop.f32.mrb[0].mxu0
      %v897 = vpop.f32.mrb[0].mxu0
      %v898 = vpop.f32.mrb[0].mxu0
      %899 = vdwg.mxu0
      %v900 = vadd.f32 %v815, %v854
      %v901 = vxor.u32 %v900, 2147483648
      %v902 = vmul.f32 %v901, 1.442695
      %v903 = vpow.pop %v902
      %v904 = vadd.f32 %v903, 1.0
      %v905 = vrcp.pop %v904
      %v906 = vmul.f32 1.0, %v905
      %v907 = vadd.f32 %v816, %v856
      %v908 = vxor.u32 %v907, 2147483648
      %v909 = vmul.f32 %v908, 1.442695
      %v910 = vpow.pop %v909
      %v911 = vadd.f32 %v910, 1.0
      %v912 = vrcp.pop %v911
      %v913 = vmul.f32 1.0, %v912
      %v914 = vmul.f32 %v906, %v895
      %v915 = vadd.f32 %v817, %v914
      %v916 = vtanh.pop %v915
      %v917 = vsub.f32 1.0, %v913
      %v918 = vmul.f32 %v917, %v916
      %v919 = vmul.f32 %v913, %v811
      %v920 = vadd.f32 %v918, %v919
      %s921 = scalar_lea.vmem %s191, 32
      %922 = vst [vmem:[%s921] sm:$0xff] %v920
      %s923 = scalar_lea.vmem %s184, 120
      %v924 = vld [vmem:[%s923] sm:$0xff]
      %v925 = vld [vmem:[%s923 + $0x8] sm:$0xff]
      %v926 = vld [vmem:[%s923 + $0x10] sm:$0xff]
      %v927 = vpack.c.bf16 %v920, %v920
      %928 = vmatprep.subr.bf16.mxu0 %v337
      %929 = vmatpush1.bf16.msra.mxu0 %v336
      %930 = vmatprep.subr.bf16.mxu0 %v340
      %931 = vmatpush1.bf16.msra.mxu0 %v339
      %932 = vmatprep.subr.bf16.mxu0 %v343
      %933 = vmatpush1.bf16.msra.mxu0 %v342
      %934 = vmatprep.subr.bf16.mxu0 %v346
      %935 = vmatpush1.bf16.msra.mxu0 %v345
      %936 = vmatprep.subr.bf16.mxu0 %v349
      %937 = vmatpush1.bf16.msra.mxu0 %v348
      %938 = vmatprep.subr.bf16.mxu0 %v352
      %939 = vmatpush1.bf16.msra.mxu0 %v351
      %940 = vmatprep.subr.bf16.mxu0 %v355
      %941 = vmatpush1.bf16.msra.mxu0 %v354
      %942 = vmatprep.subr.bf16.mxu0 %v358
      %943 = vmatpush1.bf16.msra.mxu0 %v357
      %944 = vmatprep.subr.bf16.mxu0 0
      %945 = vmatpush1.bf16.msra.mxu0 0
      %946 = vmatprep.subr.bf16.mxu0 0
      %947 = vmatpush1.bf16.msra.mxu0 0
      %948 = vmatprep.subr.bf16.mxu0 0
      %949 = vmatpush1.bf16.msra.mxu0 0
      %950 = vmatprep.subr.bf16.mxu0 0
      %951 = vmatpush1.bf16.msra.mxu0 0
      %952 = vmatprep.subr.bf16.mxu0 0
      %953 = vmatpush1.bf16.msra.mxu0 0
      %954 = vmatprep.subr.bf16.mxu0 0
      %955 = vmatpush1.bf16.msra.mxu0 0
      %956 = vmatprep.subr.bf16.mxu0 0
      %957 = vmatpush1.bf16.msra.mxu0 0
      %958 = vmatprep.subr.bf16.mxu0 0
      %959 = vmatpush1.bf16.msra.mxu0 0
      %960 = vmatprep.mubr.bf16.mxu0 0
      %961 = vmatmul.mubr.bf16.gmra.mrb[0].mxu0 %v927
      %v962 = vpop.f32.mrb[0].mxu0
      %v963 = vadd.f32 %v244, %v962
      %v964 = vpop.f32.mrb[0].mxu0
      %v965 = vadd.f32 %v248, %v964
      %v966 = vpop.f32.mrb[0].mxu0
      %v967 = vpop.f32.mrb[0].mxu0
      %968 = vdwg.mxu0
      %969 = vmatprep.subr.bf16.mxu0 0
      %970 = vmatpush1.bf16.msra.mxu0 %v338
      %971 = vmatprep.subr.bf16.mxu0 0
      %972 = vmatpush1.bf16.msra.mxu0 %v341
      %973 = vmatprep.subr.bf16.mxu0 0
      %974 = vmatpush1.bf16.msra.mxu0 %v344
      %975 = vmatprep.subr.bf16.mxu0 0
      %976 = vmatpush1.bf16.msra.mxu0 %v347
      %977 = vmatprep.subr.bf16.mxu0 0
      %978 = vmatpush1.bf16.msra.mxu0 %v350
      %979 = vmatprep.subr.bf16.mxu0 0
      %980 = vmatpush1.bf16.msra.mxu0 %v353
      %981 = vmatprep.subr.bf16.mxu0 0
      %982 = vmatpush1.bf16.msra.mxu0 %v356
      %983 = vmatprep.subr.bf16.mxu0 0
      %984 = vmatpush1.bf16.msra.mxu0 %v359
      %985 = vmatprep.subr.bf16.mxu0 0
      %986 = vmatpush1.bf16.msra.mxu0 0
      %987 = vmatprep.subr.bf16.mxu0 0
      %988 = vmatpush1.bf16.msra.mxu0 0
      %989 = vmatprep.subr.bf16.mxu0 0
      %990 = vmatpush1.bf16.msra.mxu0 0
      %991 = vmatprep.subr.bf16.mxu0 0
      %992 = vmatpush1.bf16.msra.mxu0 0
      %993 = vmatprep.subr.bf16.mxu0 0
      %994 = vmatpush1.bf16.msra.mxu0 0
      %995 = vmatprep.subr.bf16.mxu0 0
      %996 = vmatpush1.bf16.msra.mxu0 0
      %997 = vmatprep.subr.bf16.mxu0 0
      %998 = vmatpush1.bf16.msra.mxu0 0
      %999 = vmatprep.subr.bf16.mxu0 0
      %1000 = vmatpush1.bf16.msra.mxu0 0
      %1001 = vmatprep.mubr.bf16.mxu0 0
      %1002 = vmatmul.mubr.bf16.gmra.mrb[0].mxu0 %v927
      %v1003 = vpop.f32.mrb[0].mxu0
      %v1004 = vadd.f32 %v252, %v1003
      %v1005 = vpop.f32.mrb[0].mxu0
      %v1006 = vpop.f32.mrb[0].mxu0
      %v1007 = vpop.f32.mrb[0].mxu0
      %1008 = vdwg.mxu0
      %v1009 = vadd.f32 %v924, %v963
      %v1010 = vxor.u32 %v1009, 2147483648
      %v1011 = vmul.f32 %v1010, 1.442695
      %v1012 = vpow.pop %v1011
      %v1013 = vadd.f32 %v1012, 1.0
      %v1014 = vrcp.pop %v1013
      %v1015 = vmul.f32 1.0, %v1014
      %v1016 = vadd.f32 %v925, %v965
      %v1017 = vxor.u32 %v1016, 2147483648
      %v1018 = vmul.f32 %v1017, 1.442695
      %v1019 = vpow.pop %v1018
      %v1020 = vadd.f32 %v1019, 1.0
      %v1021 = vrcp.pop %v1020
      %v1022 = vmul.f32 1.0, %v1021
      %v1023 = vmul.f32 %v1015, %v1004
      %v1024 = vadd.f32 %v926, %v1023
      %v1025 = vtanh.pop %v1024
      %v1026 = vsub.f32 1.0, %v1022
      %v1027 = vmul.f32 %v1026, %v1025
      %v1028 = vmul.f32 %v1022, %v920
      %v1029 = vadd.f32 %v1027, %v1028
      %s1030 = scalar_lea.vmem %s191, 40
      %1031 = vst [vmem:[%s1030] sm:$0xff] %v1029
      %s1032 = scalar_lea.vmem %s184, 144
      %v1033 = vld [vmem:[%s1032] sm:$0xff]
      %v1034 = vld [vmem:[%s1032 + $0x8] sm:$0xff]
      %v1035 = vld [vmem:[%s1032 + $0x10] sm:$0xff]
      %v1036 = vpack.c.bf16 %v1029, %v1029
      %1037 = vmatprep.subr.bf16.mxu0 %v337
      %1038 = vmatpush1.bf16.msra.mxu0 %v336
      %1039 = vmatprep.subr.bf16.mxu0 %v340
      %1040 = vmatpush1.bf16.msra.mxu0 %v339
      %1041 = vmatprep.subr.bf16.mxu0 %v343
      %1042 = vmatpush1.bf16.msra.mxu0 %v342
      %1043 = vmatprep.subr.bf16.mxu0 %v346
      %1044 = vmatpush1.bf16.msra.mxu0 %v345
      %1045 = vmatprep.subr.bf16.mxu0 %v349
      %1046 = vmatpush1.bf16.msra.mxu0 %v348
      %1047 = vmatprep.subr.bf16.mxu0 %v352
      %1048 = vmatpush1.bf16.msra.mxu0 %v351
      %1049 = vmatprep.subr.bf16.mxu0 %v355
      %1050 = vmatpush1.bf16.msra.mxu0 %v354
      %1051 = vmatprep.subr.bf16.mxu0 %v358
      %1052 = vmatpush1.bf16.msra.mxu0 %v357
      %1053 = vmatprep.subr.bf16.mxu0 0
      %1054 = vmatpush1.bf16.msra.mxu0 0
      %1055 = vmatprep.subr.bf16.mxu0 0
      %1056 = vmatpush1.bf16.msra.mxu0 0
      %1057 = vmatprep.subr.bf16.mxu0 0
      %1058 = vmatpush1.bf16.msra.mxu0 0
      %1059 = vmatprep.subr.bf16.mxu0 0
      %1060 = vmatpush1.bf16.msra.mxu0 0
      %1061 = vmatprep.subr.bf16.mxu0 0
      %1062 = vmatpush1.bf16.msra.mxu0 0
      %1063 = vmatprep.subr.bf16.mxu0 0
      %1064 = vmatpush1.bf16.msra.mxu0 0
      %1065 = vmatprep.subr.bf16.mxu0 0
      %1066 = vmatpush1.bf16.msra.mxu0 0
      %1067 = vmatprep.subr.bf16.mxu0 0
      %1068 = vmatpush1.bf16.msra.mxu0 0
      %1069 = vmatprep.mubr.bf16.mxu0 0
      %1070 = vmatmul.mubr.bf16.gmra.mrb[0].mxu0 %v1036
      %v1071 = vpop.f32.mrb[0].mxu0
      %v1072 = vadd.f32 %v244, %v1071
      %v1073 = vpop.f32.mrb[0].mxu0
      %v1074 = vadd.f32 %v248, %v1073
      %v1075 = vpop.f32.mrb[0].mxu0
      %v1076 = vpop.f32.mrb[0].mxu0
      %1077 = vdwg.mxu0
      %1078 = vmatprep.subr.bf16.mxu0 0
      %1079 = vmatpush1.bf16.msra.mxu0 %v338
      %1080 = vmatprep.subr.bf16.mxu0 0
      %1081 = vmatpush1.bf16.msra.mxu0 %v341
      %1082 = vmatprep.subr.bf16.mxu0 0
      %1083 = vmatpush1.bf16.msra.mxu0 %v344
      %1084 = vmatprep.subr.bf16.mxu0 0
      %1085 = vmatpush1.bf16.msra.mxu0 %v347
      %1086 = vmatprep.subr.bf16.mxu0 0
      %1087 = vmatpush1.bf16.msra.mxu0 %v350
      %1088 = vmatprep.subr.bf16.mxu0 0
      %1089 = vmatpush1.bf16.msra.mxu0 %v353
      %1090 = vmatprep.subr.bf16.mxu0 0
      %1091 = vmatpush1.bf16.msra.mxu0 %v356
      %1092 = vmatprep.subr.bf16.mxu0 0
      %1093 = vmatpush1.bf16.msra.mxu0 %v359
      %1094 = vmatprep.subr.bf16.mxu0 0
      %1095 = vmatpush1.bf16.msra.mxu0 0
      %1096 = vmatprep.subr.bf16.mxu0 0
      %1097 = vmatpush1.bf16.msra.mxu0 0
      %1098 = vmatprep.subr.bf16.mxu0 0
      %1099 = vmatpush1.bf16.msra.mxu0 0
      %1100 = vmatprep.subr.bf16.mxu0 0
      %1101 = vmatpush1.bf16.msra.mxu0 0
      %1102 = vmatprep.subr.bf16.mxu0 0
      %1103 = vmatpush1.bf16.msra.mxu0 0
      %1104 = vmatprep.subr.bf16.mxu0 0
      %1105 = vmatpush1.bf16.msra.mxu0 0
      %1106 = vmatprep.subr.bf16.mxu0 0
      %1107 = vmatpush1.bf16.msra.mxu0 0
      %1108 = vmatprep.subr.bf16.mxu0 0
      %1109 = vmatpush1.bf16.msra.mxu0 0
      %1110 = vmatprep.mubr.bf16.mxu0 0
      %1111 = vmatmul.mubr.bf16.gmra.mrb[0].mxu0 %v1036
      %v1112 = vpop.f32.mrb[0].mxu0
      %v1113 = vadd.f32 %v252, %v1112
      %v1114 = vpop.f32.mrb[0].mxu0
      %v1115 = vpop.f32.mrb[0].mxu0
      %v1116 = vpop.f32.mrb[0].mxu0
      %1117 = vdwg.mxu0
      %v1118 = vadd.f32 %v1033, %v1072
      %v1119 = vxor.u32 %v1118, 2147483648
      %v1120 = vmul.f32 %v1119, 1.442695
      %v1121 = vpow.pop %v1120
      %v1122 = vadd.f32 %v1121, 1.0
      %v1123 = vrcp.pop %v1122
      %v1124 = vmul.f32 1.0, %v1123
      %v1125 = vadd.f32 %v1034, %v1074
      %v1126 = vxor.u32 %v1125, 2147483648
      %v1127 = vmul.f32 %v1126, 1.442695
      %v1128 = vpow.pop %v1127
      %v1129 = vadd.f32 %v1128, 1.0
      %v1130 = vrcp.pop %v1129
      %v1131 = vmul.f32 1.0, %v1130
      %v1132 = vmul.f32 %v1124, %v1113
      %v1133 = vadd.f32 %v1035, %v1132
      %v1134 = vtanh.pop %v1133
      %v1135 = vsub.f32 1.0, %v1131
      %v1136 = vmul.f32 %v1135, %v1134
      %v1137 = vmul.f32 %v1131, %v1029
      %v1138 = vadd.f32 %v1136, %v1137
      %s1139 = scalar_lea.vmem %s191, 48
      %1140 = vst [vmem:[%s1139] sm:$0xff] %v1138
      %s1141 = scalar_lea.vmem %s184, 168
      %v1142 = vld [vmem:[%s1141] sm:$0xff]
      %v1143 = vld [vmem:[%s1141 + $0x8] sm:$0xff]
      %v1144 = vld [vmem:[%s1141 + $0x10] sm:$0xff]
      %v1145 = vpack.c.bf16 %v1138, %v1138
      %1146 = vmatprep.subr.bf16.mxu0 %v337
      %1147 = vmatpush1.bf16.msra.mxu0 %v336
      %1148 = vmatprep.subr.bf16.mxu0 %v340
      %1149 = vmatpush1.bf16.msra.mxu0 %v339
      %1150 = vmatprep.subr.bf16.mxu0 %v343
      %1151 = vmatpush1.bf16.msra.mxu0 %v342
      %1152 = vmatprep.subr.bf16.mxu0 %v346
      %1153 = vmatpush1.bf16.msra.mxu0 %v345
      %1154 = vmatprep.subr.bf16.mxu0 %v349
      %1155 = vmatpush1.bf16.msra.mxu0 %v348
      %1156 = vmatprep.subr.bf16.mxu0 %v352
      %1157 = vmatpush1.bf16.msra.mxu0 %v351
      %1158 = vmatprep.subr.bf16.mxu0 %v355
      %1159 = vmatpush1.bf16.msra.mxu0 %v354
      %1160 = vmatprep.subr.bf16.mxu0 %v358
      %1161 = vmatpush1.bf16.msra.mxu0 %v357
      %1162 = vmatprep.subr.bf16.mxu0 0
      %1163 = vmatpush1.bf16.msra.mxu0 0
      %1164 = vmatprep.subr.bf16.mxu0 0
      %1165 = vmatpush1.bf16.msra.mxu0 0
      %1166 = vmatprep.subr.bf16.mxu0 0
      %1167 = vmatpush1.bf16.msra.mxu0 0
      %1168 = vmatprep.subr.bf16.mxu0 0
      %1169 = vmatpush1.bf16.msra.mxu0 0
      %1170 = vmatprep.subr.bf16.mxu0 0
      %1171 = vmatpush1.bf16.msra.mxu0 0
      %1172 = vmatprep.subr.bf16.mxu0 0
      %1173 = vmatpush1.bf16.msra.mxu0 0
      %1174 = vmatprep.subr.bf16.mxu0 0
      %1175 = vmatpush1.bf16.msra.mxu0 0
      %1176 = vmatprep.subr.bf16.mxu0 0
      %1177 = vmatpush1.bf16.msra.mxu0 0
      %1178 = vmatprep.mubr.bf16.mxu0 0
      %1179 = vmatmul.mubr.bf16.gmra.mrb[0].mxu0 %v1145
      %v1180 = vpop.f32.mrb[0].mxu0
      %v1181 = vadd.f32 %v244, %v1180
      %v1182 = vpop.f32.mrb[0].mxu0
      %v1183 = vadd.f32 %v248, %v1182
      %v1184 = vpop.f32.mrb[0].mxu0
      %v1185 = vpop.f32.mrb[0].mxu0
      %1186 = vdwg.mxu0
      %1187 = vmatprep.subr.bf16.mxu0 0
      %1188 = vmatpush1.bf16.msra.mxu0 %v338
      %1189 = vmatprep.subr.bf16.mxu0 0
      %1190 = vmatpush1.bf16.msra.mxu0 %v341
      %1191 = vmatprep.subr.bf16.mxu0 0
      %1192 = vmatpush1.bf16.msra.mxu0 %v344
      %1193 = vmatprep.subr.bf16.mxu0 0
      %1194 = vmatpush1.bf16.msra.mxu0 %v347
      %1195 = vmatprep.subr.bf16.mxu0 0
      %1196 = vmatpush1.bf16.msra.mxu0 %v350
      %1197 = vmatprep.subr.bf16.mxu0 0
      %1198 = vmatpush1.bf16.msra.mxu0 %v353
      %1199 = vmatprep.subr.bf16.mxu0 0
      %1200 = vmatpush1.bf16.msra.mxu0 %v356
      %1201 = vmatprep.subr.bf16.mxu0 0
      %1202 = vmatpush1.bf16.msra.mxu0 %v359
      %1203 = vmatprep.subr.bf16.mxu0 0
      %1204 = vmatpush1.bf16.msra.mxu0 0
      %1205 = vmatprep.subr.bf16.mxu0 0
      %1206 = vmatpush1.bf16.msra.mxu0 0
      %1207 = vmatprep.subr.bf16.mxu0 0
      %1208 = vmatpush1.bf16.msra.mxu0 0
      %1209 = vmatprep.subr.bf16.mxu0 0
      %1210 = vmatpush1.bf16.msra.mxu0 0
      %1211 = vmatprep.subr.bf16.mxu0 0
      %1212 = vmatpush1.bf16.msra.mxu0 0
      %1213 = vmatprep.subr.bf16.mxu0 0
      %1214 = vmatpush1.bf16.msra.mxu0 0
      %1215 = vmatprep.subr.bf16.mxu0 0
      %1216 = vmatpush1.bf16.msra.mxu0 0
      %1217 = vmatprep.subr.bf16.mxu0 0
      %1218 = vmatpush1.bf16.msra.mxu0 0
      %1219 = vmatprep.mubr.bf16.mxu0 0
      %1220 = vmatmul.mubr.bf16.gmra.mrb[0].mxu0 %v1145
      %v1221 = vpop.f32.mrb[0].mxu0
      %v1222 = vadd.f32 %v252, %v1221
      %v1223 = vpop.f32.mrb[0].mxu0
      %v1224 = vpop.f32.mrb[0].mxu0
      %v1225 = vpop.f32.mrb[0].mxu0
      %1226 = vdwg.mxu0
      %v1227 = vadd.f32 %v1142, %v1181
      %v1228 = vxor.u32 %v1227, 2147483648
      %v1229 = vmul.f32 %v1228, 1.442695
      %v1230 = vpow.pop %v1229
      %v1231 = vadd.f32 %v1230, 1.0
      %v1232 = vrcp.pop %v1231
      %v1233 = vmul.f32 1.0, %v1232
      %v1234 = vadd.f32 %v1143, %v1183
      %v1235 = vxor.u32 %v1234, 2147483648
      %v1236 = vmul.f32 %v1235, 1.442695
      %v1237 = vpow.pop %v1236
      %v1238 = vadd.f32 %v1237, 1.0
      %v1239 = vrcp.pop %v1238
      %v1240 = vmul.f32 1.0, %v1239
      %v1241 = vmul.f32 %v1233, %v1222
      %v1242 = vadd.f32 %v1144, %v1241
      %v1243 = vtanh.pop %v1242
      %v1244 = vsub.f32 1.0, %v1240
      %v1245 = vmul.f32 %v1244, %v1243
      %v1246 = vmul.f32 %v1240, %v1138
      %v1247 = vadd.f32 %v1245, %v1246
      %s1248 = scalar_lea.vmem %s191, 56
      %1249 = vst [vmem:[%s1248] sm:$0xff] %v1247
      %1250 = vst [vmem:[#allocation2] sm:$0xff] %v1247
      %s1251 = smul.u32 %s19, %s18
      %s1252 = smul.u32 8, %s1251
      %p1253 = scmp.lt.s32.totalorder %s1252, 7
      %s1254 = scalar_select %p1253, %s1252, 7
      %s1255 = smul.addr %s1254, 8
      %s1256 = scalar_lea.vmem %s3, %s1255
      // Predicated region
      $region37: #{simple_enhancer_forward.4} parent=31 // pred_check
        %p1257 = pneg %p114
      $region38: #{simple_enhancer_forward.4} parent=31 // pred_check_branch
        %1259 = sbr.rel (%p1257) target = $region40
      $region39: #{simple_enhancer_forward.4} parent=31 // pred_region
        %s1260 = smul.u32 %s19, %s18
        %s1261 = smul.u32 8, %s1260
      $region40: #{simple_enhancer_forward.4} parent=31 // pred_fallthru
        _
    $region32: #{simple_enhancer_forward.4} parent=5 // pred_fallthru
      _
    %p1262 = scmp.le.s32.totalorder 2, %s9
    // Predicated region
    $region41: #{simple_enhancer_forward.4} parent=5 // pred_check
      %p1263 = pneg %p1262
    $region42: #{simple_enhancer_forward.4} parent=5 // pred_check_branch
      %1265 = sbr.rel (%p1263) target = $region44
    $region43: #{simple_enhancer_forward.4} parent=5 // pred_region
      %s1266 = ssub.s32 %s9, 2
      // Predicated region
      $region45: #{simple_enhancer_forward.4} parent=43 // pred_check
        %p1267 = pneg %p120
      $region46: #{simple_enhancer_forward.4} parent=43 // pred_check_branch
        %1269 = sbr.rel (%p1267) target = $region48
      $region47: #{simple_enhancer_forward.4} parent=43 // pred_region
        %s1270 = smul.u32 %s21, %s20
        %s1271 = smul.u32 8, %s1270
        %p1272 = scmp.lt.s32.totalorder %s1271, 7
        %s1273 = scalar_select %p1272, %s1271, 7
        %s1274 = smul.addr %s1273, 8
        %s1275 = scalar_lea.vmem %s3, %s1274
      $region48: #{simple_enhancer_forward.4} parent=43 // pred_fallthru
        _
    $region44: #{simple_enhancer_forward.4} parent=5 // pred_fallthru
      _
  $region6: #{simple_enhancer_forward.4} parent=0 // loop_footer
    %s13 = sadd.s32 1, %s9
  $region7: #{simple_enhancer_forward.4} parent=0 // loop_footer_branch
    %8 = sbr.rel target = $region3
  $region8: #{simple_enhancer_forward.4} parent=0 // loop_exit
    _

// kernel: simple_enhancer_forward.5
$region0: #{simple_enhancer_forward.5}
  #allocation0 [shape = 'u32[]', space=smem, size = 0x4, offset = 0x4, fixed_abs, tag = 'smem constant byte address 0x4 - core index']
  #allocation1 [shape = 'u32[144,128]{1,0:T(1,128)}', space=vmem, size = 0x12000, scoped, tag = 'internal scratch']
  %s0 = inlined_call_operand.vmem [shape: f32[64,128], index: 0, kind: input, shape index: {}]
  %s1 = inlined_call_operand.vmem [shape: bf16[64,512], index: 1, kind: input, shape index: {}]
  %s2 = inlined_call_operand.vmem [shape: bf16[128,256], index: 2, kind: input, shape index: {}]
  %s3 = inlined_call_operand.vmem [shape: f32[1,256], index: 3, kind: input, shape index: {}]
  %s4 = inlined_call_operand.vmem [shape: bf16[256,512], index: 4, kind: input, shape index: {}]
  %s5 = inlined_call_operand.vmem [shape: bf16[256,512], index: 5, kind: input, shape index: {}]
  %s6 = inlined_call_operand.vmem [shape: f32[1,512], index: 6, kind: input, shape index: {}]
  %s7 = inlined_call_operand.vmem [shape: f32[64,512], index: 7, kind: output, shape index: {}]
  %s8 = sld [smem:[#allocation0]]
  $region38: #{simple_enhancer_forward.5} parent=0
    _
  %s10 = ssub.s32 1, %s8
  %s11 = scalar_select 0, %s10, %s8
  // Predicated region
  $region2: #{simple_enhancer_forward.5} parent=0 // pred_check
    _
  $region3: #{simple_enhancer_forward.5} parent=0 // pred_check_branch
    %13 = sbr.rel (0) target = $region5
  $region4: #{simple_enhancer_forward.5} parent=0 // pred_region
    _
  $region5: #{simple_enhancer_forward.5} parent=0 // pred_fallthru
    _
  // Predicated region
  $region6: #{simple_enhancer_forward.5} parent=0 // pred_check
    _
  $region7: #{simple_enhancer_forward.5} parent=0 // pred_check_branch
    %15 = sbr.rel (0) target = $region9
  $region8: #{simple_enhancer_forward.5} parent=0 // pred_region
    _
  $region9: #{simple_enhancer_forward.5} parent=0 // pred_fallthru
    _
  // Predicated region
  $region10: #{simple_enhancer_forward.5} parent=0 // pred_check
    _
  $region11: #{simple_enhancer_forward.5} parent=0 // pred_check_branch
    %17 = sbr.rel (0) target = $region13
  $region12: #{simple_enhancer_forward.5} parent=0 // pred_region
    _
  $region13: #{simple_enhancer_forward.5} parent=0 // pred_fallthru
    _
  // Predicated region
  $region14: #{simple_enhancer_forward.5} parent=0 // pred_check
    _
  $region15: #{simple_enhancer_forward.5} parent=0 // pred_check_branch
    %19 = sbr.rel (0) target = $region17
  $region16: #{simple_enhancer_forward.5} parent=0 // pred_region
    _
  $region17: #{simple_enhancer_forward.5} parent=0 // pred_fallthru
    _
  // Predicated region
  $region18: #{simple_enhancer_forward.5} parent=0 // pred_check
    _
  $region19: #{simple_enhancer_forward.5} parent=0 // pred_check_branch
    %21 = sbr.rel (0) target = $region21
  $region20: #{simple_enhancer_forward.5} parent=0 // pred_region
    _
  $region21: #{simple_enhancer_forward.5} parent=0 // pred_fallthru
    _
  // Predicated region
  $region22: #{simple_enhancer_forward.5} parent=0 // pred_check
    _
  $region23: #{simple_enhancer_forward.5} parent=0 // pred_check_branch
    %23 = sbr.rel (0) target = $region25
  $region24: #{simple_enhancer_forward.5} parent=0 // pred_region
    _
  $region25: #{simple_enhancer_forward.5} parent=0 // pred_fallthru
    _
  // Predicated region
  $region26: #{simple_enhancer_forward.5} parent=0 // pred_check
    _
  $region27: #{simple_enhancer_forward.5} parent=0 // pred_check_branch
    %25 = sbr.rel (0) target = $region29
  $region28: #{simple_enhancer_forward.5} parent=0 // pred_region
    _
  $region29: #{simple_enhancer_forward.5} parent=0 // pred_fallthru
    _
  %v27 = vld [vmem:[%s0] sm:$0xff]
  %v28 = vld [vmem:[%s0 + $0x8] sm:$0xff]
  %v29 = vld [vmem:[%s0 + $0x10] sm:$0xff]
  %v30 = vld [vmem:[%s0 + $0x18] sm:$0xff]
  %v31 = vld [vmem:[%s0 + $0x20] sm:$0xff]
  %v32 = vld [vmem:[%s0 + $0x28] sm:$0xff]
  %v33 = vld [vmem:[%s0 + $0x30] sm:$0xff]
  %v34 = vld [vmem:[%s0 + $0x38] sm:$0xff]
  %v35 = vpack.c.bf16 %v28, %v27
  %v36 = vpack.c.bf16 %v30, %v29
  %v37 = vpack.c.bf16 %v32, %v31
  %v38 = vpack.c.bf16 %v34, %v33
  %v39 = vld [vmem:[%s2] sm:$0xff]
  %v40 = vld [vmem:[%s2 + $0x8] sm:$0xff]
  %v41 = vld [vmem:[%s2 + $0x10] sm:$0xff]
  %v42 = vld [vmem:[%s2 + $0x18] sm:$0xff]
  %v43 = vld [vmem:[%s2 + $0x20] sm:$0xff]
  %v44 = vld [vmem:[%s2 + $0x28] sm:$0xff]
  %v45 = vld [vmem:[%s2 + $0x30] sm:$0xff]
  %v46 = vld [vmem:[%s2 + $0x38] sm:$0xff]
  %v47 = vld [vmem:[%s2 + $0x40] sm:$0xff]
  %v48 = vld [vmem:[%s2 + $0x48] sm:$0xff]
  %v49 = vld [vmem:[%s2 + $0x50] sm:$0xff]
  %v50 = vld [vmem:[%s2 + $0x58] sm:$0xff]
  %v51 = vld [vmem:[%s2 + $0x60] sm:$0xff]
  %v52 = vld [vmem:[%s2 + $0x68] sm:$0xff]
  %v53 = vld [vmem:[%s2 + $0x70] sm:$0xff]
  %v54 = vld [vmem:[%s2 + $0x78] sm:$0xff]
  %v55 = vld [vmem:[%s3] sm:$0x3]
  %v57 = vlaneseq
  %v58 = vshrl.u32 %v57, 7
  %v59 = vsub.s32 0, %v58
  %v60 = vrot.slane %v55, %v59
  %v61 = vlaneseq
  %v62 = vshrl.u32 %v61, 7
  %v63 = vsub.s32 1, %v62
  %v64 = vrot.slane %v55, %v63
  %v83 = vunpack.c.l.b16 %v39
  %v84 = vunpack.c.h.b16 %v39
  %v85 = vunpack.c.l.b16 %v40
  %v86 = vunpack.c.h.b16 %v40
  %v87 = vunpack.c.l.b16 %v41
  %v88 = vunpack.c.h.b16 %v41
  %v89 = vunpack.c.l.b16 %v42
  %v90 = vunpack.c.h.b16 %v42
  %v91 = vunpack.c.l.b16 %v43
  %v92 = vunpack.c.h.b16 %v43
  %v93 = vunpack.c.l.b16 %v44
  %v94 = vunpack.c.h.b16 %v44
  %v95 = vunpack.c.l.b16 %v45
  %v96 = vunpack.c.h.b16 %v45
  %v97 = vunpack.c.l.b16 %v46
  %v98 = vunpack.c.h.b16 %v46
  %v99 = vunpack.c.l.b16 %v47
  %v100 = vunpack.c.h.b16 %v47
  %v101 = vunpack.c.l.b16 %v48
  %v102 = vunpack.c.h.b16 %v48
  %v103 = vunpack.c.l.b16 %v49
  %v104 = vunpack.c.h.b16 %v49
  %v105 = vunpack.c.l.b16 %v50
  %v106 = vunpack.c.h.b16 %v50
  %v107 = vunpack.c.l.b16 %v51
  %v108 = vunpack.c.h.b16 %v51
  %v109 = vunpack.c.l.b16 %v52
  %v110 = vunpack.c.h.b16 %v52
  %v111 = vunpack.c.l.b16 %v53
  %v112 = vunpack.c.h.b16 %v53
  %v113 = vunpack.c.l.b16 %v54
  %v114 = vunpack.c.h.b16 %v54
  %v115 = vpack.c.b16 %v85, %v83
  %v116 = vpack.c.b16 %v86, %v84
  %v117 = vpack.c.b16 %v89, %v87
  %v118 = vpack.c.b16 %v90, %v88
  %v119 = vpack.c.b16 %v93, %v91
  %v120 = vpack.c.b16 %v94, %v92
  %v121 = vpack.c.b16 %v97, %v95
  %v122 = vpack.c.b16 %v98, %v96
  %v123 = vpack.c.b16 %v101, %v99
  %v124 = vpack.c.b16 %v102, %v100
  %v125 = vpack.c.b16 %v105, %v103
  %v126 = vpack.c.b16 %v106, %v104
  %v127 = vpack.c.b16 %v109, %v107
  %v128 = vpack.c.b16 %v110, %v108
  %v129 = vpack.c.b16 %v113, %v111
  %v130 = vpack.c.b16 %v114, %v112
  %147 = vmatprep.subr.bf16.mxu0 %v116
  %148 = vmatpush1.bf16.msra.mxu0 %v115
  %149 = vmatprep.subr.bf16.mxu0 %v118
  %150 = vmatpush1.bf16.msra.mxu0 %v117
  %151 = vmatprep.subr.bf16.mxu0 %v120
  %152 = vmatpush1.bf16.msra.mxu0 %v119
  %153 = vmatprep.subr.bf16.mxu0 %v122
  %154 = vmatpush1.bf16.msra.mxu0 %v121
  %155 = vmatprep.subr.bf16.mxu0 %v124
  %156 = vmatpush1.bf16.msra.mxu0 %v123
  %157 = vmatprep.subr.bf16.mxu0 %v126
  %158 = vmatpush1.bf16.msra.mxu0 %v125
  %159 = vmatprep.subr.bf16.mxu0 %v128
  %160 = vmatpush1.bf16.msra.mxu0 %v127
  %161 = vmatprep.subr.bf16.mxu0 %v130
  %162 = vmatpush1.bf16.msra.mxu0 %v129
  %163 = vmatprep.subr.bf16.mxu0 0
  %164 = vmatpush1.bf16.msra.mxu0 0
  %165 = vmatprep.subr.bf16.mxu0 0
  %166 = vmatpush1.bf16.msra.mxu0 0
  %167 = vmatprep.subr.bf16.mxu0 0
  %168 = vmatpush1.bf16.msra.mxu0 0
  %169 = vmatprep.subr.bf16.mxu0 0
  %170 = vmatpush1.bf16.msra.mxu0 0
  %171 = vmatprep.subr.bf16.mxu0 0
  %172 = vmatpush1.bf16.msra.mxu0 0
  %173 = vmatprep.subr.bf16.mxu0 0
  %174 = vmatpush1.bf16.msra.mxu0 0
  %175 = vmatprep.subr.bf16.mxu0 0
  %176 = vmatpush1.bf16.msra.mxu0 0
  %177 = vmatprep.subr.bf16.mxu0 0
  %178 = vmatpush1.bf16.msra.mxu0 0
  %179 = vmatprep.mubr.bf16.mxu0 0
  %180 = vmatmul.mubr.bf16.gmra.mrb[0].mxu0 %v35
  %v181 = vpop.f32.mrb[0].mxu0
  %v182 = vadd.f32 %v60, %v181
  %v183 = vpop.f32.mrb[0].mxu0
  %v184 = vadd.f32 %v64, %v183
  %v185 = vpop.f32.mrb[0].mxu0
  %v186 = vadd.f32 %v60, %v185
  %v187 = vpop.f32.mrb[0].mxu0
  %v188 = vadd.f32 %v64, %v187
  %189 = vmatprep.mubr.bf16.mxu0 0
  %190 = vmatmul.mubr.bf16.gmra.mrb[0].mxu0 %v36
  %v191 = vpop.f32.mrb[0].mxu0
  %v192 = vadd.f32 %v60, %v191
  %v193 = vpop.f32.mrb[0].mxu0
  %v194 = vadd.f32 %v64, %v193
  %v195 = vpop.f32.mrb[0].mxu0
  %v196 = vadd.f32 %v60, %v195
  %v197 = vpop.f32.mrb[0].mxu0
  %v198 = vadd.f32 %v64, %v197
  %199 = vmatprep.mubr.bf16.mxu0 0
  %200 = vmatmul.mubr.bf16.gmra.mrb[0].mxu0 %v37
  %v201 = vpop.f32.mrb[0].mxu0
  %v202 = vadd.f32 %v60, %v201
  %v203 = vpop.f32.mrb[0].mxu0
  %v204 = vadd.f32 %v64, %v203
  %v205 = vpop.f32.mrb[0].mxu0
  %v206 = vadd.f32 %v60, %v205
  %v207 = vpop.f32.mrb[0].mxu0
  %v208 = vadd.f32 %v64, %v207
  %209 = vmatprep.mubr.bf16.mxu0 0
  %210 = vmatmul.mubr.bf16.gmra.mrb[0].mxu0 %v38
  %v211 = vpop.f32.mrb[0].mxu0
  %v212 = vadd.f32 %v60, %v211
  %v213 = vpop.f32.mrb[0].mxu0
  %v214 = vadd.f32 %v64, %v213
  %v215 = vpop.f32.mrb[0].mxu0
  %v216 = vadd.f32 %v60, %v215
  %v217 = vpop.f32.mrb[0].mxu0
  %v218 = vadd.f32 %v64, %v217
  %219 = vdwg.mxu0
  %v220 = vxor.u32 %v182, 2147483648
  %v221 = vxor.u32 %v184, 2147483648
  %v222 = vxor.u32 %v186, 2147483648
  %v223 = vxor.u32 %v188, 2147483648
  %v224 = vxor.u32 %v192, 2147483648
  %v225 = vxor.u32 %v194, 2147483648
  %v226 = vxor.u32 %v196, 2147483648
  %v227 = vxor.u32 %v198, 2147483648
  %v228 = vxor.u32 %v202, 2147483648
  %v229 = vxor.u32 %v204, 2147483648
  %v230 = vxor.u32 %v206, 2147483648
  %v231 = vxor.u32 %v208, 2147483648
  %v232 = vxor.u32 %v212, 2147483648
  %v233 = vxor.u32 %v214, 2147483648
  %v234 = vxor.u32 %v216, 2147483648
  %v235 = vxor.u32 %v218, 2147483648
  %v236 = vmul.f32 %v220, 1.442695
  %v237 = vpow.pop %v236
  %v238 = vmul.f32 %v221, 1.442695
  %v239 = vpow.pop %v238
  %v240 = vmul.f32 %v222, 1.442695
  %v241 = vpow.pop %v240
  %v242 = vmul.f32 %v223, 1.442695
  %v243 = vpow.pop %v242
  %v244 = vmul.f32 %v224, 1.442695
  %v245 = vpow.pop %v244
  %v246 = vmul.f32 %v225, 1.442695
  %v247 = vpow.pop %v246
  %v248 = vmul.f32 %v226, 1.442695
  %v249 = vpow.pop %v248
  %v250 = vmul.f32 %v227, 1.442695
  %v251 = vpow.pop %v250
  %v252 = vmul.f32 %v228, 1.442695
  %v253 = vpow.pop %v252
  %v254 = vmul.f32 %v229, 1.442695
  %v255 = vpow.pop %v254
  %v256 = vmul.f32 %v230, 1.442695
  %v257 = vpow.pop %v256
  %v258 = vmul.f32 %v231, 1.442695
  %v259 = vpow.pop %v258
  %v260 = vmul.f32 %v232, 1.442695
  %v261 = vpow.pop %v260
  %v262 = vmul.f32 %v233, 1.442695
  %v263 = vpow.pop %v262
  %v264 = vmul.f32 %v234, 1.442695
  %v265 = vpow.pop %v264
  %v266 = vmul.f32 %v235, 1.442695
  %v267 = vpow.pop %v266
  %v268 = vadd.f32 %v237, 1.0
  %v269 = vadd.f32 %v239, 1.0
  %v270 = vadd.f32 %v241, 1.0
  %v271 = vadd.f32 %v243, 1.0
  %v272 = vadd.f32 %v245, 1.0
  %v273 = vadd.f32 %v247, 1.0
  %v274 = vadd.f32 %v249, 1.0
  %v275 = vadd.f32 %v251, 1.0
  %v276 = vadd.f32 %v253, 1.0
  %v277 = vadd.f32 %v255, 1.0
  %v278 = vadd.f32 %v257, 1.0
  %v279 = vadd.f32 %v259, 1.0
  %v280 = vadd.f32 %v261, 1.0
  %v281 = vadd.f32 %v263, 1.0
  %v282 = vadd.f32 %v265, 1.0
  %v283 = vadd.f32 %v267, 1.0
  %v284 = vrcp.pop %v268
  %v285 = vmul.f32 1.0, %v284
  %v286 = vrcp.pop %v269
  %v287 = vmul.f32 1.0, %v286
  %v288 = vrcp.pop %v270
  %v289 = vmul.f32 1.0, %v288
  %v290 = vrcp.pop %v271
  %v291 = vmul.f32 1.0, %v290
  %v292 = vrcp.pop %v272
  %v293 = vmul.f32 1.0, %v292
  %v294 = vrcp.pop %v273
  %v295 = vmul.f32 1.0, %v294
  %v296 = vrcp.pop %v274
  %v297 = vmul.f32 1.0, %v296
  %v298 = vrcp.pop %v275
  %v299 = vmul.f32 1.0, %v298
  %v300 = vrcp.pop %v276
  %v301 = vmul.f32 1.0, %v300
  %v302 = vrcp.pop %v277
  %v303 = vmul.f32 1.0, %v302
  %v304 = vrcp.pop %v278
  %v305 = vmul.f32 1.0, %v304
  %v306 = vrcp.pop %v279
  %v307 = vmul.f32 1.0, %v306
  %v308 = vrcp.pop %v280
  %v309 = vmul.f32 1.0, %v308
  %v310 = vrcp.pop %v281
  %v311 = vmul.f32 1.0, %v310
  %v312 = vrcp.pop %v282
  %v313 = vmul.f32 1.0, %v312
  %v314 = vrcp.pop %v283
  %v315 = vmul.f32 1.0, %v314
  %v316 = vld [vmem:[%s1] sm:$0xff]
  %v317 = vld [vmem:[%s1 + $0x8] sm:$0xff]
  %v318 = vld [vmem:[%s1 + $0x10] sm:$0xff]
  %v319 = vld [vmem:[%s1 + $0x18] sm:$0xff]
  %v320 = vld [vmem:[%s1 + $0x20] sm:$0xff]
  %v321 = vld [vmem:[%s1 + $0x28] sm:$0xff]
  %v322 = vld [vmem:[%s1 + $0x30] sm:$0xff]
  %v323 = vld [vmem:[%s1 + $0x38] sm:$0xff]
  %v324 = vld [vmem:[%s1 + $0x40] sm:$0xff]
  %v325 = vld [vmem:[%s1 + $0x48] sm:$0xff]
  %v326 = vld [vmem:[%s1 + $0x50] sm:$0xff]
  %v327 = vld [vmem:[%s1 + $0x58] sm:$0xff]
  %v328 = vld [vmem:[%s1 + $0x60] sm:$0xff]
  %v329 = vld [vmem:[%s1 + $0x68] sm:$0xff]
  %v330 = vld [vmem:[%s1 + $0x70] sm:$0xff]
  %v331 = vld [vmem:[%s1 + $0x78] sm:$0xff]
  %v332 = vunpack.c.l.bf16 %v316
  %v333 = vunpack.c.h.bf16 %v316
  %v334 = vunpack.c.l.bf16 %v318
  %v335 = vunpack.c.h.bf16 %v318
  %v336 = vunpack.c.l.bf16 %v320
  %v337 = vunpack.c.h.bf16 %v320
  %v338 = vunpack.c.l.bf16 %v322
  %v339 = vunpack.c.h.bf16 %v322
  %v340 = vunpack.c.l.bf16 %v324
  %v341 = vunpack.c.h.bf16 %v324
  %v342 = vunpack.c.l.bf16 %v326
  %v343 = vunpack.c.h.bf16 %v326
  %v344 = vunpack.c.l.bf16 %v328
  %v345 = vunpack.c.h.bf16 %v328
  %v346 = vunpack.c.l.bf16 %v330
  %v347 = vunpack.c.h.bf16 %v330
  %v348 = vmul.f32 %v332, %v285
  %v349 = vmul.f32 %v333, %v287
  %v350 = vmul.f32 %v334, %v289
  %v351 = vmul.f32 %v335, %v291
  %v352 = vmul.f32 %v336, %v293
  %v353 = vmul.f32 %v337, %v295
  %v354 = vmul.f32 %v338, %v297
  %v355 = vmul.f32 %v339, %v299
  %v356 = vmul.f32 %v340, %v301
  %v357 = vmul.f32 %v341, %v303
  %v358 = vmul.f32 %v342, %v305
  %v359 = vmul.f32 %v343, %v307
  %v360 = vmul.f32 %v344, %v309
  %v361 = vmul.f32 %v345, %v311
  %v362 = vmul.f32 %v346, %v313
  %v363 = vmul.f32 %v347, %v315
  %v364 = vpack.c.bf16 %v350, %v348
  %v365 = vpack.c.bf16 %v351, %v349
  %v366 = vpack.c.bf16 %v354, %v352
  %v367 = vpack.c.bf16 %v355, %v353
  %v368 = vpack.c.bf16 %v358, %v356
  %v369 = vpack.c.bf16 %v359, %v357
  %v370 = vpack.c.bf16 %v362, %v360
  %v371 = vpack.c.bf16 %v363, %v361
  %v372 = vunpack.c.l.bf16 %v317
  %v373 = vunpack.c.h.bf16 %v317
  %v374 = vunpack.c.l.bf16 %v319
  %v375 = vunpack.c.h.bf16 %v319
  %v376 = vunpack.c.l.bf16 %v321
  %v377 = vunpack.c.h.bf16 %v321
  %v378 = vunpack.c.l.bf16 %v323
  %v379 = vunpack.c.h.bf16 %v323
  %v380 = vunpack.c.l.bf16 %v325
  %v381 = vunpack.c.h.bf16 %v325
  %v382 = vunpack.c.l.bf16 %v327
  %v383 = vunpack.c.h.bf16 %v327
  %v384 = vunpack.c.l.bf16 %v329
  %v385 = vunpack.c.h.bf16 %v329
  %v386 = vunpack.c.l.bf16 %v331
  %v387 = vunpack.c.h.bf16 %v331
  %v388 = vmul.f32 %v372, %v285
  %v389 = vmul.f32 %v373, %v287
  %v390 = vmul.f32 %v374, %v289
  %v391 = vmul.f32 %v375, %v291
  %v392 = vmul.f32 %v376, %v293
  %v393 = vmul.f32 %v377, %v295
  %v394 = vmul.f32 %v378, %v297
  %v395 = vmul.f32 %v379, %v299
  %v396 = vmul.f32 %v380, %v301
  %v397 = vmul.f32 %v381, %v303
  %v398 = vmul.f32 %v382, %v305
  %v399 = vmul.f32 %v383, %v307
  %v400 = vmul.f32 %v384, %v309
  %v401 = vmul.f32 %v385, %v311
  %v402 = vmul.f32 %v386, %v313
  %v403 = vmul.f32 %v387, %v315
  %v404 = vpack.c.bf16 %v390, %v388
  %v405 = vpack.c.bf16 %v391, %v389
  %v406 = vpack.c.bf16 %v394, %v392
  %v407 = vpack.c.bf16 %v395, %v393
  %v408 = vpack.c.bf16 %v398, %v396
  %v409 = vpack.c.bf16 %v399, %v397
  %v410 = vpack.c.bf16 %v402, %v400
  %v411 = vpack.c.bf16 %v403, %v401
  %v412 = vld [vmem:[%s4] sm:$0xff]
  %v413 = vld [vmem:[%s4 + $0x8] sm:$0xff]
  %v414 = vld [vmem:[%s4 + $0x10] sm:$0xff]
  %v415 = vld [vmem:[%s4 + $0x18] sm:$0xff]
  %v416 = vld [vmem:[%s4 + $0x20] sm:$0xff]
  %v417 = vld [vmem:[%s4 + $0x28] sm:$0xff]
  %v418 = vld [vmem:[%s4 + $0x30] sm:$0xff]
  %v419 = vld [vmem:[%s4 + $0x38] sm:$0xff]
  %v420 = vld [vmem:[%s4 + $0x40] sm:$0xff]
  %v421 = vld [vmem:[%s4 + $0x48] sm:$0xff]
  %v422 = vld [vmem:[%s4 + $0x50] sm:$0xff]
  %v423 = vld [vmem:[%s4 + $0x58] sm:$0xff]
  %v424 = vld [vmem:[%s4 + $0x60] sm:$0xff]
  %v425 = vld [vmem:[%s4 + $0x68] sm:$0xff]
  %v426 = vld [vmem:[%s4 + $0x70] sm:$0xff]
  %v427 = vld [vmem:[%s4 + $0x78] sm:$0xff]
  %v428 = vld [vmem:[%s4 + $0x80] sm:$0xff]
  %v429 = vld [vmem:[%s4 + $0x88] sm:$0xff]
  %v430 = vld [vmem:[%s4 + $0x90] sm:$0xff]
  %v431 = vld [vmem:[%s4 + $0x98] sm:$0xff]
  %v432 = vld [vmem:[%s4 + $0xa0] sm:$0xff]
  %v433 = vld [vmem:[%s4 + $0xa8] sm:$0xff]
  %v434 = vld [vmem:[%s4 + $0xb0] sm:$0xff]
  %v435 = vld [vmem:[%s4 + $0xb8] sm:$0xff]
  %v436 = vld [vmem:[%s4 + $0xc0] sm:$0xff]
  %v437 = vld [vmem:[%s4 + $0xc8] sm:$0xff]
  %v438 = vld [vmem:[%s4 + $0xd0] sm:$0xff]
  %v439 = vld [vmem:[%s4 + $0xd8] sm:$0xff]
  %v440 = vld [vmem:[%s4 + $0xe0] sm:$0xff]
  %v441 = vld [vmem:[%s4 + $0xe8] sm:$0xff]
  %v442 = vld [vmem:[%s4 + $0xf0] sm:$0xff]
  %v443 = vld [vmem:[%s4 + $0xf8] sm:$0xff]
  %v444 = vld [vmem:[%s4 + $0x100] sm:$0xff]
  %v445 = vld [vmem:[%s4 + $0x108] sm:$0xff]
  %v446 = vld [vmem:[%s4 + $0x110] sm:$0xff]
  %v447 = vld [vmem:[%s4 + $0x118] sm:$0xff]
  %v448 = vld [vmem:[%s4 + $0x120] sm:$0xff]
  %v449 = vld [vmem:[%s4 + $0x128] sm:$0xff]
  %v450 = vld [vmem:[%s4 + $0x130] sm:$0xff]
  %v451 = vld [vmem:[%s4 + $0x138] sm:$0xff]
  %v452 = vld [vmem:[%s4 + $0x140] sm:$0xff]
  %v453 = vld [vmem:[%s4 + $0x148] sm:$0xff]
  %v454 = vld [vmem:[%s4 + $0x150] sm:$0xff]
  %v455 = vld [vmem:[%s4 + $0x158] sm:$0xff]
  %v456 = vld [vmem:[%s4 + $0x160] sm:$0xff]
  %v457 = vld [vmem:[%s4 + $0x168] sm:$0xff]
  %v458 = vld [vmem:[%s4 + $0x170] sm:$0xff]
  %v459 = vld [vmem:[%s4 + $0x178] sm:$0xff]
  %v460 = vld [vmem:[%s4 + $0x180] sm:$0xff]
  %v461 = vld [vmem:[%s4 + $0x188] sm:$0xff]
  %v462 = vld [vmem:[%s4 + $0x190] sm:$0xff]
  %v463 = vld [vmem:[%s4 + $0x198] sm:$0xff]
  %v464 = vld [vmem:[%s4 + $0x1a0] sm:$0xff]
  %v465 = vld [vmem:[%s4 + $0x1a8] sm:$0xff]
  %v466 = vld [vmem:[%s4 + $0x1b0] sm:$0xff]
  %v467 = vld [vmem:[%s4 + $0x1b8] sm:$0xff]
  %v468 = vld [vmem:[%s4 + $0x1c0] sm:$0xff]
  %v469 = vld [vmem:[%s4 + $0x1c8] sm:$0xff]
  %v470 = vld [vmem:[%s4 + $0x1d0] sm:$0xff]
  %v471 = vld [vmem:[%s4 + $0x1d8] sm:$0xff]
  %v472 = vld [vmem:[%s4 + $0x1e0] sm:$0xff]
  %v473 = vld [vmem:[%s4 + $0x1e8] sm:$0xff]
  %v474 = vld [vmem:[%s4 + $0x1f0] sm:$0xff]
  %v475 = vld [vmem:[%s4 + $0x1f8] sm:$0xff]
  %v476 = vld [vmem:[%s5] sm:$0xff]
  %v477 = vld [vmem:[%s5 + $0x8] sm:$0xff]
  %v478 = vld [vmem:[%s5 + $0x10] sm:$0xff]
  %v479 = vld [vmem:[%s5 + $0x18] sm:$0xff]
  %v480 = vld [vmem:[%s5 + $0x20] sm:$0xff]
  %v481 = vld [vmem:[%s5 + $0x28] sm:$0xff]
  %v482 = vld [vmem:[%s5 + $0x30] sm:$0xff]
  %v483 = vld [vmem:[%s5 + $0x38] sm:$0xff]
  %v484 = vld [vmem:[%s5 + $0x40] sm:$0xff]
  %v485 = vld [vmem:[%s5 + $0x48] sm:$0xff]
  %v486 = vld [vmem:[%s5 + $0x50] sm:$0xff]
  %v487 = vld [vmem:[%s5 + $0x58] sm:$0xff]
  %v488 = vld [vmem:[%s5 + $0x60] sm:$0xff]
  %v489 = vld [vmem:[%s5 + $0x68] sm:$0xff]
  %v490 = vld [vmem:[%s5 + $0x70] sm:$0xff]
  %v491 = vld [vmem:[%s5 + $0x78] sm:$0xff]
  %v492 = vld [vmem:[%s5 + $0x80] sm:$0xff]
  %v493 = vld [vmem:[%s5 + $0x88] sm:$0xff]
  %v494 = vld [vmem:[%s5 + $0x90] sm:$0xff]
  %v495 = vld [vmem:[%s5 + $0x98] sm:$0xff]
  %v496 = vld [vmem:[%s5 + $0xa0] sm:$0xff]
  %v497 = vld [vmem:[%s5 + $0xa8] sm:$0xff]
  %v498 = vld [vmem:[%s5 + $0xb0] sm:$0xff]
  %v499 = vld [vmem:[%s5 + $0xb8] sm:$0xff]
  %v500 = vld [vmem:[%s5 + $0xc0] sm:$0xff]
  %v501 = vld [vmem:[%s5 + $0xc8] sm:$0xff]
  %v502 = vld [vmem:[%s5 + $0xd0] sm:$0xff]
  %v503 = vld [vmem:[%s5 + $0xd8] sm:$0xff]
  %v504 = vld [vmem:[%s5 + $0xe0] sm:$0xff]
  %v505 = vld [vmem:[%s5 + $0xe8] sm:$0xff]
  %v506 = vld [vmem:[%s5 + $0xf0] sm:$0xff]
  %v507 = vld [vmem:[%s5 + $0xf8] sm:$0xff]
  %v508 = vld [vmem:[%s5 + $0x100] sm:$0xff]
  %v509 = vld [vmem:[%s5 + $0x108] sm:$0xff]
  %v510 = vld [vmem:[%s5 + $0x110] sm:$0xff]
  %v511 = vld [vmem:[%s5 + $0x118] sm:$0xff]
  %v512 = vld [vmem:[%s5 + $0x120] sm:$0xff]
  %v513 = vld [vmem:[%s5 + $0x128] sm:$0xff]
  %v514 = vld [vmem:[%s5 + $0x130] sm:$0xff]
  %v515 = vld [vmem:[%s5 + $0x138] sm:$0xff]
  %v516 = vld [vmem:[%s5 + $0x140] sm:$0xff]
  %v517 = vld [vmem:[%s5 + $0x148] sm:$0xff]
  %v518 = vld [vmem:[%s5 + $0x150] sm:$0xff]
  %v519 = vld [vmem:[%s5 + $0x158] sm:$0xff]
  %v520 = vld [vmem:[%s5 + $0x160] sm:$0xff]
  %v521 = vld [vmem:[%s5 + $0x168] sm:$0xff]
  %v522 = vld [vmem:[%s5 + $0x170] sm:$0xff]
  %v523 = vld [vmem:[%s5 + $0x178] sm:$0xff]
  %v524 = vld [vmem:[%s5 + $0x180] sm:$0xff]
  %v525 = vld [vmem:[%s5 + $0x188] sm:$0xff]
  %v526 = vld [vmem:[%s5 + $0x190] sm:$0xff]
  %v527 = vld [vmem:[%s5 + $0x198] sm:$0xff]
  %v528 = vld [vmem:[%s5 + $0x1a0] sm:$0xff]
  %v529 = vld [vmem:[%s5 + $0x1a8] sm:$0xff]
  %v530 = vld [vmem:[%s5 + $0x1b0] sm:$0xff]
  %v531 = vld [vmem:[%s5 + $0x1b8] sm:$0xff]
  %v532 = vld [vmem:[%s5 + $0x1c0] sm:$0xff]
  %v533 = vld [vmem:[%s5 + $0x1c8] sm:$0xff]
  %v534 = vld [vmem:[%s5 + $0x1d0] sm:$0xff]
  %v535 = vld [vmem:[%s5 + $0x1d8] sm:$0xff]
  %v536 = vld [vmem:[%s5 + $0x1e0] sm:$0xff]
  %v537 = vld [vmem:[%s5 + $0x1e8] sm:$0xff]
  %v538 = vld [vmem:[%s5 + $0x1f0] sm:$0xff]
  %v539 = vld [vmem:[%s5 + $0x1f8] sm:$0xff]
  %v604 = vunpack.c.l.b16 %v476
  %v605 = vunpack.c.h.b16 %v476
  %v606 = vunpack.c.l.b16 %v477
  %v607 = vunpack.c.h.b16 %v477
  %v608 = vunpack.c.l.b16 %v478
  %v609 = vunpack.c.h.b16 %v478
  %v610 = vunpack.c.l.b16 %v479
  %v611 = vunpack.c.h.b16 %v479
  %v612 = vunpack.c.l.b16 %v480
  %v613 = vunpack.c.h.b16 %v480
  %v614 = vunpack.c.l.b16 %v481
  %v615 = vunpack.c.h.b16 %v481
  %v616 = vunpack.c.l.b16 %v482
  %v617 = vunpack.c.h.b16 %v482
  %v618 = vunpack.c.l.b16 %v483
  %v619 = vunpack.c.h.b16 %v483
  %v620 = vunpack.c.l.b16 %v484
  %v621 = vunpack.c.h.b16 %v484
  %v622 = vunpack.c.l.b16 %v485
  %v623 = vunpack.c.h.b16 %v485
  %v624 = vunpack.c.l.b16 %v486
  %v625 = vunpack.c.h.b16 %v486
  %v626 = vunpack.c.l.b16 %v487
  %v627 = vunpack.c.h.b16 %v487
  %v628 = vunpack.c.l.b16 %v488
  %v629 = vunpack.c.h.b16 %v488
  %v630 = vunpack.c.l.b16 %v489
  %v631 = vunpack.c.h.b16 %v489
  %v632 = vunpack.c.l.b16 %v490
  %v633 = vunpack.c.h.b16 %v490
  %v634 = vunpack.c.l.b16 %v491
  %v635 = vunpack.c.h.b16 %v491
  %v636 = vunpack.c.l.b16 %v492
  %v637 = vunpack.c.h.b16 %v492
  %v638 = vunpack.c.l.b16 %v493
  %v639 = vunpack.c.h.b16 %v493
  %v640 = vunpack.c.l.b16 %v494
  %v641 = vunpack.c.h.b16 %v494
  %v642 = vunpack.c.l.b16 %v495
  %v643 = vunpack.c.h.b16 %v495
  %v644 = vunpack.c.l.b16 %v496
  %v645 = vunpack.c.h.b16 %v496
  %v646 = vunpack.c.l.b16 %v497
  %v647 = vunpack.c.h.b16 %v497
  %v648 = vunpack.c.l.b16 %v498
  %v649 = vunpack.c.h.b16 %v498
  %v650 = vunpack.c.l.b16 %v499
  %v651 = vunpack.c.h.b16 %v499
  %v652 = vunpack.c.l.b16 %v500
  %v653 = vunpack.c.h.b16 %v500
  %v654 = vunpack.c.l.b16 %v501
  %v655 = vunpack.c.h.b16 %v501
  %v656 = vunpack.c.l.b16 %v502
  %v657 = vunpack.c.h.b16 %v502
  %v658 = vunpack.c.l.b16 %v503
  %v659 = vunpack.c.h.b16 %v503
  %v660 = vunpack.c.l.b16 %v504
  %v661 = vunpack.c.h.b16 %v504
  %v662 = vunpack.c.l.b16 %v505
  %v663 = vunpack.c.h.b16 %v505
  %v664 = vunpack.c.l.b16 %v506
  %v665 = vunpack.c.h.b16 %v506
  %v666 = vunpack.c.l.b16 %v507
  %v667 = vunpack.c.h.b16 %v507
  %v668 = vunpack.c.l.b16 %v508
  %v669 = vunpack.c.h.b16 %v508
  %v670 = vunpack.c.l.b16 %v509
  %v671 = vunpack.c.h.b16 %v509
  %v672 = vunpack.c.l.b16 %v510
  %v673 = vunpack.c.h.b16 %v510
  %v674 = vunpack.c.l.b16 %v511
  %v675 = vunpack.c.h.b16 %v511
  %v676 = vunpack.c.l.b16 %v512
  %v677 = vunpack.c.h.b16 %v512
  %v678 = vunpack.c.l.b16 %v513
  %v679 = vunpack.c.h.b16 %v513
  %v680 = vunpack.c.l.b16 %v514
  %v681 = vunpack.c.h.b16 %v514
  %v682 = vunpack.c.l.b16 %v515
  %v683 = vunpack.c.h.b16 %v515
  %v684 = vunpack.c.l.b16 %v516
  %v685 = vunpack.c.h.b16 %v516
  %v686 = vunpack.c.l.b16 %v517
  %v687 = vunpack.c.h.b16 %v517
  %v688 = vunpack.c.l.b16 %v518
  %v689 = vunpack.c.h.b16 %v518
  %v690 = vunpack.c.l.b16 %v519
  %v691 = vunpack.c.h.b16 %v519
  %v692 = vunpack.c.l.b16 %v520
  %v693 = vunpack.c.h.b16 %v520
  %v694 = vunpack.c.l.b16 %v521
  %v695 = vunpack.c.h.b16 %v521
  %v696 = vunpack.c.l.b16 %v522
  %v697 = vunpack.c.h.b16 %v522
  %v698 = vunpack.c.l.b16 %v523
  %v699 = vunpack.c.h.b16 %v523
  %v700 = vunpack.c.l.b16 %v524
  %v701 = vunpack.c.h.b16 %v524
  %v702 = vunpack.c.l.b16 %v525
  %v703 = vunpack.c.h.b16 %v525
  %v704 = vunpack.c.l.b16 %v526
  %v705 = vunpack.c.h.b16 %v526
  %v706 = vunpack.c.l.b16 %v527
  %v707 = vunpack.c.h.b16 %v527
  %v708 = vunpack.c.l.b16 %v528
  %v709 = vunpack.c.h.b16 %v528
  %v710 = vunpack.c.l.b16 %v529
  %v711 = vunpack.c.h.b16 %v529
  %v712 = vunpack.c.l.b16 %v530
  %v713 = vunpack.c.h.b16 %v530
  %v714 = vunpack.c.l.b16 %v531
  %v715 = vunpack.c.h.b16 %v531
  %v716 = vunpack.c.l.b16 %v532
  %v717 = vunpack.c.h.b16 %v532
  %v718 = vunpack.c.l.b16 %v533
  %v719 = vunpack.c.h.b16 %v533
  %v720 = vunpack.c.l.b16 %v534
  %v721 = vunpack.c.h.b16 %v534
  %v722 = vunpack.c.l.b16 %v535
  %v723 = vunpack.c.h.b16 %v535
  %v724 = vunpack.c.l.b16 %v536
  %v725 = vunpack.c.h.b16 %v536
  %v726 = vunpack.c.l.b16 %v537
  %v727 = vunpack.c.h.b16 %v537
  %v728 = vunpack.c.l.b16 %v538
  %v729 = vunpack.c.h.b16 %v538
  %v730 = vunpack.c.l.b16 %v539
  %v731 = vunpack.c.h.b16 %v539
  %v732 = vpack.c.b16 %v608, %v604
  %v733 = vpack.c.b16 %v609, %v605
  %v734 = vpack.c.b16 %v610, %v606
  %v735 = vpack.c.b16 %v611, %v607
  %v736 = vpack.c.b16 %v616, %v612
  %v737 = vpack.c.b16 %v617, %v613
  %v738 = vpack.c.b16 %v618, %v614
  %v739 = vpack.c.b16 %v619, %v615
  %v740 = vpack.c.b16 %v624, %v620
  %v741 = vpack.c.b16 %v625, %v621
  %v742 = vpack.c.b16 %v626, %v622
  %v743 = vpack.c.b16 %v627, %v623
  %v744 = vpack.c.b16 %v632, %v628
  %v745 = vpack.c.b16 %v633, %v629
  %v746 = vpack.c.b16 %v634, %v630
  %v747 = vpack.c.b16 %v635, %v631
  %v748 = vpack.c.b16 %v640, %v636
  %v749 = vpack.c.b16 %v641, %v637
  %v750 = vpack.c.b16 %v642, %v638
  %v751 = vpack.c.b16 %v643, %v639
  %v752 = vpack.c.b16 %v648, %v644
  %v753 = vpack.c.b16 %v649, %v645
  %v754 = vpack.c.b16 %v650, %v646
  %v755 = vpack.c.b16 %v651, %v647
  %v756 = vpack.c.b16 %v656, %v652
  %v757 = vpack.c.b16 %v657, %v653
  %v758 = vpack.c.b16 %v658, %v654
  %v759 = vpack.c.b16 %v659, %v655
  %v760 = vpack.c.b16 %v664, %v660
  %v761 = vpack.c.b16 %v665, %v661
  %v762 = vpack.c.b16 %v666, %v662
  %v763 = vpack.c.b16 %v667, %v663
  %v764 = vpack.c.b16 %v672, %v668
  %v765 = vpack.c.b16 %v673, %v669
  %v766 = vpack.c.b16 %v674, %v670
  %v767 = vpack.c.b16 %v675, %v671
  %v768 = vpack.c.b16 %v680, %v676
  %v769 = vpack.c.b16 %v681, %v677
  %v770 = vpack.c.b16 %v682, %v678
  %v771 = vpack.c.b16 %v683, %v679
  %v772 = vpack.c.b16 %v688, %v684
  %v773 = vpack.c.b16 %v689, %v685
  %v774 = vpack.c.b16 %v690, %v686
  %v775 = vpack.c.b16 %v691, %v687
  %v776 = vpack.c.b16 %v696, %v692
  %v777 = vpack.c.b16 %v697, %v693
  %v778 = vpack.c.b16 %v698, %v694
  %v779 = vpack.c.b16 %v699, %v695
  %v780 = vpack.c.b16 %v704, %v700
  %v781 = vpack.c.b16 %v705, %v701
  %v782 = vpack.c.b16 %v706, %v702
  %v783 = vpack.c.b16 %v707, %v703
  %v784 = vpack.c.b16 %v712, %v708
  %v785 = vpack.c.b16 %v713, %v709
  %v786 = vpack.c.b16 %v714, %v710
  %v787 = vpack.c.b16 %v715, %v711
  %v788 = vpack.c.b16 %v720, %v716
  %v789 = vpack.c.b16 %v721, %v717
  %v790 = vpack.c.b16 %v722, %v718
  %v791 = vpack.c.b16 %v723, %v719
  %v792 = vpack.c.b16 %v728, %v724
  %v793 = vpack.c.b16 %v729, %v725
  %v794 = vpack.c.b16 %v730, %v726
  %v795 = vpack.c.b16 %v731, %v727
  %860 = vmatprep.subr.bf16.mxu0 %v733
  %861 = vmatpush1.bf16.msra.mxu0 %v732
  %862 = vmatprep.subr.bf16.mxu0 %v737
  %863 = vmatpush1.bf16.msra.mxu0 %v736
  %864 = vmatprep.subr.bf16.mxu0 %v741
  %865 = vmatpush1.bf16.msra.mxu0 %v740
  %866 = vmatprep.subr.bf16.mxu0 %v745
  %867 = vmatpush1.bf16.msra.mxu0 %v744
  %868 = vmatprep.subr.bf16.mxu0 %v749
  %869 = vmatpush1.bf16.msra.mxu0 %v748
  %870 = vmatprep.subr.bf16.mxu0 %v753
  %871 = vmatpush1.bf16.msra.mxu0 %v752
  %872 = vmatprep.subr.bf16.mxu0 %v757
  %873 = vmatpush1.bf16.msra.mxu0 %v756
  %874 = vmatprep.subr.bf16.mxu0 %v761
  %875 = vmatpush1.bf16.msra.mxu0 %v760
  %876 = vmatprep.subr.bf16.mxu0 %v765
  %877 = vmatpush1.bf16.msra.mxu0 %v764
  %878 = vmatprep.subr.bf16.mxu0 %v769
  %879 = vmatpush1.bf16.msra.mxu0 %v768
  %880 = vmatprep.subr.bf16.mxu0 %v773
  %881 = vmatpush1.bf16.msra.mxu0 %v772
  %882 = vmatprep.subr.bf16.mxu0 %v777
  %883 = vmatpush1.bf16.msra.mxu0 %v776
  %884 = vmatprep.subr.bf16.mxu0 %v781
  %885 = vmatpush1.bf16.msra.mxu0 %v780
  %886 = vmatprep.subr.bf16.mxu0 %v785
  %887 = vmatpush1.bf16.msra.mxu0 %v784
  %888 = vmatprep.subr.bf16.mxu0 %v789
  %889 = vmatpush1.bf16.msra.mxu0 %v788
  %890 = vmatprep.subr.bf16.mxu0 %v793
  %891 = vmatpush1.bf16.msra.mxu0 %v792
  %892 = vmatprep.mubr.bf16.mxu0 %v405
  %893 = vmatmul.mubr.bf16.gmra.mrb[0].mxu0 %v404
  %v894 = vpop.f32.mrb[0].mxu0
  %v895 = vadd.f32 0.0, %v894
  %v896 = vpop.f32.mrb[0].mxu0
  %v897 = vadd.f32 0.0, %v896
  %v898 = vpop.f32.mrb[0].mxu0
  %v899 = vadd.f32 0.0, %v898
  %v900 = vpop.f32.mrb[0].mxu0
  %v901 = vadd.f32 0.0, %v900
  %902 = vmatprep.mubr.bf16.mxu0 %v407
  %903 = vmatmul.mubr.bf16.gmra.mrb[0].mxu0 %v406
  %v904 = vpop.f32.mrb[0].mxu0
  %v905 = vadd.f32 0.0, %v904
  %v906 = vpop.f32.mrb[0].mxu0
  %v907 = vadd.f32 0.0, %v906
  %v908 = vpop.f32.mrb[0].mxu0
  %v909 = vadd.f32 0.0, %v908
  %v910 = vpop.f32.mrb[0].mxu0
  %v911 = vadd.f32 0.0, %v910
  %912 = vmatprep.mubr.bf16.mxu0 %v409
  %913 = vmatmul.mubr.bf16.gmra.mrb[0].mxu0 %v408
  %v914 = vpop.f32.mrb[0].mxu0
  %v915 = vadd.f32 0.0, %v914
  %v916 = vpop.f32.mrb[0].mxu0
  %v917 = vadd.f32 0.0, %v916
  %v918 = vpop.f32.mrb[0].mxu0
  %v919 = vadd.f32 0.0, %v918
  %v920 = vpop.f32.mrb[0].mxu0
  %v921 = vadd.f32 0.0, %v920
  %922 = vmatprep.mubr.bf16.mxu0 %v411
  %923 = vmatmul.mubr.bf16.gmra.mrb[0].mxu0 %v410
  %v924 = vpop.f32.mrb[0].mxu0
  %v925 = vadd.f32 0.0, %v924
  %v926 = vpop.f32.mrb[0].mxu0
  %v927 = vadd.f32 0.0, %v926
  %v928 = vpop.f32.mrb[0].mxu0
  %v929 = vadd.f32 0.0, %v928
  %v930 = vpop.f32.mrb[0].mxu0
  %v931 = vadd.f32 0.0, %v930
  %932 = vdwg.mxu0
  %933 = vmatprep.subr.bf16.mxu0 %v735
  %934 = vmatpush1.bf16.msra.mxu0 %v734
  %935 = vmatprep.subr.bf16.mxu0 %v739
  %936 = vmatpush1.bf16.msra.mxu0 %v738
  %937 = vmatprep.subr.bf16.mxu0 %v743
  %938 = vmatpush1.bf16.msra.mxu0 %v742
  %939 = vmatprep.subr.bf16.mxu0 %v747
  %940 = vmatpush1.bf16.msra.mxu0 %v746
  %941 = vmatprep.subr.bf16.mxu0 %v751
  %942 = vmatpush1.bf16.msra.mxu0 %v750
  %943 = vmatprep.subr.bf16.mxu0 %v755
  %944 = vmatpush1.bf16.msra.mxu0 %v754
  %945 = vmatprep.subr.bf16.mxu0 %v759
  %946 = vmatpush1.bf16.msra.mxu0 %v758
  %947 = vmatprep.subr.bf16.mxu0 %v763
  %948 = vmatpush1.bf16.msra.mxu0 %v762
  %949 = vmatprep.subr.bf16.mxu0 %v767
  %950 = vmatpush1.bf16.msra.mxu0 %v766
  %951 = vmatprep.subr.bf16.mxu0 %v771
  %952 = vmatpush1.bf16.msra.mxu0 %v770
  %953 = vmatprep.subr.bf16.mxu0 %v775
  %954 = vmatpush1.bf16.msra.mxu0 %v774
  %955 = vmatprep.subr.bf16.mxu0 %v779
  %956 = vmatpush1.bf16.msra.mxu0 %v778
  %957 = vmatprep.subr.bf16.mxu0 %v783
  %958 = vmatpush1.bf16.msra.mxu0 %v782
  %959 = vmatprep.subr.bf16.mxu0 %v787
  %960 = vmatpush1.bf16.msra.mxu0 %v786
  %961 = vmatprep.subr.bf16.mxu0 %v791
  %962 = vmatpush1.bf16.msra.mxu0 %v790
  %963 = vmatprep.subr.bf16.mxu0 %v795
  %964 = vmatpush1.bf16.msra.mxu0 %v794
  %965 = vmatprep.mubr.bf16.mxu0 %v405
  %966 = vmatmul.mubr.bf16.gmra.mrb[0].mxu0 %v404
  %v967 = vpop.f32.mrb[0].mxu0
  %v968 = vadd.f32 0.0, %v967
  %v969 = vpop.f32.mrb[0].mxu0
  %v970 = vadd.f32 0.0, %v969
  %v971 = vpop.f32.mrb[0].mxu0
  %v972 = vadd.f32 0.0, %v971
  %v973 = vpop.f32.mrb[0].mxu0
  %v974 = vadd.f32 0.0, %v973
  %975 = vmatprep.mubr.bf16.mxu0 %v407
  %976 = vmatmul.mubr.bf16.gmra.mrb[0].mxu0 %v406
  %v977 = vpop.f32.mrb[0].mxu0
  %v978 = vadd.f32 0.0, %v977
  %v979 = vpop.f32.mrb[0].mxu0
  %v980 = vadd.f32 0.0, %v979
  %v981 = vpop.f32.mrb[0].mxu0
  %v982 = vadd.f32 0.0, %v981
  %v983 = vpop.f32.mrb[0].mxu0
  %v984 = vadd.f32 0.0, %v983
  %985 = vmatprep.mubr.bf16.mxu0 %v409
  %986 = vmatmul.mubr.bf16.gmra.mrb[0].mxu0 %v408
  %v987 = vpop.f32.mrb[0].mxu0
  %v988 = vadd.f32 0.0, %v987
  %v989 = vpop.f32.mrb[0].mxu0
  %v990 = vadd.f32 0.0, %v989
  %v991 = vpop.f32.mrb[0].mxu0
  %v992 = vadd.f32 0.0, %v991
  %v993 = vpop.f32.mrb[0].mxu0
  %v994 = vadd.f32 0.0, %v993
  %995 = vmatprep.mubr.bf16.mxu0 %v411
  %996 = vmatmul.mubr.bf16.gmra.mrb[0].mxu0 %v410
  %v997 = vpop.f32.mrb[0].mxu0
  %v998 = vadd.f32 0.0, %v997
  %v999 = vpop.f32.mrb[0].mxu0
  %v1000 = vadd.f32 0.0, %v999
  %v1001 = vpop.f32.mrb[0].mxu0
  %v1002 = vadd.f32 0.0, %v1001
  %v1003 = vpop.f32.mrb[0].mxu0
  %v1004 = vadd.f32 0.0, %v1003
  %1005 = vdwg.mxu0
  %v1070 = vunpack.c.l.b16 %v412
  %v1071 = vunpack.c.h.b16 %v412
  %v1072 = vunpack.c.l.b16 %v413
  %v1073 = vunpack.c.h.b16 %v413
  %v1074 = vunpack.c.l.b16 %v414
  %v1075 = vunpack.c.h.b16 %v414
  %v1076 = vunpack.c.l.b16 %v415
  %v1077 = vunpack.c.h.b16 %v415
  %v1078 = vunpack.c.l.b16 %v416
  %v1079 = vunpack.c.h.b16 %v416
  %v1080 = vunpack.c.l.b16 %v417
  %v1081 = vunpack.c.h.b16 %v417
  %v1082 = vunpack.c.l.b16 %v418
  %v1083 = vunpack.c.h.b16 %v418
  %v1084 = vunpack.c.l.b16 %v419
  %v1085 = vunpack.c.h.b16 %v419
  %v1086 = vunpack.c.l.b16 %v420
  %v1087 = vunpack.c.h.b16 %v420
  %v1088 = vunpack.c.l.b16 %v421
  %v1089 = vunpack.c.h.b16 %v421
  %v1090 = vunpack.c.l.b16 %v422
  %v1091 = vunpack.c.h.b16 %v422
  %v1092 = vunpack.c.l.b16 %v423
  %v1093 = vunpack.c.h.b16 %v423
  %v1094 = vunpack.c.l.b16 %v424
  %v1095 = vunpack.c.h.b16 %v424
  %v1096 = vunpack.c.l.b16 %v425
  %v1097 = vunpack.c.h.b16 %v425
  %v1098 = vunpack.c.l.b16 %v426
  %v1099 = vunpack.c.h.b16 %v426
  %v1100 = vunpack.c.l.b16 %v427
  %v1101 = vunpack.c.h.b16 %v427
  %v1102 = vunpack.c.l.b16 %v428
  %v1103 = vunpack.c.h.b16 %v428
  %v1104 = vunpack.c.l.b16 %v429
  %v1105 = vunpack.c.h.b16 %v429
  %v1106 = vunpack.c.l.b16 %v430
  %v1107 = vunpack.c.h.b16 %v430
  %v1108 = vunpack.c.l.b16 %v431
  %v1109 = vunpack.c.h.b16 %v431
  %v1110 = vunpack.c.l.b16 %v432
  %v1111 = vunpack.c.h.b16 %v432
  %v1112 = vunpack.c.l.b16 %v433
  %v1113 = vunpack.c.h.b16 %v433
  %v1114 = vunpack.c.l.b16 %v434
  %v1115 = vunpack.c.h.b16 %v434
  %v1116 = vunpack.c.l.b16 %v435
  %v1117 = vunpack.c.h.b16 %v435
  %v1118 = vunpack.c.l.b16 %v436
  %v1119 = vunpack.c.h.b16 %v436
  %v1120 = vunpack.c.l.b16 %v437
  %v1121 = vunpack.c.h.b16 %v437
  %v1122 = vunpack.c.l.b16 %v438
  %v1123 = vunpack.c.h.b16 %v438
  %v1124 = vunpack.c.l.b16 %v439
  %v1125 = vunpack.c.h.b16 %v439
  %v1126 = vunpack.c.l.b16 %v440
  %v1127 = vunpack.c.h.b16 %v440
  %v1128 = vunpack.c.l.b16 %v441
  %v1129 = vunpack.c.h.b16 %v441
  %v1130 = vunpack.c.l.b16 %v442
  %v1131 = vunpack.c.h.b16 %v442
  %v1132 = vunpack.c.l.b16 %v443
  %v1133 = vunpack.c.h.b16 %v443
  %v1134 = vunpack.c.l.b16 %v444
  %v1135 = vunpack.c.h.b16 %v444
  %v1136 = vunpack.c.l.b16 %v445
  %v1137 = vunpack.c.h.b16 %v445
  %v1138 = vunpack.c.l.b16 %v446
  %v1139 = vunpack.c.h.b16 %v446
  %v1140 = vunpack.c.l.b16 %v447
  %v1141 = vunpack.c.h.b16 %v447
  %v1142 = vunpack.c.l.b16 %v448
  %v1143 = vunpack.c.h.b16 %v448
  %v1144 = vunpack.c.l.b16 %v449
  %v1145 = vunpack.c.h.b16 %v449
  %v1146 = vunpack.c.l.b16 %v450
  %v1147 = vunpack.c.h.b16 %v450
  %v1148 = vunpack.c.l.b16 %v451
  %v1149 = vunpack.c.h.b16 %v451
  %v1150 = vunpack.c.l.b16 %v452
  %v1151 = vunpack.c.h.b16 %v452
  %v1152 = vunpack.c.l.b16 %v453
  %v1153 = vunpack.c.h.b16 %v453
  %v1154 = vunpack.c.l.b16 %v454
  %v1155 = vunpack.c.h.b16 %v454
  %v1156 = vunpack.c.l.b16 %v455
  %v1157 = vunpack.c.h.b16 %v455
  %v1158 = vunpack.c.l.b16 %v456
  %v1159 = vunpack.c.h.b16 %v456
  %v1160 = vunpack.c.l.b16 %v457
  %v1161 = vunpack.c.h.b16 %v457
  %v1162 = vunpack.c.l.b16 %v458
  %v1163 = vunpack.c.h.b16 %v458
  %v1164 = vunpack.c.l.b16 %v459
  %v1165 = vunpack.c.h.b16 %v459
  %v1166 = vunpack.c.l.b16 %v460
  %v1167 = vunpack.c.h.b16 %v460
  %v1168 = vunpack.c.l.b16 %v461
  %v1169 = vunpack.c.h.b16 %v461
  %v1170 = vunpack.c.l.b16 %v462
  %v1171 = vunpack.c.h.b16 %v462
  %v1172 = vunpack.c.l.b16 %v463
  %v1173 = vunpack.c.h.b16 %v463
  %v1174 = vunpack.c.l.b16 %v464
  %v1175 = vunpack.c.h.b16 %v464
  %v1176 = vunpack.c.l.b16 %v465
  %v1177 = vunpack.c.h.b16 %v465
  %v1178 = vunpack.c.l.b16 %v466
  %v1179 = vunpack.c.h.b16 %v466
  %v1180 = vunpack.c.l.b16 %v467
  %v1181 = vunpack.c.h.b16 %v467
  %v1182 = vunpack.c.l.b16 %v468
  %v1183 = vunpack.c.h.b16 %v468
  %v1184 = vunpack.c.l.b16 %v469
  %v1185 = vunpack.c.h.b16 %v469
  %v1186 = vunpack.c.l.b16 %v470
  %v1187 = vunpack.c.h.b16 %v470
  %v1188 = vunpack.c.l.b16 %v471
  %v1189 = vunpack.c.h.b16 %v471
  %v1190 = vunpack.c.l.b16 %v472
  %v1191 = vunpack.c.h.b16 %v472
  %v1192 = vunpack.c.l.b16 %v473
  %v1193 = vunpack.c.h.b16 %v473
  %v1194 = vunpack.c.l.b16 %v474
  %v1195 = vunpack.c.h.b16 %v474
  %v1196 = vunpack.c.l.b16 %v475
  %v1197 = vunpack.c.h.b16 %v475
  %v1198 = vpack.c.b16 %v1074, %v1070
  %v1199 = vpack.c.b16 %v1075, %v1071
  %v1200 = vpack.c.b16 %v1076, %v1072
  %v1201 = vpack.c.b16 %v1077, %v1073
  %v1202 = vpack.c.b16 %v1082, %v1078
  %v1203 = vpack.c.b16 %v1083, %v1079
  %v1204 = vpack.c.b16 %v1084, %v1080
  %v1205 = vpack.c.b16 %v1085, %v1081
  %v1206 = vpack.c.b16 %v1090, %v1086
  %v1207 = vpack.c.b16 %v1091, %v1087
  %v1208 = vpack.c.b16 %v1092, %v1088
  %v1209 = vpack.c.b16 %v1093, %v1089
  %v1210 = vpack.c.b16 %v1098, %v1094
  %v1211 = vpack.c.b16 %v1099, %v1095
  %v1212 = vpack.c.b16 %v1100, %v1096
  %v1213 = vpack.c.b16 %v1101, %v1097
  %v1214 = vpack.c.b16 %v1106, %v1102
  %v1215 = vpack.c.b16 %v1107, %v1103
  %v1216 = vpack.c.b16 %v1108, %v1104
  %v1217 = vpack.c.b16 %v1109, %v1105
  %v1218 = vpack.c.b16 %v1114, %v1110
  %v1219 = vpack.c.b16 %v1115, %v1111
  %v1220 = vpack.c.b16 %v1116, %v1112
  %v1221 = vpack.c.b16 %v1117, %v1113
  %v1222 = vpack.c.b16 %v1122, %v1118
  %v1223 = vpack.c.b16 %v1123, %v1119
  %v1224 = vpack.c.b16 %v1124, %v1120
  %v1225 = vpack.c.b16 %v1125, %v1121
  %v1226 = vpack.c.b16 %v1130, %v1126
  %v1227 = vpack.c.b16 %v1131, %v1127
  %v1228 = vpack.c.b16 %v1132, %v1128
  %v1229 = vpack.c.b16 %v1133, %v1129
  %v1230 = vpack.c.b16 %v1138, %v1134
  %v1231 = vpack.c.b16 %v1139, %v1135
  %v1232 = vpack.c.b16 %v1140, %v1136
  %v1233 = vpack.c.b16 %v1141, %v1137
  %v1234 = vpack.c.b16 %v1146, %v1142
  %v1235 = vpack.c.b16 %v1147, %v1143
  %v1236 = vpack.c.b16 %v1148, %v1144
  %v1237 = vpack.c.b16 %v1149, %v1145
  %v1238 = vpack.c.b16 %v1154, %v1150
  %v1239 = vpack.c.b16 %v1155, %v1151
  %v1240 = vpack.c.b16 %v1156, %v1152
  %v1241 = vpack.c.b16 %v1157, %v1153
  %v1242 = vpack.c.b16 %v1162, %v1158
  %v1243 = vpack.c.b16 %v1163, %v1159
  %v1244 = vpack.c.b16 %v1164, %v1160
  %v1245 = vpack.c.b16 %v1165, %v1161
  %v1246 = vpack.c.b16 %v1170, %v1166
  %v1247 = vpack.c.b16 %v1171, %v1167
  %v1248 = vpack.c.b16 %v1172, %v1168
  %v1249 = vpack.c.b16 %v1173, %v1169
  %v1250 = vpack.c.b16 %v1178, %v1174
  %v1251 = vpack.c.b16 %v1179, %v1175
  %v1252 = vpack.c.b16 %v1180, %v1176
  %v1253 = vpack.c.b16 %v1181, %v1177
  %v1254 = vpack.c.b16 %v1186, %v1182
  %v1255 = vpack.c.b16 %v1187, %v1183
  %v1256 = vpack.c.b16 %v1188, %v1184
  %v1257 = vpack.c.b16 %v1189, %v1185
  %v1258 = vpack.c.b16 %v1194, %v1190
  %v1259 = vpack.c.b16 %v1195, %v1191
  %v1260 = vpack.c.b16 %v1196, %v1192
  %v1261 = vpack.c.b16 %v1197, %v1193
  %1326 = vmatprep.subr.bf16.mxu0 %v1199
  %1327 = vmatpush1.bf16.msra.mxu0 %v1198
  %1328 = vmatprep.subr.bf16.mxu0 %v1203
  %1329 = vmatpush1.bf16.msra.mxu0 %v1202
  %1330 = vmatprep.subr.bf16.mxu0 %v1207
  %1331 = vmatpush1.bf16.msra.mxu0 %v1206
  %1332 = vmatprep.subr.bf16.mxu0 %v1211
  %1333 = vmatpush1.bf16.msra.mxu0 %v1210
  %1334 = vmatprep.subr.bf16.mxu0 %v1215
  %1335 = vmatpush1.bf16.msra.mxu0 %v1214
  %1336 = vmatprep.subr.bf16.mxu0 %v1219
  %1337 = vmatpush1.bf16.msra.mxu0 %v1218
  %1338 = vmatprep.subr.bf16.mxu0 %v1223
  %1339 = vmatpush1.bf16.msra.mxu0 %v1222
  %1340 = vmatprep.subr.bf16.mxu0 %v1227
  %1341 = vmatpush1.bf16.msra.mxu0 %v1226
  %1342 = vmatprep.subr.bf16.mxu0 %v1231
  %1343 = vmatpush1.bf16.msra.mxu0 %v1230
  %1344 = vmatprep.subr.bf16.mxu0 %v1235
  %1345 = vmatpush1.bf16.msra.mxu0 %v1234
  %1346 = vmatprep.subr.bf16.mxu0 %v1239
  %1347 = vmatpush1.bf16.msra.mxu0 %v1238
  %1348 = vmatprep.subr.bf16.mxu0 %v1243
  %1349 = vmatpush1.bf16.msra.mxu0 %v1242
  %1350 = vmatprep.subr.bf16.mxu0 %v1247
  %1351 = vmatpush1.bf16.msra.mxu0 %v1246
  %1352 = vmatprep.subr.bf16.mxu0 %v1251
  %1353 = vmatpush1.bf16.msra.mxu0 %v1250
  %1354 = vmatprep.subr.bf16.mxu0 %v1255
  %1355 = vmatpush1.bf16.msra.mxu0 %v1254
  %1356 = vmatprep.subr.bf16.mxu0 %v1259
  %1357 = vmatpush1.bf16.msra.mxu0 %v1258
  %1358 = vmatprep.mubr.bf16.mxu0 %v365
  %1359 = vmatmul.mubr.bf16.gmra.mrb[0].mxu0 %v364
  %v1360 = vpop.f32.mrb[0].mxu0
  %v1361 = vadd.f32 %v895, %v1360
  %v1362 = vpop.f32.mrb[0].mxu0
  %v1363 = vadd.f32 %v897, %v1362
  %v1364 = vpop.f32.mrb[0].mxu0
  %v1365 = vadd.f32 %v899, %v1364
  %v1366 = vpop.f32.mrb[0].mxu0
  %v1367 = vadd.f32 %v901, %v1366
  %1368 = vmatprep.mubr.bf16.mxu0 %v367
  %1369 = vmatmul.mubr.bf16.gmra.mrb[0].mxu0 %v366
  %v1370 = vpop.f32.mrb[0].mxu0
  %v1371 = vadd.f32 %v905, %v1370
  %v1372 = vpop.f32.mrb[0].mxu0
  %v1373 = vadd.f32 %v907, %v1372
  %v1374 = vpop.f32.mrb[0].mxu0
  %v1375 = vadd.f32 %v909, %v1374
  %v1376 = vpop.f32.mrb[0].mxu0
  %v1377 = vadd.f32 %v911, %v1376
  %1378 = vmatprep.mubr.bf16.mxu0 %v369
  %1379 = vmatmul.mubr.bf16.gmra.mrb[0].mxu0 %v368
  %v1380 = vpop.f32.mrb[0].mxu0
  %v1381 = vadd.f32 %v915, %v1380
  %v1382 = vpop.f32.mrb[0].mxu0
  %v1383 = vadd.f32 %v917, %v1382
  %v1384 = vpop.f32.mrb[0].mxu0
  %v1385 = vadd.f32 %v919, %v1384
  %v1386 = vpop.f32.mrb[0].mxu0
  %v1387 = vadd.f32 %v921, %v1386
  %1388 = vmatprep.mubr.bf16.mxu0 %v371
  %1389 = vmatmul.mubr.bf16.gmra.mrb[0].mxu0 %v370
  %v1390 = vpop.f32.mrb[0].mxu0
  %v1391 = vadd.f32 %v925, %v1390
  %v1392 = vpop.f32.mrb[0].mxu0
  %v1393 = vadd.f32 %v927, %v1392
  %v1394 = vpop.f32.mrb[0].mxu0
  %v1395 = vadd.f32 %v929, %v1394
  %v1396 = vpop.f32.mrb[0].mxu0
  %v1397 = vadd.f32 %v931, %v1396
  %1398 = vdwg.mxu0
  %1399 = vmatprep.subr.bf16.mxu0 %v1201
  %1400 = vmatpush1.bf16.msra.mxu0 %v1200
  %1401 = vmatprep.subr.bf16.mxu0 %v1205
  %1402 = vmatpush1.bf16.msra.mxu0 %v1204
  %1403 = vmatprep.subr.bf16.mxu0 %v1209
  %1404 = vmatpush1.bf16.msra.mxu0 %v1208
  %1405 = vmatprep.subr.bf16.mxu0 %v1213
  %1406 = vmatpush1.bf16.msra.mxu0 %v1212
  %1407 = vmatprep.subr.bf16.mxu0 %v1217
  %1408 = vmatpush1.bf16.msra.mxu0 %v1216
  %1409 = vmatprep.subr.bf16.mxu0 %v1221
  %1410 = vmatpush1.bf16.msra.mxu0 %v1220
  %1411 = vmatprep.subr.bf16.mxu0 %v1225
  %1412 = vmatpush1.bf16.msra.mxu0 %v1224
  %1413 = vmatprep.subr.bf16.mxu0 %v1229
  %1414 = vmatpush1.bf16.msra.mxu0 %v1228
  %1415 = vmatprep.subr.bf16.mxu0 %v1233
  %1416 = vmatpush1.bf16.msra.mxu0 %v1232
  %1417 = vmatprep.subr.bf16.mxu0 %v1237
  %1418 = vmatpush1.bf16.msra.mxu0 %v1236
  %1419 = vmatprep.subr.bf16.mxu0 %v1241
  %1420 = vmatpush1.bf16.msra.mxu0 %v1240
  %1421 = vmatprep.subr.bf16.mxu0 %v1245
  %1422 = vmatpush1.bf16.msra.mxu0 %v1244
  %1423 = vmatprep.subr.bf16.mxu0 %v1249
  %1424 = vmatpush1.bf16.msra.mxu0 %v1248
  %1425 = vmatprep.subr.bf16.mxu0 %v1253
  %1426 = vmatpush1.bf16.msra.mxu0 %v1252
  %1427 = vmatprep.subr.bf16.mxu0 %v1257
  %1428 = vmatpush1.bf16.msra.mxu0 %v1256
  %1429 = vmatprep.subr.bf16.mxu0 %v1261
  %1430 = vmatpush1.bf16.msra.mxu0 %v1260
  %1431 = vmatprep.mubr.bf16.mxu0 %v365
  %1432 = vmatmul.mubr.bf16.gmra.mrb[0].mxu0 %v364
  %v1433 = vpop.f32.mrb[0].mxu0
  %v1434 = vadd.f32 %v968, %v1433
  %v1435 = vpop.f32.mrb[0].mxu0
  %v1436 = vadd.f32 %v970, %v1435
  %v1437 = vpop.f32.mrb[0].mxu0
  %v1438 = vadd.f32 %v972, %v1437
  %v1439 = vpop.f32.mrb[0].mxu0
  %v1440 = vadd.f32 %v974, %v1439
  %1441 = vmatprep.mubr.bf16.mxu0 %v367
  %1442 = vmatmul.mubr.bf16.gmra.mrb[0].mxu0 %v366
  %v1443 = vpop.f32.mrb[0].mxu0
  %v1444 = vadd.f32 %v978, %v1443
  %v1445 = vpop.f32.mrb[0].mxu0
  %v1446 = vadd.f32 %v980, %v1445
  %v1447 = vpop.f32.mrb[0].mxu0
  %v1448 = vadd.f32 %v982, %v1447
  %v1449 = vpop.f32.mrb[0].mxu0
  %v1450 = vadd.f32 %v984, %v1449
  %1451 = vmatprep.mubr.bf16.mxu0 %v369
  %1452 = vmatmul.mubr.bf16.gmra.mrb[0].mxu0 %v368
  %v1453 = vpop.f32.mrb[0].mxu0
  %v1454 = vadd.f32 %v988, %v1453
  %v1455 = vpop.f32.mrb[0].mxu0
  %v1456 = vadd.f32 %v990, %v1455
  %v1457 = vpop.f32.mrb[0].mxu0
  %v1458 = vadd.f32 %v992, %v1457
  %v1459 = vpop.f32.mrb[0].mxu0
  %v1460 = vadd.f32 %v994, %v1459
  %1461 = vmatprep.mubr.bf16.mxu0 %v371
  %1462 = vmatmul.mubr.bf16.gmra.mrb[0].mxu0 %v370
  %v1463 = vpop.f32.mrb[0].mxu0
  %v1464 = vadd.f32 %v998, %v1463
  %v1465 = vpop.f32.mrb[0].mxu0
  %v1466 = vadd.f32 %v1000, %v1465
  %v1467 = vpop.f32.mrb[0].mxu0
  %v1468 = vadd.f32 %v1002, %v1467
  %v1469 = vpop.f32.mrb[0].mxu0
  %v1470 = vadd.f32 %v1004, %v1469
  %1471 = vdwg.mxu0
  %v1472 = vld [vmem:[%s6] sm:$0xf]
  %v1474 = vlaneseq
  %v1475 = vshrl.u32 %v1474, 7
  %v1476 = vsub.s32 0, %v1475
  %v1477 = vrot.slane %v1472, %v1476
  %v1478 = vlaneseq
  %v1479 = vshrl.u32 %v1478, 7
  %v1480 = vsub.s32 1, %v1479
  %v1481 = vrot.slane %v1472, %v1480
  %v1482 = vlaneseq
  %v1483 = vshrl.u32 %v1482, 7
  %v1484 = vsub.s32 2, %v1483
  %v1485 = vrot.slane %v1472, %v1484
  %v1486 = vlaneseq
  %v1487 = vshrl.u32 %v1486, 7
  %v1488 = vsub.s32 3, %v1487
  %v1489 = vrot.slane %v1472, %v1488
  %v1494 = vmul.f32 %v1361, %v1477
  %v1495 = vmul.f32 %v1363, %v1481
  %v1496 = vmul.f32 %v1434, %v1485
  %v1497 = vmul.f32 %v1436, %v1489
  %v1498 = vmul.f32 %v1365, %v1477
  %v1499 = vmul.f32 %v1367, %v1481
  %v1500 = vmul.f32 %v1438, %v1485
  %v1501 = vmul.f32 %v1440, %v1489
  %v1502 = vmul.f32 %v1371, %v1477
  %v1503 = vmul.f32 %v1373, %v1481
  %v1504 = vmul.f32 %v1444, %v1485
  %v1505 = vmul.f32 %v1446, %v1489
  %v1506 = vmul.f32 %v1375, %v1477
  %v1507 = vmul.f32 %v1377, %v1481
  %v1508 = vmul.f32 %v1448, %v1485
  %v1509 = vmul.f32 %v1450, %v1489
  %v1510 = vmul.f32 %v1381, %v1477
  %v1511 = vmul.f32 %v1383, %v1481
  %v1512 = vmul.f32 %v1454, %v1485
  %v1513 = vmul.f32 %v1456, %v1489
  %v1514 = vmul.f32 %v1385, %v1477
  %v1515 = vmul.f32 %v1387, %v1481
  %v1516 = vmul.f32 %v1458, %v1485
  %v1517 = vmul.f32 %v1460, %v1489
  %v1518 = vmul.f32 %v1391, %v1477
  %v1519 = vmul.f32 %v1393, %v1481
  %v1520 = vmul.f32 %v1464, %v1485
  %v1521 = vmul.f32 %v1466, %v1489
  %v1522 = vmul.f32 %v1395, %v1477
  %v1523 = vmul.f32 %v1397, %v1481
  %v1524 = vmul.f32 %v1468, %v1485
  %v1525 = vmul.f32 %v1470, %v1489
  %1526 = vst [vmem:[%s7] sm:$0xff] %v1494
  %1527 = vst [vmem:[%s7 + $0x8] sm:$0xff] %v1495
  %1528 = vst [vmem:[%s7 + $0x10] sm:$0xff] %v1496
  %1529 = vst [vmem:[%s7 + $0x18] sm:$0xff] %v1497
  %1530 = vst [vmem:[%s7 + $0x20] sm:$0xff] %v1498
  %1531 = vst [vmem:[%s7 + $0x28] sm:$0xff] %v1499
  %1532 = vst [vmem:[%s7 + $0x30] sm:$0xff] %v1500
  %1533 = vst [vmem:[%s7 + $0x38] sm:$0xff] %v1501
  %1534 = vst [vmem:[%s7 + $0x40] sm:$0xff] %v1502
  %1535 = vst [vmem:[%s7 + $0x48] sm:$0xff] %v1503
  %1536 = vst [vmem:[%s7 + $0x50] sm:$0xff] %v1504
  %1537 = vst [vmem:[%s7 + $0x58] sm:$0xff] %v1505
  %1538 = vst [vmem:[%s7 + $0x60] sm:$0xff] %v1506
  %1539 = vst [vmem:[%s7 + $0x68] sm:$0xff] %v1507
  %1540 = vst [vmem:[%s7 + $0x70] sm:$0xff] %v1508
  %1541 = vst [vmem:[%s7 + $0x78] sm:$0xff] %v1509
  %1542 = vst [vmem:[%s7 + $0x80] sm:$0xff] %v1510
  %1543 = vst [vmem:[%s7 + $0x88] sm:$0xff] %v1511
  %1544 = vst [vmem:[%s7 + $0x90] sm:$0xff] %v1512
  %1545 = vst [vmem:[%s7 + $0x98] sm:$0xff] %v1513
  %1546 = vst [vmem:[%s7 + $0xa0] sm:$0xff] %v1514
  %1547 = vst [vmem:[%s7 + $0xa8] sm:$0xff] %v1515
  %1548 = vst [vmem:[%s7 + $0xb0] sm:$0xff] %v1516
  %1549 = vst [vmem:[%s7 + $0xb8] sm:$0xff] %v1517
  %1550 = vst [vmem:[%s7 + $0xc0] sm:$0xff] %v1518
  %1551 = vst [vmem:[%s7 + $0xc8] sm:$0xff] %v1519
  %1552 = vst [vmem:[%s7 + $0xd0] sm:$0xff] %v1520
  %1553 = vst [vmem:[%s7 + $0xd8] sm:$0xff] %v1521
  %1554 = vst [vmem:[%s7 + $0xe0] sm:$0xff] %v1522
  %1555 = vst [vmem:[%s7 + $0xe8] sm:$0xff] %v1523
  %1556 = vst [vmem:[%s7 + $0xf0] sm:$0xff] %v1524
  %1557 = vst [vmem:[%s7 + $0xf8] sm:$0xff] %v1525
  // Predicated region
  $region30: #{simple_enhancer_forward.5} parent=0 // pred_check
    _
  $region31: #{simple_enhancer_forward.5} parent=0 // pred_check_branch
    %1559 = sbr.rel (0) target = $region33
  $region32: #{simple_enhancer_forward.5} parent=0 // pred_region
    _
  $region33: #{simple_enhancer_forward.5} parent=0 // pred_fallthru
    _
  // Predicated region
  $region34: #{simple_enhancer_forward.5} parent=0 // pred_check
    _
  $region35: #{simple_enhancer_forward.5} parent=0 // pred_check_branch
    %1561 = sbr.rel (0) target = $region37
  $region36: #{simple_enhancer_forward.5} parent=0 // pred_region
    _
  $region37: #{simple_enhancer_forward.5} parent=0 // pred_fallthru
    _

// kernel: simple_enhancer_forward.3
$region0: #{simple_enhancer_forward.3}
  #allocation0 [shape = 'u32[]', space=smem, size = 0x4, offset = 0x4, fixed_abs, tag = 'smem constant byte address 0x4 - core index']
  #allocation1 [shape = 'u32[144,128]{1,0:T(1,128)}', space=vmem, size = 0x12000, scoped, tag = 'internal scratch']
  %s0 = inlined_call_operand.vmem [shape: f32[64,512], index: 0, kind: input, shape index: {}]
  %s1 = inlined_call_operand.vmem [shape: f32[1,512], index: 1, kind: input, shape index: {}]
  %s2 = inlined_call_operand.vmem [shape: bf16[512,512], index: 2, kind: input, shape index: {}]
  %s3 = inlined_call_operand.vmem [shape: bf16[256,384], index: 3, kind: input, shape index: {}]
  %s4 = inlined_call_operand.vmem [shape: f32[1,384], index: 4, kind: input, shape index: {}]
  %s5 = inlined_call_operand.vmem [shape: bf16[64,512], index: 5, kind: output, shape index: {0}]
  %s6 = inlined_call_operand.vmem [shape: f32[64,384], index: 6, kind: output, shape index: {1}]
  %7 = xla_tuple %s5, %s6
  %s8 = sld [smem:[#allocation0]]
  $region38: #{simple_enhancer_forward.3} parent=0
    _
  %s10 = ssub.s32 1, %s8
  %s11 = scalar_select 0, %s10, %s8
  // Predicated region
  $region2: #{simple_enhancer_forward.3} parent=0 // pred_check
    _
  $region3: #{simple_enhancer_forward.3} parent=0 // pred_check_branch
    %13 = sbr.rel (0) target = $region5
  $region4: #{simple_enhancer_forward.3} parent=0 // pred_region
    _
  $region5: #{simple_enhancer_forward.3} parent=0 // pred_fallthru
    _
  // Predicated region
  $region6: #{simple_enhancer_forward.3} parent=0 // pred_check
    _
  $region7: #{simple_enhancer_forward.3} parent=0 // pred_check_branch
    %15 = sbr.rel (0) target = $region9
  $region8: #{simple_enhancer_forward.3} parent=0 // pred_region
    _
  $region9: #{simple_enhancer_forward.3} parent=0 // pred_fallthru
    _
  // Predicated region
  $region10: #{simple_enhancer_forward.3} parent=0 // pred_check
    _
  $region11: #{simple_enhancer_forward.3} parent=0 // pred_check_branch
    %17 = sbr.rel (0) target = $region13
  $region12: #{simple_enhancer_forward.3} parent=0 // pred_region
    _
  $region13: #{simple_enhancer_forward.3} parent=0 // pred_fallthru
    _
  // Predicated region
  $region14: #{simple_enhancer_forward.3} parent=0 // pred_check
    _
  $region15: #{simple_enhancer_forward.3} parent=0 // pred_check_branch
    %19 = sbr.rel (0) target = $region17
  $region16: #{simple_enhancer_forward.3} parent=0 // pred_region
    _
  $region17: #{simple_enhancer_forward.3} parent=0 // pred_fallthru
    _
  // Predicated region
  $region18: #{simple_enhancer_forward.3} parent=0 // pred_check
    _
  $region19: #{simple_enhancer_forward.3} parent=0 // pred_check_branch
    %21 = sbr.rel (0) target = $region21
  $region20: #{simple_enhancer_forward.3} parent=0 // pred_region
    _
  $region21: #{simple_enhancer_forward.3} parent=0 // pred_fallthru
    _
  %v23 = vld [vmem:[%s0] sm:$0xff]
  %v24 = vld [vmem:[%s0 + $0x8] sm:$0xff]
  %v25 = vld [vmem:[%s0 + $0x10] sm:$0xff]
  %v26 = vld [vmem:[%s0 + $0x18] sm:$0xff]
  %v27 = vld [vmem:[%s0 + $0x20] sm:$0xff]
  %v28 = vld [vmem:[%s0 + $0x28] sm:$0xff]
  %v29 = vld [vmem:[%s0 + $0x30] sm:$0xff]
  %v30 = vld [vmem:[%s0 + $0x38] sm:$0xff]
  %v31 = vld [vmem:[%s0 + $0x40] sm:$0xff]
  %v32 = vld [vmem:[%s0 + $0x48] sm:$0xff]
  %v33 = vld [vmem:[%s0 + $0x50] sm:$0xff]
  %v34 = vld [vmem:[%s0 + $0x58] sm:$0xff]
  %v35 = vld [vmem:[%s0 + $0x60] sm:$0xff]
  %v36 = vld [vmem:[%s0 + $0x68] sm:$0xff]
  %v37 = vld [vmem:[%s0 + $0x70] sm:$0xff]
  %v38 = vld [vmem:[%s0 + $0x78] sm:$0xff]
  %v39 = vld [vmem:[%s0 + $0x80] sm:$0xff]
  %v40 = vld [vmem:[%s0 + $0x88] sm:$0xff]
  %v41 = vld [vmem:[%s0 + $0x90] sm:$0xff]
  %v42 = vld [vmem:[%s0 + $0x98] sm:$0xff]
  %v43 = vld [vmem:[%s0 + $0xa0] sm:$0xff]
  %v44 = vld [vmem:[%s0 + $0xa8] sm:$0xff]
  %v45 = vld [vmem:[%s0 + $0xb0] sm:$0xff]
  %v46 = vld [vmem:[%s0 + $0xb8] sm:$0xff]
  %v47 = vld [vmem:[%s0 + $0xc0] sm:$0xff]
  %v48 = vld [vmem:[%s0 + $0xc8] sm:$0xff]
  %v49 = vld [vmem:[%s0 + $0xd0] sm:$0xff]
  %v50 = vld [vmem:[%s0 + $0xd8] sm:$0xff]
  %v51 = vld [vmem:[%s0 + $0xe0] sm:$0xff]
  %v52 = vld [vmem:[%s0 + $0xe8] sm:$0xff]
  %v53 = vld [vmem:[%s0 + $0xf0] sm:$0xff]
  %v54 = vld [vmem:[%s0 + $0xf8] sm:$0xff]
  %v55 = vld [vmem:[%s1] sm:$0xf]
  %v57 = vlaneseq
  %v58 = vshrl.u32 %v57, 7
  %v59 = vsub.s32 0, %v58
  %v60 = vrot.slane %v55, %v59
  %v61 = vlaneseq
  %v62 = vshrl.u32 %v61, 7
  %v63 = vsub.s32 1, %v62
  %v64 = vrot.slane %v55, %v63
  %v65 = vlaneseq
  %v66 = vshrl.u32 %v65, 7
  %v67 = vsub.s32 2, %v66
  %v68 = vrot.slane %v55, %v67
  %v69 = vlaneseq
  %v70 = vshrl.u32 %v69, 7
  %v71 = vsub.s32 3, %v70
  %v72 = vrot.slane %v55, %v71
  %v77 = vmul.f32 %v23, %v60
  %v78 = vmul.f32 %v24, %v64
  %v79 = vmul.f32 %v25, %v68
  %v80 = vmul.f32 %v26, %v72
  %v81 = vmul.f32 %v27, %v60
  %v82 = vmul.f32 %v28, %v64
  %v83 = vmul.f32 %v29, %v68
  %v84 = vmul.f32 %v30, %v72
  %v85 = vmul.f32 %v31, %v60
  %v86 = vmul.f32 %v32, %v64
  %v87 = vmul.f32 %v33, %v68
  %v88 = vmul.f32 %v34, %v72
  %v89 = vmul.f32 %v35, %v60
  %v90 = vmul.f32 %v36, %v64
  %v91 = vmul.f32 %v37, %v68
  %v92 = vmul.f32 %v38, %v72
  %v93 = vmul.f32 %v39, %v60
  %v94 = vmul.f32 %v40, %v64
  %v95 = vmul.f32 %v41, %v68
  %v96 = vmul.f32 %v42, %v72
  %v97 = vmul.f32 %v43, %v60
  %v98 = vmul.f32 %v44, %v64
  %v99 = vmul.f32 %v45, %v68
  %v100 = vmul.f32 %v46, %v72
  %v101 = vmul.f32 %v47, %v60
  %v102 = vmul.f32 %v48, %v64
  %v103 = vmul.f32 %v49, %v68
  %v104 = vmul.f32 %v50, %v72
  %v105 = vmul.f32 %v51, %v60
  %v106 = vmul.f32 %v52, %v64
  %v107 = vmul.f32 %v53, %v68
  %v108 = vmul.f32 %v54, %v72
  %v109 = vpack.c.bf16 %v81, %v77
  %v110 = vpack.c.bf16 %v82, %v78
  %v111 = vpack.c.bf16 %v83, %v79
  %v112 = vpack.c.bf16 %v84, %v80
  %v113 = vpack.c.bf16 %v89, %v85
  %v114 = vpack.c.bf16 %v90, %v86
  %v115 = vpack.c.bf16 %v91, %v87
  %v116 = vpack.c.bf16 %v92, %v88
  %v117 = vpack.c.bf16 %v97, %v93
  %v118 = vpack.c.bf16 %v98, %v94
  %v119 = vpack.c.bf16 %v99, %v95
  %v120 = vpack.c.bf16 %v100, %v96
  %v121 = vpack.c.bf16 %v105, %v101
  %v122 = vpack.c.bf16 %v106, %v102
  %v123 = vpack.c.bf16 %v107, %v103
  %v124 = vpack.c.bf16 %v108, %v104
  %v125 = vld [vmem:[%s2] sm:$0xff]
  %v126 = vld [vmem:[%s2 + $0x8] sm:$0xff]
  %v127 = vld [vmem:[%s2 + $0x10] sm:$0xff]
  %v128 = vld [vmem:[%s2 + $0x18] sm:$0xff]
  %v129 = vld [vmem:[%s2 + $0x20] sm:$0xff]
  %v130 = vld [vmem:[%s2 + $0x28] sm:$0xff]
  %v131 = vld [vmem:[%s2 + $0x30] sm:$0xff]
  %v132 = vld [vmem:[%s2 + $0x38] sm:$0xff]
  %v133 = vld [vmem:[%s2 + $0x40] sm:$0xff]
  %v134 = vld [vmem:[%s2 + $0x48] sm:$0xff]
  %v135 = vld [vmem:[%s2 + $0x50] sm:$0xff]
  %v136 = vld [vmem:[%s2 + $0x58] sm:$0xff]
  %v137 = vld [vmem:[%s2 + $0x60] sm:$0xff]
  %v138 = vld [vmem:[%s2 + $0x68] sm:$0xff]
  %v139 = vld [vmem:[%s2 + $0x70] sm:$0xff]
  %v140 = vld [vmem:[%s2 + $0x78] sm:$0xff]
  %v141 = vld [vmem:[%s2 + $0x80] sm:$0xff]
  %v142 = vld [vmem:[%s2 + $0x88] sm:$0xff]
  %v143 = vld [vmem:[%s2 + $0x90] sm:$0xff]
  %v144 = vld [vmem:[%s2 + $0x98] sm:$0xff]
  %v145 = vld [vmem:[%s2 + $0xa0] sm:$0xff]
  %v146 = vld [vmem:[%s2 + $0xa8] sm:$0xff]
  %v147 = vld [vmem:[%s2 + $0xb0] sm:$0xff]
  %v148 = vld [vmem:[%s2 + $0xb8] sm:$0xff]
  %v149 = vld [vmem:[%s2 + $0xc0] sm:$0xff]
  %v150 = vld [vmem:[%s2 + $0xc8] sm:$0xff]
  %v151 = vld [vmem:[%s2 + $0xd0] sm:$0xff]
  %v152 = vld [vmem:[%s2 + $0xd8] sm:$0xff]
  %v153 = vld [vmem:[%s2 + $0xe0] sm:$0xff]
  %v154 = vld [vmem:[%s2 + $0xe8] sm:$0xff]
  %v155 = vld [vmem:[%s2 + $0xf0] sm:$0xff]
  %v156 = vld [vmem:[%s2 + $0xf8] sm:$0xff]
  %v157 = vld [vmem:[%s2 + $0x100] sm:$0xff]
  %v158 = vld [vmem:[%s2 + $0x108] sm:$0xff]
  %v159 = vld [vmem:[%s2 + $0x110] sm:$0xff]
  %v160 = vld [vmem:[%s2 + $0x118] sm:$0xff]
  %v161 = vld [vmem:[%s2 + $0x120] sm:$0xff]
  %v162 = vld [vmem:[%s2 + $0x128] sm:$0xff]
  %v163 = vld [vmem:[%s2 + $0x130] sm:$0xff]
  %v164 = vld [vmem:[%s2 + $0x138] sm:$0xff]
  %v165 = vld [vmem:[%s2 + $0x140] sm:$0xff]
  %v166 = vld [vmem:[%s2 + $0x148] sm:$0xff]
  %v167 = vld [vmem:[%s2 + $0x150] sm:$0xff]
  %v168 = vld [vmem:[%s2 + $0x158] sm:$0xff]
  %v169 = vld [vmem:[%s2 + $0x160] sm:$0xff]
  %v170 = vld [vmem:[%s2 + $0x168] sm:$0xff]
  %v171 = vld [vmem:[%s2 + $0x170] sm:$0xff]
  %v172 = vld [vmem:[%s2 + $0x178] sm:$0xff]
  %v173 = vld [vmem:[%s2 + $0x180] sm:$0xff]
  %v174 = vld [vmem:[%s2 + $0x188] sm:$0xff]
  %v175 = vld [vmem:[%s2 + $0x190] sm:$0xff]
  %v176 = vld [vmem:[%s2 + $0x198] sm:$0xff]
  %v177 = vld [vmem:[%s2 + $0x1a0] sm:$0xff]
  %v178 = vld [vmem:[%s2 + $0x1a8] sm:$0xff]
  %v179 = vld [vmem:[%s2 + $0x1b0] sm:$0xff]
  %v180 = vld [vmem:[%s2 + $0x1b8] sm:$0xff]
  %v181 = vld [vmem:[%s2 + $0x1c0] sm:$0xff]
  %v182 = vld [vmem:[%s2 + $0x1c8] sm:$0xff]
  %v183 = vld [vmem:[%s2 + $0x1d0] sm:$0xff]
  %v184 = vld [vmem:[%s2 + $0x1d8] sm:$0xff]
  %v185 = vld [vmem:[%s2 + $0x1e0] sm:$0xff]
  %v186 = vld [vmem:[%s2 + $0x1e8] sm:$0xff]
  %v187 = vld [vmem:[%s2 + $0x1f0] sm:$0xff]
  %v188 = vld [vmem:[%s2 + $0x1f8] sm:$0xff]
  %v189 = vld [vmem:[%s2 + $0x200] sm:$0xff]
  %v190 = vld [vmem:[%s2 + $0x208] sm:$0xff]
  %v191 = vld [vmem:[%s2 + $0x210] sm:$0xff]
  %v192 = vld [vmem:[%s2 + $0x218] sm:$0xff]
  %v193 = vld [vmem:[%s2 + $0x220] sm:$0xff]
  %v194 = vld [vmem:[%s2 + $0x228] sm:$0xff]
  %v195 = vld [vmem:[%s2 + $0x230] sm:$0xff]
  %v196 = vld [vmem:[%s2 + $0x238] sm:$0xff]
  %v197 = vld [vmem:[%s2 + $0x240] sm:$0xff]
  %v198 = vld [vmem:[%s2 + $0x248] sm:$0xff]
  %v199 = vld [vmem:[%s2 + $0x250] sm:$0xff]
  %v200 = vld [vmem:[%s2 + $0x258] sm:$0xff]
  %v201 = vld [vmem:[%s2 + $0x260] sm:$0xff]
  %v202 = vld [vmem:[%s2 + $0x268] sm:$0xff]
  %v203 = vld [vmem:[%s2 + $0x270] sm:$0xff]
  %v204 = vld [vmem:[%s2 + $0x278] sm:$0xff]
  %v205 = vld [vmem:[%s2 + $0x280] sm:$0xff]
  %v206 = vld [vmem:[%s2 + $0x288] sm:$0xff]
  %v207 = vld [vmem:[%s2 + $0x290] sm:$0xff]
  %v208 = vld [vmem:[%s2 + $0x298] sm:$0xff]
  %v209 = vld [vmem:[%s2 + $0x2a0] sm:$0xff]
  %v210 = vld [vmem:[%s2 + $0x2a8] sm:$0xff]
  %v211 = vld [vmem:[%s2 + $0x2b0] sm:$0xff]
  %v212 = vld [vmem:[%s2 + $0x2b8] sm:$0xff]
  %v213 = vld [vmem:[%s2 + $0x2c0] sm:$0xff]
  %v214 = vld [vmem:[%s2 + $0x2c8] sm:$0xff]
  %v215 = vld [vmem:[%s2 + $0x2d0] sm:$0xff]
  %v216 = vld [vmem:[%s2 + $0x2d8] sm:$0xff]
  %v217 = vld [vmem:[%s2 + $0x2e0] sm:$0xff]
  %v218 = vld [vmem:[%s2 + $0x2e8] sm:$0xff]
  %v219 = vld [vmem:[%s2 + $0x2f0] sm:$0xff]
  %v220 = vld [vmem:[%s2 + $0x2f8] sm:$0xff]
  %v221 = vld [vmem:[%s2 + $0x300] sm:$0xff]
  %v222 = vld [vmem:[%s2 + $0x308] sm:$0xff]
  %v223 = vld [vmem:[%s2 + $0x310] sm:$0xff]
  %v224 = vld [vmem:[%s2 + $0x318] sm:$0xff]
  %v225 = vld [vmem:[%s2 + $0x320] sm:$0xff]
  %v226 = vld [vmem:[%s2 + $0x328] sm:$0xff]
  %v227 = vld [vmem:[%s2 + $0x330] sm:$0xff]
  %v228 = vld [vmem:[%s2 + $0x338] sm:$0xff]
  %v229 = vld [vmem:[%s2 + $0x340] sm:$0xff]
  %v230 = vld [vmem:[%s2 + $0x348] sm:$0xff]
  %v231 = vld [vmem:[%s2 + $0x350] sm:$0xff]
  %v232 = vld [vmem:[%s2 + $0x358] sm:$0xff]
  %v233 = vld [vmem:[%s2 + $0x360] sm:$0xff]
  %v234 = vld [vmem:[%s2 + $0x368] sm:$0xff]
  %v235 = vld [vmem:[%s2 + $0x370] sm:$0xff]
  %v236 = vld [vmem:[%s2 + $0x378] sm:$0xff]
  %v237 = vld [vmem:[%s2 + $0x380] sm:$0xff]
  %v238 = vld [vmem:[%s2 + $0x388] sm:$0xff]
  %v239 = vld [vmem:[%s2 + $0x390] sm:$0xff]
  %v240 = vld [vmem:[%s2 + $0x398] sm:$0xff]
  %v241 = vld [vmem:[%s2 + $0x3a0] sm:$0xff]
  %v242 = vld [vmem:[%s2 + $0x3a8] sm:$0xff]
  %v243 = vld [vmem:[%s2 + $0x3b0] sm:$0xff]
  %v244 = vld [vmem:[%s2 + $0x3b8] sm:$0xff]
  %v245 = vld [vmem:[%s2 + $0x3c0] sm:$0xff]
  %v246 = vld [vmem:[%s2 + $0x3c8] sm:$0xff]
  %v247 = vld [vmem:[%s2 + $0x3d0] sm:$0xff]
  %v248 = vld [vmem:[%s2 + $0x3d8] sm:$0xff]
  %v249 = vld [vmem:[%s2 + $0x3e0] sm:$0xff]
  %v250 = vld [vmem:[%s2 + $0x3e8] sm:$0xff]
  %v251 = vld [vmem:[%s2 + $0x3f0] sm:$0xff]
  %v252 = vld [vmem:[%s2 + $0x3f8] sm:$0xff]
  %v381 = vunpack.c.l.b16 %v125
  %v382 = vunpack.c.h.b16 %v125
  %v383 = vunpack.c.l.b16 %v126
  %v384 = vunpack.c.h.b16 %v126
  %v385 = vunpack.c.l.b16 %v127
  %v386 = vunpack.c.h.b16 %v127
  %v387 = vunpack.c.l.b16 %v128
  %v388 = vunpack.c.h.b16 %v128
  %v389 = vunpack.c.l.b16 %v129
  %v390 = vunpack.c.h.b16 %v129
  %v391 = vunpack.c.l.b16 %v130
  %v392 = vunpack.c.h.b16 %v130
  %v393 = vunpack.c.l.b16 %v131
  %v394 = vunpack.c.h.b16 %v131
  %v395 = vunpack.c.l.b16 %v132
  %v396 = vunpack.c.h.b16 %v132
  %v397 = vunpack.c.l.b16 %v133
  %v398 = vunpack.c.h.b16 %v133
  %v399 = vunpack.c.l.b16 %v134
  %v400 = vunpack.c.h.b16 %v134
  %v401 = vunpack.c.l.b16 %v135
  %v402 = vunpack.c.h.b16 %v135
  %v403 = vunpack.c.l.b16 %v136
  %v404 = vunpack.c.h.b16 %v136
  %v405 = vunpack.c.l.b16 %v137
  %v406 = vunpack.c.h.b16 %v137
  %v407 = vunpack.c.l.b16 %v138
  %v408 = vunpack.c.h.b16 %v138
  %v409 = vunpack.c.l.b16 %v139
  %v410 = vunpack.c.h.b16 %v139
  %v411 = vunpack.c.l.b16 %v140
  %v412 = vunpack.c.h.b16 %v140
  %v413 = vunpack.c.l.b16 %v141
  %v414 = vunpack.c.h.b16 %v141
  %v415 = vunpack.c.l.b16 %v142
  %v416 = vunpack.c.h.b16 %v142
  %v417 = vunpack.c.l.b16 %v143
  %v418 = vunpack.c.h.b16 %v143
  %v419 = vunpack.c.l.b16 %v144
  %v420 = vunpack.c.h.b16 %v144
  %v421 = vunpack.c.l.b16 %v145
  %v422 = vunpack.c.h.b16 %v145
  %v423 = vunpack.c.l.b16 %v146
  %v424 = vunpack.c.h.b16 %v146
  %v425 = vunpack.c.l.b16 %v147
  %v426 = vunpack.c.h.b16 %v147
  %v427 = vunpack.c.l.b16 %v148
  %v428 = vunpack.c.h.b16 %v148
  %v429 = vunpack.c.l.b16 %v149
  %v430 = vunpack.c.h.b16 %v149
  %v431 = vunpack.c.l.b16 %v150
  %v432 = vunpack.c.h.b16 %v150
  %v433 = vunpack.c.l.b16 %v151
  %v434 = vunpack.c.h.b16 %v151
  %v435 = vunpack.c.l.b16 %v152
  %v436 = vunpack.c.h.b16 %v152
  %v437 = vunpack.c.l.b16 %v153
  %v438 = vunpack.c.h.b16 %v153
  %v439 = vunpack.c.l.b16 %v154
  %v440 = vunpack.c.h.b16 %v154
  %v441 = vunpack.c.l.b16 %v155
  %v442 = vunpack.c.h.b16 %v155
  %v443 = vunpack.c.l.b16 %v156
  %v444 = vunpack.c.h.b16 %v156
  %v445 = vunpack.c.l.b16 %v157
  %v446 = vunpack.c.h.b16 %v157
  %v447 = vunpack.c.l.b16 %v158
  %v448 = vunpack.c.h.b16 %v158
  %v449 = vunpack.c.l.b16 %v159
  %v450 = vunpack.c.h.b16 %v159
  %v451 = vunpack.c.l.b16 %v160
  %v452 = vunpack.c.h.b16 %v160
  %v453 = vunpack.c.l.b16 %v161
  %v454 = vunpack.c.h.b16 %v161
  %v455 = vunpack.c.l.b16 %v162
  %v456 = vunpack.c.h.b16 %v162
  %v457 = vunpack.c.l.b16 %v163
  %v458 = vunpack.c.h.b16 %v163
  %v459 = vunpack.c.l.b16 %v164
  %v460 = vunpack.c.h.b16 %v164
  %v461 = vunpack.c.l.b16 %v165
  %v462 = vunpack.c.h.b16 %v165
  %v463 = vunpack.c.l.b16 %v166
  %v464 = vunpack.c.h.b16 %v166
  %v465 = vunpack.c.l.b16 %v167
  %v466 = vunpack.c.h.b16 %v167
  %v467 = vunpack.c.l.b16 %v168
  %v468 = vunpack.c.h.b16 %v168
  %v469 = vunpack.c.l.b16 %v169
  %v470 = vunpack.c.h.b16 %v169
  %v471 = vunpack.c.l.b16 %v170
  %v472 = vunpack.c.h.b16 %v170
  %v473 = vunpack.c.l.b16 %v171
  %v474 = vunpack.c.h.b16 %v171
  %v475 = vunpack.c.l.b16 %v172
  %v476 = vunpack.c.h.b16 %v172
  %v477 = vunpack.c.l.b16 %v173
  %v478 = vunpack.c.h.b16 %v173
  %v479 = vunpack.c.l.b16 %v174
  %v480 = vunpack.c.h.b16 %v174
  %v481 = vunpack.c.l.b16 %v175
  %v482 = vunpack.c.h.b16 %v175
  %v483 = vunpack.c.l.b16 %v176
  %v484 = vunpack.c.h.b16 %v176
  %v485 = vunpack.c.l.b16 %v177
  %v486 = vunpack.c.h.b16 %v177
  %v487 = vunpack.c.l.b16 %v178
  %v488 = vunpack.c.h.b16 %v178
  %v489 = vunpack.c.l.b16 %v179
  %v490 = vunpack.c.h.b16 %v179
  %v491 = vunpack.c.l.b16 %v180
  %v492 = vunpack.c.h.b16 %v180
  %v493 = vunpack.c.l.b16 %v181
  %v494 = vunpack.c.h.b16 %v181
  %v495 = vunpack.c.l.b16 %v182
  %v496 = vunpack.c.h.b16 %v182
  %v497 = vunpack.c.l.b16 %v183
  %v498 = vunpack.c.h.b16 %v183
  %v499 = vunpack.c.l.b16 %v184
  %v500 = vunpack.c.h.b16 %v184
  %v501 = vunpack.c.l.b16 %v185
  %v502 = vunpack.c.h.b16 %v185
  %v503 = vunpack.c.l.b16 %v186
  %v504 = vunpack.c.h.b16 %v186
  %v505 = vunpack.c.l.b16 %v187
  %v506 = vunpack.c.h.b16 %v187
  %v507 = vunpack.c.l.b16 %v188
  %v508 = vunpack.c.h.b16 %v188
  %v509 = vunpack.c.l.b16 %v189
  %v510 = vunpack.c.h.b16 %v189
  %v511 = vunpack.c.l.b16 %v190
  %v512 = vunpack.c.h.b16 %v190
  %v513 = vunpack.c.l.b16 %v191
  %v514 = vunpack.c.h.b16 %v191
  %v515 = vunpack.c.l.b16 %v192
  %v516 = vunpack.c.h.b16 %v192
  %v517 = vunpack.c.l.b16 %v193
  %v518 = vunpack.c.h.b16 %v193
  %v519 = vunpack.c.l.b16 %v194
  %v520 = vunpack.c.h.b16 %v194
  %v521 = vunpack.c.l.b16 %v195
  %v522 = vunpack.c.h.b16 %v195
  %v523 = vunpack.c.l.b16 %v196
  %v524 = vunpack.c.h.b16 %v196
  %v525 = vunpack.c.l.b16 %v197
  %v526 = vunpack.c.h.b16 %v197
  %v527 = vunpack.c.l.b16 %v198
  %v528 = vunpack.c.h.b16 %v198
  %v529 = vunpack.c.l.b16 %v199
  %v530 = vunpack.c.h.b16 %v199
  %v531 = vunpack.c.l.b16 %v200
  %v532 = vunpack.c.h.b16 %v200
  %v533 = vunpack.c.l.b16 %v201
  %v534 = vunpack.c.h.b16 %v201
  %v535 = vunpack.c.l.b16 %v202
  %v536 = vunpack.c.h.b16 %v202
  %v537 = vunpack.c.l.b16 %v203
  %v538 = vunpack.c.h.b16 %v203
  %v539 = vunpack.c.l.b16 %v204
  %v540 = vunpack.c.h.b16 %v204
  %v541 = vunpack.c.l.b16 %v205
  %v542 = vunpack.c.h.b16 %v205
  %v543 = vunpack.c.l.b16 %v206
  %v544 = vunpack.c.h.b16 %v206
  %v545 = vunpack.c.l.b16 %v207
  %v546 = vunpack.c.h.b16 %v207
  %v547 = vunpack.c.l.b16 %v208
  %v548 = vunpack.c.h.b16 %v208
  %v549 = vunpack.c.l.b16 %v209
  %v550 = vunpack.c.h.b16 %v209
  %v551 = vunpack.c.l.b16 %v210
  %v552 = vunpack.c.h.b16 %v210
  %v553 = vunpack.c.l.b16 %v211
  %v554 = vunpack.c.h.b16 %v211
  %v555 = vunpack.c.l.b16 %v212
  %v556 = vunpack.c.h.b16 %v212
  %v557 = vunpack.c.l.b16 %v213
  %v558 = vunpack.c.h.b16 %v213
  %v559 = vunpack.c.l.b16 %v214
  %v560 = vunpack.c.h.b16 %v214
  %v561 = vunpack.c.l.b16 %v215
  %v562 = vunpack.c.h.b16 %v215
  %v563 = vunpack.c.l.b16 %v216
  %v564 = vunpack.c.h.b16 %v216
  %v565 = vunpack.c.l.b16 %v217
  %v566 = vunpack.c.h.b16 %v217
  %v567 = vunpack.c.l.b16 %v218
  %v568 = vunpack.c.h.b16 %v218
  %v569 = vunpack.c.l.b16 %v219
  %v570 = vunpack.c.h.b16 %v219
  %v571 = vunpack.c.l.b16 %v220
  %v572 = vunpack.c.h.b16 %v220
  %v573 = vunpack.c.l.b16 %v221
  %v574 = vunpack.c.h.b16 %v221
  %v575 = vunpack.c.l.b16 %v222
  %v576 = vunpack.c.h.b16 %v222
  %v577 = vunpack.c.l.b16 %v223
  %v578 = vunpack.c.h.b16 %v223
  %v579 = vunpack.c.l.b16 %v224
  %v580 = vunpack.c.h.b16 %v224
  %v581 = vunpack.c.l.b16 %v225
  %v582 = vunpack.c.h.b16 %v225
  %v583 = vunpack.c.l.b16 %v226
  %v584 = vunpack.c.h.b16 %v226
  %v585 = vunpack.c.l.b16 %v227
  %v586 = vunpack.c.h.b16 %v227
  %v587 = vunpack.c.l.b16 %v228
  %v588 = vunpack.c.h.b16 %v228
  %v589 = vunpack.c.l.b16 %v229
  %v590 = vunpack.c.h.b16 %v229
  %v591 = vunpack.c.l.b16 %v230
  %v592 = vunpack.c.h.b16 %v230
  %v593 = vunpack.c.l.b16 %v231
  %v594 = vunpack.c.h.b16 %v231
  %v595 = vunpack.c.l.b16 %v232
  %v596 = vunpack.c.h.b16 %v232
  %v597 = vunpack.c.l.b16 %v233
  %v598 = vunpack.c.h.b16 %v233
  %v599 = vunpack.c.l.b16 %v234
  %v600 = vunpack.c.h.b16 %v234
  %v601 = vunpack.c.l.b16 %v235
  %v602 = vunpack.c.h.b16 %v235
  %v603 = vunpack.c.l.b16 %v236
  %v604 = vunpack.c.h.b16 %v236
  %v605 = vunpack.c.l.b16 %v237
  %v606 = vunpack.c.h.b16 %v237
  %v607 = vunpack.c.l.b16 %v238
  %v608 = vunpack.c.h.b16 %v238
  %v609 = vunpack.c.l.b16 %v239
  %v610 = vunpack.c.h.b16 %v239
  %v611 = vunpack.c.l.b16 %v240
  %v612 = vunpack.c.h.b16 %v240
  %v613 = vunpack.c.l.b16 %v241
  %v614 = vunpack.c.h.b16 %v241
  %v615 = vunpack.c.l.b16 %v242
  %v616 = vunpack.c.h.b16 %v242
  %v617 = vunpack.c.l.b16 %v243
  %v618 = vunpack.c.h.b16 %v243
  %v619 = vunpack.c.l.b16 %v244
  %v620 = vunpack.c.h.b16 %v244
  %v621 = vunpack.c.l.b16 %v245
  %v622 = vunpack.c.h.b16 %v245
  %v623 = vunpack.c.l.b16 %v246
  %v624 = vunpack.c.h.b16 %v246
  %v625 = vunpack.c.l.b16 %v247
  %v626 = vunpack.c.h.b16 %v247
  %v627 = vunpack.c.l.b16 %v248
  %v628 = vunpack.c.h.b16 %v248
  %v629 = vunpack.c.l.b16 %v249
  %v630 = vunpack.c.h.b16 %v249
  %v631 = vunpack.c.l.b16 %v250
  %v632 = vunpack.c.h.b16 %v250
  %v633 = vunpack.c.l.b16 %v251
  %v634 = vunpack.c.h.b16 %v251
  %v635 = vunpack.c.l.b16 %v252
  %v636 = vunpack.c.h.b16 %v252
  %v637 = vpack.c.b16 %v385, %v381
  %v638 = vpack.c.b16 %v386, %v382
  %v639 = vpack.c.b16 %v387, %v383
  %v640 = vpack.c.b16 %v388, %v384
  %v641 = vpack.c.b16 %v393, %v389
  %v642 = vpack.c.b16 %v394, %v390
  %v643 = vpack.c.b16 %v395, %v391
  %v644 = vpack.c.b16 %v396, %v392
  %v645 = vpack.c.b16 %v401, %v397
  %v646 = vpack.c.b16 %v402, %v398
  %v647 = vpack.c.b16 %v403, %v399
  %v648 = vpack.c.b16 %v404, %v400
  %v649 = vpack.c.b16 %v409, %v405
  %v650 = vpack.c.b16 %v410, %v406
  %v651 = vpack.c.b16 %v411, %v407
  %v652 = vpack.c.b16 %v412, %v408
  %v653 = vpack.c.b16 %v417, %v413
  %v654 = vpack.c.b16 %v418, %v414
  %v655 = vpack.c.b16 %v419, %v415
  %v656 = vpack.c.b16 %v420, %v416
  %v657 = vpack.c.b16 %v425, %v421
  %v658 = vpack.c.b16 %v426, %v422
  %v659 = vpack.c.b16 %v427, %v423
  %v660 = vpack.c.b16 %v428, %v424
  %v661 = vpack.c.b16 %v433, %v429
  %v662 = vpack.c.b16 %v434, %v430
  %v663 = vpack.c.b16 %v435, %v431
  %v664 = vpack.c.b16 %v436, %v432
  %v665 = vpack.c.b16 %v441, %v437
  %v666 = vpack.c.b16 %v442, %v438
  %v667 = vpack.c.b16 %v443, %v439
  %v668 = vpack.c.b16 %v444, %v440
  %v669 = vpack.c.b16 %v449, %v445
  %v670 = vpack.c.b16 %v450, %v446
  %v671 = vpack.c.b16 %v451, %v447
  %v672 = vpack.c.b16 %v452, %v448
  %v673 = vpack.c.b16 %v457, %v453
  %v674 = vpack.c.b16 %v458, %v454
  %v675 = vpack.c.b16 %v459, %v455
  %v676 = vpack.c.b16 %v460, %v456
  %v677 = vpack.c.b16 %v465, %v461
  %v678 = vpack.c.b16 %v466, %v462
  %v679 = vpack.c.b16 %v467, %v463
  %v680 = vpack.c.b16 %v468, %v464
  %v681 = vpack.c.b16 %v473, %v469
  %v682 = vpack.c.b16 %v474, %v470
  %v683 = vpack.c.b16 %v475, %v471
  %v684 = vpack.c.b16 %v476, %v472
  %v685 = vpack.c.b16 %v481, %v477
  %v686 = vpack.c.b16 %v482, %v478
  %v687 = vpack.c.b16 %v483, %v479
  %v688 = vpack.c.b16 %v484, %v480
  %v689 = vpack.c.b16 %v489, %v485
  %v690 = vpack.c.b16 %v490, %v486
  %v691 = vpack.c.b16 %v491, %v487
  %v692 = vpack.c.b16 %v492, %v488
  %v693 = vpack.c.b16 %v497, %v493
  %v694 = vpack.c.b16 %v498, %v494
  %v695 = vpack.c.b16 %v499, %v495
  %v696 = vpack.c.b16 %v500, %v496
  %v697 = vpack.c.b16 %v505, %v501
  %v698 = vpack.c.b16 %v506, %v502
  %v699 = vpack.c.b16 %v507, %v503
  %v700 = vpack.c.b16 %v508, %v504
  %v701 = vpack.c.b16 %v513, %v509
  %v702 = vpack.c.b16 %v514, %v510
  %v703 = vpack.c.b16 %v515, %v511
  %v704 = vpack.c.b16 %v516, %v512
  %v705 = vpack.c.b16 %v521, %v517
  %v706 = vpack.c.b16 %v522, %v518
  %v707 = vpack.c.b16 %v523, %v519
  %v708 = vpack.c.b16 %v524, %v520
  %v709 = vpack.c.b16 %v529, %v525
  %v710 = vpack.c.b16 %v530, %v526
  %v711 = vpack.c.b16 %v531, %v527
  %v712 = vpack.c.b16 %v532, %v528
  %v713 = vpack.c.b16 %v537, %v533
  %v714 = vpack.c.b16 %v538, %v534
  %v715 = vpack.c.b16 %v539, %v535
  %v716 = vpack.c.b16 %v540, %v536
  %v717 = vpack.c.b16 %v545, %v541
  %v718 = vpack.c.b16 %v546, %v542
  %v719 = vpack.c.b16 %v547, %v543
  %v720 = vpack.c.b16 %v548, %v544
  %v721 = vpack.c.b16 %v553, %v549
  %v722 = vpack.c.b16 %v554, %v550
  %v723 = vpack.c.b16 %v555, %v551
  %v724 = vpack.c.b16 %v556, %v552
  %v725 = vpack.c.b16 %v561, %v557
  %v726 = vpack.c.b16 %v562, %v558
  %v727 = vpack.c.b16 %v563, %v559
  %v728 = vpack.c.b16 %v564, %v560
  %v729 = vpack.c.b16 %v569, %v565
  %v730 = vpack.c.b16 %v570, %v566
  %v731 = vpack.c.b16 %v571, %v567
  %v732 = vpack.c.b16 %v572, %v568
  %v733 = vpack.c.b16 %v577, %v573
  %v734 = vpack.c.b16 %v578, %v574
  %v735 = vpack.c.b16 %v579, %v575
  %v736 = vpack.c.b16 %v580, %v576
  %v737 = vpack.c.b16 %v585, %v581
  %v738 = vpack.c.b16 %v586, %v582
  %v739 = vpack.c.b16 %v587, %v583
  %v740 = vpack.c.b16 %v588, %v584
  %v741 = vpack.c.b16 %v593, %v589
  %v742 = vpack.c.b16 %v594, %v590
  %v743 = vpack.c.b16 %v595, %v591
  %v744 = vpack.c.b16 %v596, %v592
  %v745 = vpack.c.b16 %v601, %v597
  %v746 = vpack.c.b16 %v602, %v598
  %v747 = vpack.c.b16 %v603, %v599
  %v748 = vpack.c.b16 %v604, %v600
  %v749 = vpack.c.b16 %v609, %v605
  %v750 = vpack.c.b16 %v610, %v606
  %v751 = vpack.c.b16 %v611, %v607
  %v752 = vpack.c.b16 %v612, %v608
  %v753 = vpack.c.b16 %v617, %v613
  %v754 = vpack.c.b16 %v618, %v614
  %v755 = vpack.c.b16 %v619, %v615
  %v756 = vpack.c.b16 %v620, %v616
  %v757 = vpack.c.b16 %v625, %v621
  %v758 = vpack.c.b16 %v626, %v622
  %v759 = vpack.c.b16 %v627, %v623
  %v760 = vpack.c.b16 %v628, %v624
  %v761 = vpack.c.b16 %v633, %v629
  %v762 = vpack.c.b16 %v634, %v630
  %v763 = vpack.c.b16 %v635, %v631
  %v764 = vpack.c.b16 %v636, %v632
  %893 = vmatprep.subr.bf16.mxu0 %v638
  %894 = vmatpush1.bf16.msra.mxu0 %v637
  %895 = vmatprep.subr.bf16.mxu0 %v642
  %896 = vmatpush1.bf16.msra.mxu0 %v641
  %897 = vmatprep.subr.bf16.mxu0 %v646
  %898 = vmatpush1.bf16.msra.mxu0 %v645
  %899 = vmatprep.subr.bf16.mxu0 %v650
  %900 = vmatpush1.bf16.msra.mxu0 %v649
  %901 = vmatprep.subr.bf16.mxu0 %v654
  %902 = vmatpush1.bf16.msra.mxu0 %v653
  %903 = vmatprep.subr.bf16.mxu0 %v658
  %904 = vmatpush1.bf16.msra.mxu0 %v657
  %905 = vmatprep.subr.bf16.mxu0 %v662
  %906 = vmatpush1.bf16.msra.mxu0 %v661
  %907 = vmatprep.subr.bf16.mxu0 %v666
  %908 = vmatpush1.bf16.msra.mxu0 %v665
  %909 = vmatprep.subr.bf16.mxu0 %v670
  %910 = vmatpush1.bf16.msra.mxu0 %v669
  %911 = vmatprep.subr.bf16.mxu0 %v674
  %912 = vmatpush1.bf16.msra.mxu0 %v673
  %913 = vmatprep.subr.bf16.mxu0 %v678
  %914 = vmatpush1.bf16.msra.mxu0 %v677
  %915 = vmatprep.subr.bf16.mxu0 %v682
  %916 = vmatpush1.bf16.msra.mxu0 %v681
  %917 = vmatprep.subr.bf16.mxu0 %v686
  %918 = vmatpush1.bf16.msra.mxu0 %v685
  %919 = vmatprep.subr.bf16.mxu0 %v690
  %920 = vmatpush1.bf16.msra.mxu0 %v689
  %921 = vmatprep.subr.bf16.mxu0 %v694
  %922 = vmatpush1.bf16.msra.mxu0 %v693
  %923 = vmatprep.subr.bf16.mxu0 %v698
  %924 = vmatpush1.bf16.msra.mxu0 %v697
  %925 = vmatprep.mubr.bf16.mxu0 %v110
  %926 = vmatmul.mubr.bf16.gmra.mrb[0].mxu0 %v109
  %v927 = vpop.f32.mrb[0].mxu0
  %v928 = vadd.f32 0.0, %v927
  %v929 = vpop.f32.mrb[0].mxu0
  %v930 = vadd.f32 0.0, %v929
  %v931 = vpop.f32.mrb[0].mxu0
  %v932 = vadd.f32 0.0, %v931
  %v933 = vpop.f32.mrb[0].mxu0
  %v934 = vadd.f32 0.0, %v933
  %935 = vmatprep.mubr.bf16.mxu0 %v114
  %936 = vmatmul.mubr.bf16.gmra.mrb[0].mxu0 %v113
  %v937 = vpop.f32.mrb[0].mxu0
  %v938 = vadd.f32 0.0, %v937
  %v939 = vpop.f32.mrb[0].mxu0
  %v940 = vadd.f32 0.0, %v939
  %v941 = vpop.f32.mrb[0].mxu0
  %v942 = vadd.f32 0.0, %v941
  %v943 = vpop.f32.mrb[0].mxu0
  %v944 = vadd.f32 0.0, %v943
  %945 = vmatprep.mubr.bf16.mxu0 %v118
  %946 = vmatmul.mubr.bf16.gmra.mrb[0].mxu0 %v117
  %v947 = vpop.f32.mrb[0].mxu0
  %v948 = vadd.f32 0.0, %v947
  %v949 = vpop.f32.mrb[0].mxu0
  %v950 = vadd.f32 0.0, %v949
  %v951 = vpop.f32.mrb[0].mxu0
  %v952 = vadd.f32 0.0, %v951
  %v953 = vpop.f32.mrb[0].mxu0
  %v954 = vadd.f32 0.0, %v953
  %955 = vmatprep.mubr.bf16.mxu0 %v122
  %956 = vmatmul.mubr.bf16.gmra.mrb[0].mxu0 %v121
  %v957 = vpop.f32.mrb[0].mxu0
  %v958 = vadd.f32 0.0, %v957
  %v959 = vpop.f32.mrb[0].mxu0
  %v960 = vadd.f32 0.0, %v959
  %v961 = vpop.f32.mrb[0].mxu0
  %v962 = vadd.f32 0.0, %v961
  %v963 = vpop.f32.mrb[0].mxu0
  %v964 = vadd.f32 0.0, %v963
  %965 = vdwg.mxu0
  %966 = vmatprep.subr.bf16.mxu0 %v702
  %967 = vmatpush1.bf16.msra.mxu0 %v701
  %968 = vmatprep.subr.bf16.mxu0 %v706
  %969 = vmatpush1.bf16.msra.mxu0 %v705
  %970 = vmatprep.subr.bf16.mxu0 %v710
  %971 = vmatpush1.bf16.msra.mxu0 %v709
  %972 = vmatprep.subr.bf16.mxu0 %v714
  %973 = vmatpush1.bf16.msra.mxu0 %v713
  %974 = vmatprep.subr.bf16.mxu0 %v718
  %975 = vmatpush1.bf16.msra.mxu0 %v717
  %976 = vmatprep.subr.bf16.mxu0 %v722
  %977 = vmatpush1.bf16.msra.mxu0 %v721
  %978 = vmatprep.subr.bf16.mxu0 %v726
  %979 = vmatpush1.bf16.msra.mxu0 %v725
  %980 = vmatprep.subr.bf16.mxu0 %v730
  %981 = vmatpush1.bf16.msra.mxu0 %v729
  %982 = vmatprep.subr.bf16.mxu0 %v734
  %983 = vmatpush1.bf16.msra.mxu0 %v733
  %984 = vmatprep.subr.bf16.mxu0 %v738
  %985 = vmatpush1.bf16.msra.mxu0 %v737
  %986 = vmatprep.subr.bf16.mxu0 %v742
  %987 = vmatpush1.bf16.msra.mxu0 %v741
  %988 = vmatprep.subr.bf16.mxu0 %v746
  %989 = vmatpush1.bf16.msra.mxu0 %v745
  %990 = vmatprep.subr.bf16.mxu0 %v750
  %991 = vmatpush1.bf16.msra.mxu0 %v749
  %992 = vmatprep.subr.bf16.mxu0 %v754
  %993 = vmatpush1.bf16.msra.mxu0 %v753
  %994 = vmatprep.subr.bf16.mxu0 %v758
  %995 = vmatpush1.bf16.msra.mxu0 %v757
  %996 = vmatprep.subr.bf16.mxu0 %v762
  %997 = vmatpush1.bf16.msra.mxu0 %v761
  %998 = vmatprep.mubr.bf16.mxu0 %v112
  %999 = vmatmul.mubr.bf16.gmra.mrb[0].mxu0 %v111
  %v1000 = vpop.f32.mrb[0].mxu0
  %v1001 = vadd.f32 %v928, %v1000
  %v1002 = vpop.f32.mrb[0].mxu0
  %v1003 = vadd.f32 %v930, %v1002
  %v1004 = vpop.f32.mrb[0].mxu0
  %v1005 = vadd.f32 %v932, %v1004
  %v1006 = vpop.f32.mrb[0].mxu0
  %v1007 = vadd.f32 %v934, %v1006
  %1008 = vmatprep.mubr.bf16.mxu0 %v116
  %1009 = vmatmul.mubr.bf16.gmra.mrb[0].mxu0 %v115
  %v1010 = vpop.f32.mrb[0].mxu0
  %v1011 = vadd.f32 %v938, %v1010
  %v1012 = vpop.f32.mrb[0].mxu0
  %v1013 = vadd.f32 %v940, %v1012
  %v1014 = vpop.f32.mrb[0].mxu0
  %v1015 = vadd.f32 %v942, %v1014
  %v1016 = vpop.f32.mrb[0].mxu0
  %v1017 = vadd.f32 %v944, %v1016
  %1018 = vmatprep.mubr.bf16.mxu0 %v120
  %1019 = vmatmul.mubr.bf16.gmra.mrb[0].mxu0 %v119
  %v1020 = vpop.f32.mrb[0].mxu0
  %v1021 = vadd.f32 %v948, %v1020
  %v1022 = vpop.f32.mrb[0].mxu0
  %v1023 = vadd.f32 %v950, %v1022
  %v1024 = vpop.f32.mrb[0].mxu0
  %v1025 = vadd.f32 %v952, %v1024
  %v1026 = vpop.f32.mrb[0].mxu0
  %v1027 = vadd.f32 %v954, %v1026
  %1028 = vmatprep.mubr.bf16.mxu0 %v124
  %1029 = vmatmul.mubr.bf16.gmra.mrb[0].mxu0 %v123
  %v1030 = vpop.f32.mrb[0].mxu0
  %v1031 = vadd.f32 %v958, %v1030
  %v1032 = vpop.f32.mrb[0].mxu0
  %v1033 = vadd.f32 %v960, %v1032
  %v1034 = vpop.f32.mrb[0].mxu0
  %v1035 = vadd.f32 %v962, %v1034
  %v1036 = vpop.f32.mrb[0].mxu0
  %v1037 = vadd.f32 %v964, %v1036
  %1038 = vdwg.mxu0
  %1039 = vmatprep.subr.bf16.mxu0 %v640
  %1040 = vmatpush1.bf16.msra.mxu0 %v639
  %1041 = vmatprep.subr.bf16.mxu0 %v644
  %1042 = vmatpush1.bf16.msra.mxu0 %v643
  %1043 = vmatprep.subr.bf16.mxu0 %v648
  %1044 = vmatpush1.bf16.msra.mxu0 %v647
  %1045 = vmatprep.subr.bf16.mxu0 %v652
  %1046 = vmatpush1.bf16.msra.mxu0 %v651
  %1047 = vmatprep.subr.bf16.mxu0 %v656
  %1048 = vmatpush1.bf16.msra.mxu0 %v655
  %1049 = vmatprep.subr.bf16.mxu0 %v660
  %1050 = vmatpush1.bf16.msra.mxu0 %v659
  %1051 = vmatprep.subr.bf16.mxu0 %v664
  %1052 = vmatpush1.bf16.msra.mxu0 %v663
  %1053 = vmatprep.subr.bf16.mxu0 %v668
  %1054 = vmatpush1.bf16.msra.mxu0 %v667
  %1055 = vmatprep.subr.bf16.mxu0 %v672
  %1056 = vmatpush1.bf16.msra.mxu0 %v671
  %1057 = vmatprep.subr.bf16.mxu0 %v676
  %1058 = vmatpush1.bf16.msra.mxu0 %v675
  %1059 = vmatprep.subr.bf16.mxu0 %v680
  %1060 = vmatpush1.bf16.msra.mxu0 %v679
  %1061 = vmatprep.subr.bf16.mxu0 %v684
  %1062 = vmatpush1.bf16.msra.mxu0 %v683
  %1063 = vmatprep.subr.bf16.mxu0 %v688
  %1064 = vmatpush1.bf16.msra.mxu0 %v687
  %1065 = vmatprep.subr.bf16.mxu0 %v692
  %1066 = vmatpush1.bf16.msra.mxu0 %v691
  %1067 = vmatprep.subr.bf16.mxu0 %v696
  %1068 = vmatpush1.bf16.msra.mxu0 %v695
  %1069 = vmatprep.subr.bf16.mxu0 %v700
  %1070 = vmatpush1.bf16.msra.mxu0 %v699
  %1071 = vmatprep.mubr.bf16.mxu0 %v110
  %1072 = vmatmul.mubr.bf16.gmra.mrb[0].mxu0 %v109
  %v1073 = vpop.f32.mrb[0].mxu0
  %v1074 = vadd.f32 0.0, %v1073
  %v1075 = vpop.f32.mrb[0].mxu0
  %v1076 = vadd.f32 0.0, %v1075
  %v1077 = vpop.f32.mrb[0].mxu0
  %v1078 = vadd.f32 0.0, %v1077
  %v1079 = vpop.f32.mrb[0].mxu0
  %v1080 = vadd.f32 0.0, %v1079
  %1081 = vmatprep.mubr.bf16.mxu0 %v114
  %1082 = vmatmul.mubr.bf16.gmra.mrb[0].mxu0 %v113
  %v1083 = vpop.f32.mrb[0].mxu0
  %v1084 = vadd.f32 0.0, %v1083
  %v1085 = vpop.f32.mrb[0].mxu0
  %v1086 = vadd.f32 0.0, %v1085
  %v1087 = vpop.f32.mrb[0].mxu0
  %v1088 = vadd.f32 0.0, %v1087
  %v1089 = vpop.f32.mrb[0].mxu0
  %v1090 = vadd.f32 0.0, %v1089
  %1091 = vmatprep.mubr.bf16.mxu0 %v118
  %1092 = vmatmul.mubr.bf16.gmra.mrb[0].mxu0 %v117
  %v1093 = vpop.f32.mrb[0].mxu0
  %v1094 = vadd.f32 0.0, %v1093
  %v1095 = vpop.f32.mrb[0].mxu0
  %v1096 = vadd.f32 0.0, %v1095
  %v1097 = vpop.f32.mrb[0].mxu0
  %v1098 = vadd.f32 0.0, %v1097
  %v1099 = vpop.f32.mrb[0].mxu0
  %v1100 = vadd.f32 0.0, %v1099
  %1101 = vmatprep.mubr.bf16.mxu0 %v122
  %1102 = vmatmul.mubr.bf16.gmra.mrb[0].mxu0 %v121
  %v1103 = vpop.f32.mrb[0].mxu0
  %v1104 = vadd.f32 0.0, %v1103
  %v1105 = vpop.f32.mrb[0].mxu0
  %v1106 = vadd.f32 0.0, %v1105
  %v1107 = vpop.f32.mrb[0].mxu0
  %v1108 = vadd.f32 0.0, %v1107
  %v1109 = vpop.f32.mrb[0].mxu0
  %v1110 = vadd.f32 0.0, %v1109
  %1111 = vdwg.mxu0
  %1112 = vmatprep.subr.bf16.mxu0 %v704
  %1113 = vmatpush1.bf16.msra.mxu0 %v703
  %1114 = vmatprep.subr.bf16.mxu0 %v708
  %1115 = vmatpush1.bf16.msra.mxu0 %v707
  %1116 = vmatprep.subr.bf16.mxu0 %v712
  %1117 = vmatpush1.bf16.msra.mxu0 %v711
  %1118 = vmatprep.subr.bf16.mxu0 %v716
  %1119 = vmatpush1.bf16.msra.mxu0 %v715
  %1120 = vmatprep.subr.bf16.mxu0 %v720
  %1121 = vmatpush1.bf16.msra.mxu0 %v719
  %1122 = vmatprep.subr.bf16.mxu0 %v724
  %1123 = vmatpush1.bf16.msra.mxu0 %v723
  %1124 = vmatprep.subr.bf16.mxu0 %v728
  %1125 = vmatpush1.bf16.msra.mxu0 %v727
  %1126 = vmatprep.subr.bf16.mxu0 %v732
  %1127 = vmatpush1.bf16.msra.mxu0 %v731
  %1128 = vmatprep.subr.bf16.mxu0 %v736
  %1129 = vmatpush1.bf16.msra.mxu0 %v735
  %1130 = vmatprep.subr.bf16.mxu0 %v740
  %1131 = vmatpush1.bf16.msra.mxu0 %v739
  %1132 = vmatprep.subr.bf16.mxu0 %v744
  %1133 = vmatpush1.bf16.msra.mxu0 %v743
  %1134 = vmatprep.subr.bf16.mxu0 %v748
  %1135 = vmatpush1.bf16.msra.mxu0 %v747
  %1136 = vmatprep.subr.bf16.mxu0 %v752
  %1137 = vmatpush1.bf16.msra.mxu0 %v751
  %1138 = vmatprep.subr.bf16.mxu0 %v756
  %1139 = vmatpush1.bf16.msra.mxu0 %v755
  %1140 = vmatprep.subr.bf16.mxu0 %v760
  %1141 = vmatpush1.bf16.msra.mxu0 %v759
  %1142 = vmatprep.subr.bf16.mxu0 %v764
  %1143 = vmatpush1.bf16.msra.mxu0 %v763
  %1144 = vmatprep.mubr.bf16.mxu0 %v112
  %1145 = vmatmul.mubr.bf16.gmra.mrb[0].mxu0 %v111
  %v1146 = vpop.f32.mrb[0].mxu0
  %v1147 = vadd.f32 %v1074, %v1146
  %v1148 = vpop.f32.mrb[0].mxu0
  %v1149 = vadd.f32 %v1076, %v1148
  %v1150 = vpop.f32.mrb[0].mxu0
  %v1151 = vadd.f32 %v1078, %v1150
  %v1152 = vpop.f32.mrb[0].mxu0
  %v1153 = vadd.f32 %v1080, %v1152
  %1154 = vmatprep.mubr.bf16.mxu0 %v116
  %1155 = vmatmul.mubr.bf16.gmra.mrb[0].mxu0 %v115
  %v1156 = vpop.f32.mrb[0].mxu0
  %v1157 = vadd.f32 %v1084, %v1156
  %v1158 = vpop.f32.mrb[0].mxu0
  %v1159 = vadd.f32 %v1086, %v1158
  %v1160 = vpop.f32.mrb[0].mxu0
  %v1161 = vadd.f32 %v1088, %v1160
  %v1162 = vpop.f32.mrb[0].mxu0
  %v1163 = vadd.f32 %v1090, %v1162
  %1164 = vmatprep.mubr.bf16.mxu0 %v120
  %1165 = vmatmul.mubr.bf16.gmra.mrb[0].mxu0 %v119
  %v1166 = vpop.f32.mrb[0].mxu0
  %v1167 = vadd.f32 %v1094, %v1166
  %v1168 = vpop.f32.mrb[0].mxu0
  %v1169 = vadd.f32 %v1096, %v1168
  %v1170 = vpop.f32.mrb[0].mxu0
  %v1171 = vadd.f32 %v1098, %v1170
  %v1172 = vpop.f32.mrb[0].mxu0
  %v1173 = vadd.f32 %v1100, %v1172
  %1174 = vmatprep.mubr.bf16.mxu0 %v124
  %1175 = vmatmul.mubr.bf16.gmra.mrb[0].mxu0 %v123
  %v1176 = vpop.f32.mrb[0].mxu0
  %v1177 = vadd.f32 %v1104, %v1176
  %v1178 = vpop.f32.mrb[0].mxu0
  %v1179 = vadd.f32 %v1106, %v1178
  %v1180 = vpop.f32.mrb[0].mxu0
  %v1181 = vadd.f32 %v1108, %v1180
  %v1182 = vpop.f32.mrb[0].mxu0
  %v1183 = vadd.f32 %v1110, %v1182
  %1184 = vdwg.mxu0
  %v1185 = vpack.c.bf16 %v1005, %v1001
  %v1186 = vpack.c.bf16 %v1007, %v1003
  %v1187 = vpack.c.bf16 %v1151, %v1147
  %v1188 = vpack.c.bf16 %v1153, %v1149
  %v1189 = vpack.c.bf16 %v1015, %v1011
  %v1190 = vpack.c.bf16 %v1017, %v1013
  %v1191 = vpack.c.bf16 %v1161, %v1157
  %v1192 = vpack.c.bf16 %v1163, %v1159
  %v1193 = vpack.c.bf16 %v1025, %v1021
  %v1194 = vpack.c.bf16 %v1027, %v1023
  %v1195 = vpack.c.bf16 %v1171, %v1167
  %v1196 = vpack.c.bf16 %v1173, %v1169
  %v1197 = vpack.c.bf16 %v1035, %v1031
  %v1198 = vpack.c.bf16 %v1037, %v1033
  %v1199 = vpack.c.bf16 %v1181, %v1177
  %v1200 = vpack.c.bf16 %v1183, %v1179
  %v1217 = vunpack.c.l.b16 %v1185
  %v1218 = vunpack.c.l.b16 %v1186
  %v1219 = vunpack.c.l.b16 %v1187
  %v1220 = vunpack.c.l.b16 %v1188
  %v1221 = vunpack.c.h.b16 %v1185
  %v1222 = vunpack.c.h.b16 %v1186
  %v1223 = vunpack.c.h.b16 %v1187
  %v1224 = vunpack.c.h.b16 %v1188
  %v1225 = vunpack.c.l.b16 %v1189
  %v1226 = vunpack.c.l.b16 %v1190
  %v1227 = vunpack.c.l.b16 %v1191
  %v1228 = vunpack.c.l.b16 %v1192
  %v1229 = vunpack.c.h.b16 %v1189
  %v1230 = vunpack.c.h.b16 %v1190
  %v1231 = vunpack.c.h.b16 %v1191
  %v1232 = vunpack.c.h.b16 %v1192
  %v1233 = vunpack.c.l.b16 %v1193
  %v1234 = vunpack.c.l.b16 %v1194
  %v1235 = vunpack.c.l.b16 %v1195
  %v1236 = vunpack.c.l.b16 %v1196
  %v1237 = vunpack.c.h.b16 %v1193
  %v1238 = vunpack.c.h.b16 %v1194
  %v1239 = vunpack.c.h.b16 %v1195
  %v1240 = vunpack.c.h.b16 %v1196
  %v1241 = vunpack.c.l.b16 %v1197
  %v1242 = vunpack.c.l.b16 %v1198
  %v1243 = vunpack.c.l.b16 %v1199
  %v1244 = vunpack.c.l.b16 %v1200
  %v1245 = vunpack.c.h.b16 %v1197
  %v1246 = vunpack.c.h.b16 %v1198
  %v1247 = vunpack.c.h.b16 %v1199
  %v1248 = vunpack.c.h.b16 %v1200
  %v1249 = vpack.c.b16 %v1218, %v1217
  %v1250 = vpack.c.b16 %v1220, %v1219
  %v1251 = vpack.c.b16 %v1222, %v1221
  %v1252 = vpack.c.b16 %v1224, %v1223
  %v1253 = vpack.c.b16 %v1226, %v1225
  %v1254 = vpack.c.b16 %v1228, %v1227
  %v1255 = vpack.c.b16 %v1230, %v1229
  %v1256 = vpack.c.b16 %v1232, %v1231
  %v1257 = vpack.c.b16 %v1234, %v1233
  %v1258 = vpack.c.b16 %v1236, %v1235
  %v1259 = vpack.c.b16 %v1238, %v1237
  %v1260 = vpack.c.b16 %v1240, %v1239
  %v1261 = vpack.c.b16 %v1242, %v1241
  %v1262 = vpack.c.b16 %v1244, %v1243
  %v1263 = vpack.c.b16 %v1246, %v1245
  %v1264 = vpack.c.b16 %v1248, %v1247
  %1281 = vst [vmem:[%s5] sm:$0xff] %v1249
  %1282 = vst [vmem:[%s5 + $0x8] sm:$0xff] %v1250
  %1283 = vst [vmem:[%s5 + $0x10] sm:$0xff] %v1251
  %1284 = vst [vmem:[%s5 + $0x18] sm:$0xff] %v1252
  %1285 = vst [vmem:[%s5 + $0x20] sm:$0xff] %v1253
  %1286 = vst [vmem:[%s5 + $0x28] sm:$0xff] %v1254
  %1287 = vst [vmem:[%s5 + $0x30] sm:$0xff] %v1255
  %1288 = vst [vmem:[%s5 + $0x38] sm:$0xff] %v1256
  %1289 = vst [vmem:[%s5 + $0x40] sm:$0xff] %v1257
  %1290 = vst [vmem:[%s5 + $0x48] sm:$0xff] %v1258
  %1291 = vst [vmem:[%s5 + $0x50] sm:$0xff] %v1259
  %1292 = vst [vmem:[%s5 + $0x58] sm:$0xff] %v1260
  %1293 = vst [vmem:[%s5 + $0x60] sm:$0xff] %v1261
  %1294 = vst [vmem:[%s5 + $0x68] sm:$0xff] %v1262
  %1295 = vst [vmem:[%s5 + $0x70] sm:$0xff] %v1263
  %1296 = vst [vmem:[%s5 + $0x78] sm:$0xff] %v1264
  %v1297 = vmul.f32 %v1001, %v1001
  %v1298 = vmul.f32 %v1003, %v1003
  %v1299 = vmul.f32 %v1005, %v1005
  %v1300 = vmul.f32 %v1007, %v1007
  %v1301 = vmul.f32 %v1011, %v1011
  %v1302 = vmul.f32 %v1013, %v1013
  %v1303 = vmul.f32 %v1015, %v1015
  %v1304 = vmul.f32 %v1017, %v1017
  %v1305 = vmul.f32 %v1021, %v1021
  %v1306 = vmul.f32 %v1023, %v1023
  %v1307 = vmul.f32 %v1025, %v1025
  %v1308 = vmul.f32 %v1027, %v1027
  %v1309 = vmul.f32 %v1031, %v1031
  %v1310 = vmul.f32 %v1033, %v1033
  %v1311 = vmul.f32 %v1035, %v1035
  %v1312 = vmul.f32 %v1037, %v1037
  %v1313 = vmul.f32 %v1147, %v1147
  %v1314 = vmul.f32 %v1149, %v1149
  %v1315 = vmul.f32 %v1151, %v1151
  %v1316 = vmul.f32 %v1153, %v1153
  %v1317 = vmul.f32 %v1157, %v1157
  %v1318 = vmul.f32 %v1159, %v1159
  %v1319 = vmul.f32 %v1161, %v1161
  %v1320 = vmul.f32 %v1163, %v1163
  %v1321 = vmul.f32 %v1167, %v1167
  %v1322 = vmul.f32 %v1169, %v1169
  %v1323 = vmul.f32 %v1171, %v1171
  %v1324 = vmul.f32 %v1173, %v1173
  %v1325 = vmul.f32 %v1177, %v1177
  %v1326 = vmul.f32 %v1179, %v1179
  %v1327 = vmul.f32 %v1181, %v1181
  %v1328 = vmul.f32 %v1183, %v1183
  %v1329 = vadd.f32 %v1297, %v1313
  %v1330 = vadd.f32 %v1298, %v1314
  %v1331 = vadd.f32 %v1299, %v1315
  %v1332 = vadd.f32 %v1300, %v1316
  %v1333 = vadd.f32 %v1301, %v1317
  %v1334 = vadd.f32 %v1302, %v1318
  %v1335 = vadd.f32 %v1303, %v1319
  %v1336 = vadd.f32 %v1304, %v1320
  %v1337 = vadd.f32 %v1305, %v1321
  %v1338 = vadd.f32 %v1306, %v1322
  %v1339 = vadd.f32 %v1307, %v1323
  %v1340 = vadd.f32 %v1308, %v1324
  %v1341 = vadd.f32 %v1309, %v1325
  %v1342 = vadd.f32 %v1310, %v1326
  %v1343 = vadd.f32 %v1311, %v1327
  %v1344 = vadd.f32 %v1312, %v1328
  %v1345 = vrsqrt.pop %v1329
  %v1346 = vmul.f32 %v1329, %v1345
  %vm1347 = vcmp.eq.f32.partialorder %v1329, inf
  %v1348 = vsel %vm1347, %v1329, %v1346
  %vm1349 = vcmp.eq.f32.partialorder %v1329, 0.0
  %v1350 = vand.u32 %v1329, 2147483648
  %v1351 = vsel %vm1349, %v1350, %v1348
  %v1352 = vrsqrt.pop %v1330
  %v1353 = vmul.f32 %v1330, %v1352
  %vm1354 = vcmp.eq.f32.partialorder %v1330, inf
  %v1355 = vsel %vm1354, %v1330, %v1353
  %vm1356 = vcmp.eq.f32.partialorder %v1330, 0.0
  %v1357 = vand.u32 %v1330, 2147483648
  %v1358 = vsel %vm1356, %v1357, %v1355
  %v1359 = vrsqrt.pop %v1331
  %v1360 = vmul.f32 %v1331, %v1359
  %vm1361 = vcmp.eq.f32.partialorder %v1331, inf
  %v1362 = vsel %vm1361, %v1331, %v1360
  %vm1363 = vcmp.eq.f32.partialorder %v1331, 0.0
  %v1364 = vand.u32 %v1331, 2147483648
  %v1365 = vsel %vm1363, %v1364, %v1362
  %v1366 = vrsqrt.pop %v1332
  %v1367 = vmul.f32 %v1332, %v1366
  %vm1368 = vcmp.eq.f32.partialorder %v1332, inf
  %v1369 = vsel %vm1368, %v1332, %v1367
  %vm1370 = vcmp.eq.f32.partialorder %v1332, 0.0
  %v1371 = vand.u32 %v1332, 2147483648
  %v1372 = vsel %vm1370, %v1371, %v1369
  %v1373 = vrsqrt.pop %v1333
  %v1374 = vmul.f32 %v1333, %v1373
  %vm1375 = vcmp.eq.f32.partialorder %v1333, inf
  %v1376 = vsel %vm1375, %v1333, %v1374
  %vm1377 = vcmp.eq.f32.partialorder %v1333, 0.0
  %v1378 = vand.u32 %v1333, 2147483648
  %v1379 = vsel %vm1377, %v1378, %v1376
  %v1380 = vrsqrt.pop %v1334
  %v1381 = vmul.f32 %v1334, %v1380
  %vm1382 = vcmp.eq.f32.partialorder %v1334, inf
  %v1383 = vsel %vm1382, %v1334, %v1381
  %vm1384 = vcmp.eq.f32.partialorder %v1334, 0.0
  %v1385 = vand.u32 %v1334, 2147483648
  %v1386 = vsel %vm1384, %v1385, %v1383
  %v1387 = vrsqrt.pop %v1335
  %v1388 = vmul.f32 %v1335, %v1387
  %vm1389 = vcmp.eq.f32.partialorder %v1335, inf
  %v1390 = vsel %vm1389, %v1335, %v1388
  %vm1391 = vcmp.eq.f32.partialorder %v1335, 0.0
  %v1392 = vand.u32 %v1335, 2147483648
  %v1393 = vsel %vm1391, %v1392, %v1390
  %v1394 = vrsqrt.pop %v1336
  %v1395 = vmul.f32 %v1336, %v1394
  %vm1396 = vcmp.eq.f32.partialorder %v1336, inf
  %v1397 = vsel %vm1396, %v1336, %v1395
  %vm1398 = vcmp.eq.f32.partialorder %v1336, 0.0
  %v1399 = vand.u32 %v1336, 2147483648
  %v1400 = vsel %vm1398, %v1399, %v1397
  %v1401 = vrsqrt.pop %v1337
  %v1402 = vmul.f32 %v1337, %v1401
  %vm1403 = vcmp.eq.f32.partialorder %v1337, inf
  %v1404 = vsel %vm1403, %v1337, %v1402
  %vm1405 = vcmp.eq.f32.partialorder %v1337, 0.0
  %v1406 = vand.u32 %v1337, 2147483648
  %v1407 = vsel %vm1405, %v1406, %v1404
  %v1408 = vrsqrt.pop %v1338
  %v1409 = vmul.f32 %v1338, %v1408
  %vm1410 = vcmp.eq.f32.partialorder %v1338, inf
  %v1411 = vsel %vm1410, %v1338, %v1409
  %vm1412 = vcmp.eq.f32.partialorder %v1338, 0.0
  %v1413 = vand.u32 %v1338, 2147483648
  %v1414 = vsel %vm1412, %v1413, %v1411
  %v1415 = vrsqrt.pop %v1339
  %v1416 = vmul.f32 %v1339, %v1415
  %vm1417 = vcmp.eq.f32.partialorder %v1339, inf
  %v1418 = vsel %vm1417, %v1339, %v1416
  %vm1419 = vcmp.eq.f32.partialorder %v1339, 0.0
  %v1420 = vand.u32 %v1339, 2147483648
  %v1421 = vsel %vm1419, %v1420, %v1418
  %v1422 = vrsqrt.pop %v1340
  %v1423 = vmul.f32 %v1340, %v1422
  %vm1424 = vcmp.eq.f32.partialorder %v1340, inf
  %v1425 = vsel %vm1424, %v1340, %v1423
  %vm1426 = vcmp.eq.f32.partialorder %v1340, 0.0
  %v1427 = vand.u32 %v1340, 2147483648
  %v1428 = vsel %vm1426, %v1427, %v1425
  %v1429 = vrsqrt.pop %v1341
  %v1430 = vmul.f32 %v1341, %v1429
  %vm1431 = vcmp.eq.f32.partialorder %v1341, inf
  %v1432 = vsel %vm1431, %v1341, %v1430
  %vm1433 = vcmp.eq.f32.partialorder %v1341, 0.0
  %v1434 = vand.u32 %v1341, 2147483648
  %v1435 = vsel %vm1433, %v1434, %v1432
  %v1436 = vrsqrt.pop %v1342
  %v1437 = vmul.f32 %v1342, %v1436
  %vm1438 = vcmp.eq.f32.partialorder %v1342, inf
  %v1439 = vsel %vm1438, %v1342, %v1437
  %vm1440 = vcmp.eq.f32.partialorder %v1342, 0.0
  %v1441 = vand.u32 %v1342, 2147483648
  %v1442 = vsel %vm1440, %v1441, %v1439
  %v1443 = vrsqrt.pop %v1343
  %v1444 = vmul.f32 %v1343, %v1443
  %vm1445 = vcmp.eq.f32.partialorder %v1343, inf
  %v1446 = vsel %vm1445, %v1343, %v1444
  %vm1447 = vcmp.eq.f32.partialorder %v1343, 0.0
  %v1448 = vand.u32 %v1343, 2147483648
  %v1449 = vsel %vm1447, %v1448, %v1446
  %v1450 = vrsqrt.pop %v1344
  %v1451 = vmul.f32 %v1344, %v1450
  %vm1452 = vcmp.eq.f32.partialorder %v1344, inf
  %v1453 = vsel %vm1452, %v1344, %v1451
  %vm1454 = vcmp.eq.f32.partialorder %v1344, 0.0
  %v1455 = vand.u32 %v1344, 2147483648
  %v1456 = vsel %vm1454, %v1455, %v1453
  %v1457 = vpack.c.bf16 %v1365, %v1351
  %v1458 = vpack.c.bf16 %v1372, %v1358
  %v1459 = vpack.c.bf16 %v1393, %v1379
  %v1460 = vpack.c.bf16 %v1400, %v1386
  %v1461 = vpack.c.bf16 %v1421, %v1407
  %v1462 = vpack.c.bf16 %v1428, %v1414
  %v1463 = vpack.c.bf16 %v1449, %v1435
  %v1464 = vpack.c.bf16 %v1456, %v1442
  %v1465 = vld [vmem:[%s3] sm:$0xff]
  %v1466 = vld [vmem:[%s3 + $0x8] sm:$0xf]
  %v1467 = vld [vmem:[%s3 + $0xc] sm:$0xff]
  %v1468 = vld [vmem:[%s3 + $0x14] sm:$0xf]
  %v1469 = vld [vmem:[%s3 + $0x18] sm:$0xff]
  %v1470 = vld [vmem:[%s3 + $0x20] sm:$0xf]
  %v1471 = vld [vmem:[%s3 + $0x24] sm:$0xff]
  %v1472 = vld [vmem:[%s3 + $0x2c] sm:$0xf]
  %v1473 = vld [vmem:[%s3 + $0x30] sm:$0xff]
  %v1474 = vld [vmem:[%s3 + $0x38] sm:$0xf]
  %v1475 = vld [vmem:[%s3 + $0x3c] sm:$0xff]
  %v1476 = vld [vmem:[%s3 + $0x44] sm:$0xf]
  %v1477 = vld [vmem:[%s3 + $0x48] sm:$0xff]
  %v1478 = vld [vmem:[%s3 + $0x50] sm:$0xf]
  %v1479 = vld [vmem:[%s3 + $0x54] sm:$0xff]
  %v1480 = vld [vmem:[%s3 + $0x5c] sm:$0xf]
  %v1481 = vld [vmem:[%s3 + $0x60] sm:$0xff]
  %v1482 = vld [vmem:[%s3 + $0x68] sm:$0xf]
  %v1483 = vld [vmem:[%s3 + $0x6c] sm:$0xff]
  %v1484 = vld [vmem:[%s3 + $0x74] sm:$0xf]
  %v1485 = vld [vmem:[%s3 + $0x78] sm:$0xff]
  %v1486 = vld [vmem:[%s3 + $0x80] sm:$0xf]
  %v1487 = vld [vmem:[%s3 + $0x84] sm:$0xff]
  %v1488 = vld [vmem:[%s3 + $0x8c] sm:$0xf]
  %v1489 = vld [vmem:[%s3 + $0x90] sm:$0xff]
  %v1490 = vld [vmem:[%s3 + $0x98] sm:$0xf]
  %v1491 = vld [vmem:[%s3 + $0x9c] sm:$0xff]
  %v1492 = vld [vmem:[%s3 + $0xa4] sm:$0xf]
  %v1493 = vld [vmem:[%s3 + $0xa8] sm:$0xff]
  %v1494 = vld [vmem:[%s3 + $0xb0] sm:$0xf]
  %v1495 = vld [vmem:[%s3 + $0xb4] sm:$0xff]
  %v1496 = vld [vmem:[%s3 + $0xbc] sm:$0xf]
  %v1497 = vld [vmem:[%s3 + $0xc0] sm:$0xff]
  %v1498 = vld [vmem:[%s3 + $0xc8] sm:$0xf]
  %v1499 = vld [vmem:[%s3 + $0xcc] sm:$0xff]
  %v1500 = vld [vmem:[%s3 + $0xd4] sm:$0xf]
  %v1501 = vld [vmem:[%s3 + $0xd8] sm:$0xff]
  %v1502 = vld [vmem:[%s3 + $0xe0] sm:$0xf]
  %v1503 = vld [vmem:[%s3 + $0xe4] sm:$0xff]
  %v1504 = vld [vmem:[%s3 + $0xec] sm:$0xf]
  %v1505 = vld [vmem:[%s3 + $0xf0] sm:$0xff]
  %v1506 = vld [vmem:[%s3 + $0xf8] sm:$0xf]
  %v1507 = vld [vmem:[%s3 + $0xfc] sm:$0xff]
  %v1508 = vld [vmem:[%s3 + $0x104] sm:$0xf]
  %v1509 = vld [vmem:[%s3 + $0x108] sm:$0xff]
  %v1510 = vld [vmem:[%s3 + $0x110] sm:$0xf]
  %v1511 = vld [vmem:[%s3 + $0x114] sm:$0xff]
  %v1512 = vld [vmem:[%s3 + $0x11c] sm:$0xf]
  %v1513 = vld [vmem:[%s3 + $0x120] sm:$0xff]
  %v1514 = vld [vmem:[%s3 + $0x128] sm:$0xf]
  %v1515 = vld [vmem:[%s3 + $0x12c] sm:$0xff]
  %v1516 = vld [vmem:[%s3 + $0x134] sm:$0xf]
  %v1517 = vld [vmem:[%s3 + $0x138] sm:$0xff]
  %v1518 = vld [vmem:[%s3 + $0x140] sm:$0xf]
  %v1519 = vld [vmem:[%s3 + $0x144] sm:$0xff]
  %v1520 = vld [vmem:[%s3 + $0x14c] sm:$0xf]
  %v1521 = vld [vmem:[%s3 + $0x150] sm:$0xff]
  %v1522 = vld [vmem:[%s3 + $0x158] sm:$0xf]
  %v1523 = vld [vmem:[%s3 + $0x15c] sm:$0xff]
  %v1524 = vld [vmem:[%s3 + $0x164] sm:$0xf]
  %v1525 = vld [vmem:[%s3 + $0x168] sm:$0xff]
  %v1526 = vld [vmem:[%s3 + $0x170] sm:$0xf]
  %v1527 = vld [vmem:[%s3 + $0x174] sm:$0xff]
  %v1528 = vld [vmem:[%s3 + $0x17c] sm:$0xf]
  %v1529 = vld [vmem:[%s4] sm:$0x7]
  %v1531 = vlaneseq
  %v1532 = vshrl.u32 %v1531, 7
  %v1533 = vsub.s32 0, %v1532
  %v1534 = vrot.slane %v1529, %v1533
  %v1535 = vlaneseq
  %v1536 = vshrl.u32 %v1535, 7
  %v1537 = vsub.s32 1, %v1536
  %v1538 = vrot.slane %v1529, %v1537
  %v1539 = vlaneseq
  %v1540 = vshrl.u32 %v1539, 7
  %v1541 = vsub.s32 2, %v1540
  %v1542 = vrot.slane %v1529, %v1541
  %v1610 = vunpack.c.l.b16 %v1465
  %v1611 = vunpack.c.h.b16 %v1465
  %v1612 = vunpack.c.l.b16 %v1466
  %v1613 = vunpack.c.l.b16 %v1467
  %v1614 = vunpack.c.h.b16 %v1467
  %v1615 = vunpack.c.l.b16 %v1468
  %v1616 = vunpack.c.l.b16 %v1469
  %v1617 = vunpack.c.h.b16 %v1469
  %v1618 = vunpack.c.l.b16 %v1470
  %v1619 = vunpack.c.l.b16 %v1471
  %v1620 = vunpack.c.h.b16 %v1471
  %v1621 = vunpack.c.l.b16 %v1472
  %v1622 = vunpack.c.l.b16 %v1473
  %v1623 = vunpack.c.h.b16 %v1473
  %v1624 = vunpack.c.l.b16 %v1474
  %v1625 = vunpack.c.l.b16 %v1475
  %v1626 = vunpack.c.h.b16 %v1475
  %v1627 = vunpack.c.l.b16 %v1476
  %v1628 = vunpack.c.l.b16 %v1477
  %v1629 = vunpack.c.h.b16 %v1477
  %v1630 = vunpack.c.l.b16 %v1478
  %v1631 = vunpack.c.l.b16 %v1479
  %v1632 = vunpack.c.h.b16 %v1479
  %v1633 = vunpack.c.l.b16 %v1480
  %v1634 = vunpack.c.l.b16 %v1481
  %v1635 = vunpack.c.h.b16 %v1481
  %v1636 = vunpack.c.l.b16 %v1482
  %v1637 = vunpack.c.l.b16 %v1483
  %v1638 = vunpack.c.h.b16 %v1483
  %v1639 = vunpack.c.l.b16 %v1484
  %v1640 = vunpack.c.l.b16 %v1485
  %v1641 = vunpack.c.h.b16 %v1485
  %v1642 = vunpack.c.l.b16 %v1486
  %v1643 = vunpack.c.l.b16 %v1487
  %v1644 = vunpack.c.h.b16 %v1487
  %v1645 = vunpack.c.l.b16 %v1488
  %v1646 = vunpack.c.l.b16 %v1489
  %v1647 = vunpack.c.h.b16 %v1489
  %v1648 = vunpack.c.l.b16 %v1490
  %v1649 = vunpack.c.l.b16 %v1491
  %v1650 = vunpack.c.h.b16 %v1491
  %v1651 = vunpack.c.l.b16 %v1492
  %v1652 = vunpack.c.l.b16 %v1493
  %v1653 = vunpack.c.h.b16 %v1493
  %v1654 = vunpack.c.l.b16 %v1494
  %v1655 = vunpack.c.l.b16 %v1495
  %v1656 = vunpack.c.h.b16 %v1495
  %v1657 = vunpack.c.l.b16 %v1496
  %v1658 = vunpack.c.l.b16 %v1497
  %v1659 = vunpack.c.h.b16 %v1497
  %v1660 = vunpack.c.l.b16 %v1498
  %v1661 = vunpack.c.l.b16 %v1499
  %v1662 = vunpack.c.h.b16 %v1499
  %v1663 = vunpack.c.l.b16 %v1500
  %v1664 = vunpack.c.l.b16 %v1501
  %v1665 = vunpack.c.h.b16 %v1501
  %v1666 = vunpack.c.l.b16 %v1502
  %v1667 = vunpack.c.l.b16 %v1503
  %v1668 = vunpack.c.h.b16 %v1503
  %v1669 = vunpack.c.l.b16 %v1504
  %v1670 = vunpack.c.l.b16 %v1505
  %v1671 = vunpack.c.h.b16 %v1505
  %v1672 = vunpack.c.l.b16 %v1506
  %v1673 = vunpack.c.l.b16 %v1507
  %v1674 = vunpack.c.h.b16 %v1507
  %v1675 = vunpack.c.l.b16 %v1508
  %v1676 = vunpack.c.l.b16 %v1509
  %v1677 = vunpack.c.h.b16 %v1509
  %v1678 = vunpack.c.l.b16 %v1510
  %v1679 = vunpack.c.l.b16 %v1511
  %v1680 = vunpack.c.h.b16 %v1511
  %v1681 = vunpack.c.l.b16 %v1512
  %v1682 = vunpack.c.l.b16 %v1513
  %v1683 = vunpack.c.h.b16 %v1513
  %v1684 = vunpack.c.l.b16 %v1514
  %v1685 = vunpack.c.l.b16 %v1515
  %v1686 = vunpack.c.h.b16 %v1515
  %v1687 = vunpack.c.l.b16 %v1516
  %v1688 = vunpack.c.l.b16 %v1517
  %v1689 = vunpack.c.h.b16 %v1517
  %v1690 = vunpack.c.l.b16 %v1518
  %v1691 = vunpack.c.l.b16 %v1519
  %v1692 = vunpack.c.h.b16 %v1519
  %v1693 = vunpack.c.l.b16 %v1520
  %v1694 = vunpack.c.l.b16 %v1521
  %v1695 = vunpack.c.h.b16 %v1521
  %v1696 = vunpack.c.l.b16 %v1522
  %v1697 = vunpack.c.l.b16 %v1523
  %v1698 = vunpack.c.h.b16 %v1523
  %v1699 = vunpack.c.l.b16 %v1524
  %v1700 = vunpack.c.l.b16 %v1525
  %v1701 = vunpack.c.h.b16 %v1525
  %v1702 = vunpack.c.l.b16 %v1526
  %v1703 = vunpack.c.l.b16 %v1527
  %v1704 = vunpack.c.h.b16 %v1527
  %v1705 = vunpack.c.l.b16 %v1528
  %v1706 = vpack.c.b16 %v1613, %v1610
  %v1707 = vpack.c.b16 %v1614, %v1611
  %v1708 = vpack.c.b16 %v1615, %v1612
  %v1709 = vpack.c.b16 %v1619, %v1616
  %v1710 = vpack.c.b16 %v1620, %v1617
  %v1711 = vpack.c.b16 %v1621, %v1618
  %v1712 = vpack.c.b16 %v1625, %v1622
  %v1713 = vpack.c.b16 %v1626, %v1623
  %v1714 = vpack.c.b16 %v1627, %v1624
  %v1715 = vpack.c.b16 %v1631, %v1628
  %v1716 = vpack.c.b16 %v1632, %v1629
  %v1717 = vpack.c.b16 %v1633, %v1630
  %v1718 = vpack.c.b16 %v1637, %v1634
  %v1719 = vpack.c.b16 %v1638, %v1635
  %v1720 = vpack.c.b16 %v1639, %v1636
  %v1721 = vpack.c.b16 %v1643, %v1640
  %v1722 = vpack.c.b16 %v1644, %v1641
  %v1723 = vpack.c.b16 %v1645, %v1642
  %v1724 = vpack.c.b16 %v1649, %v1646
  %v1725 = vpack.c.b16 %v1650, %v1647
  %v1726 = vpack.c.b16 %v1651, %v1648
  %v1727 = vpack.c.b16 %v1655, %v1652
  %v1728 = vpack.c.b16 %v1656, %v1653
  %v1729 = vpack.c.b16 %v1657, %v1654
  %v1730 = vpack.c.b16 %v1661, %v1658
  %v1731 = vpack.c.b16 %v1662, %v1659
  %v1732 = vpack.c.b16 %v1663, %v1660
  %v1733 = vpack.c.b16 %v1667, %v1664
  %v1734 = vpack.c.b16 %v1668, %v1665
  %v1735 = vpack.c.b16 %v1669, %v1666
  %v1736 = vpack.c.b16 %v1673, %v1670
  %v1737 = vpack.c.b16 %v1674, %v1671
  %v1738 = vpack.c.b16 %v1675, %v1672
  %v1739 = vpack.c.b16 %v1679, %v1676
  %v1740 = vpack.c.b16 %v1680, %v1677
  %v1741 = vpack.c.b16 %v1681, %v1678
  %v1742 = vpack.c.b16 %v1685, %v1682
  %v1743 = vpack.c.b16 %v1686, %v1683
  %v1744 = vpack.c.b16 %v1687, %v1684
  %v1745 = vpack.c.b16 %v1691, %v1688
  %v1746 = vpack.c.b16 %v1692, %v1689
  %v1747 = vpack.c.b16 %v1693, %v1690
  %v1748 = vpack.c.b16 %v1697, %v1694
  %v1749 = vpack.c.b16 %v1698, %v1695
  %v1750 = vpack.c.b16 %v1699, %v1696
  %v1751 = vpack.c.b16 %v1703, %v1700
  %v1752 = vpack.c.b16 %v1704, %v1701
  %v1753 = vpack.c.b16 %v1705, %v1702
  %1802 = vmatprep.subr.bf16.mxu0 %v1707
  %1803 = vmatpush1.bf16.msra.mxu0 %v1706
  %1804 = vmatprep.subr.bf16.mxu0 %v1710
  %1805 = vmatpush1.bf16.msra.mxu0 %v1709
  %1806 = vmatprep.subr.bf16.mxu0 %v1713
  %1807 = vmatpush1.bf16.msra.mxu0 %v1712
  %1808 = vmatprep.subr.bf16.mxu0 %v1716
  %1809 = vmatpush1.bf16.msra.mxu0 %v1715
  %1810 = vmatprep.subr.bf16.mxu0 %v1719
  %1811 = vmatpush1.bf16.msra.mxu0 %v1718
  %1812 = vmatprep.subr.bf16.mxu0 %v1722
  %1813 = vmatpush1.bf16.msra.mxu0 %v1721
  %1814 = vmatprep.subr.bf16.mxu0 %v1725
  %1815 = vmatpush1.bf16.msra.mxu0 %v1724
  %1816 = vmatprep.subr.bf16.mxu0 %v1728
  %1817 = vmatpush1.bf16.msra.mxu0 %v1727
  %1818 = vmatprep.subr.bf16.mxu0 %v1731
  %1819 = vmatpush1.bf16.msra.mxu0 %v1730
  %1820 = vmatprep.subr.bf16.mxu0 %v1734
  %1821 = vmatpush1.bf16.msra.mxu0 %v1733
  %1822 = vmatprep.subr.bf16.mxu0 %v1737
  %1823 = vmatpush1.bf16.msra.mxu0 %v1736
  %1824 = vmatprep.subr.bf16.mxu0 %v1740
  %1825 = vmatpush1.bf16.msra.mxu0 %v1739
  %1826 = vmatprep.subr.bf16.mxu0 %v1743
  %1827 = vmatpush1.bf16.msra.mxu0 %v1742
  %1828 = vmatprep.subr.bf16.mxu0 %v1746
  %1829 = vmatpush1.bf16.msra.mxu0 %v1745
  %1830 = vmatprep.subr.bf16.mxu0 %v1749
  %1831 = vmatpush1.bf16.msra.mxu0 %v1748
  %1832 = vmatprep.subr.bf16.mxu0 %v1752
  %1833 = vmatpush1.bf16.msra.mxu0 %v1751
  %1834 = vmatprep.mubr.bf16.mxu0 %v1458
  %1835 = vmatmul.mubr.bf16.gmra.mrb[0].mxu0 %v1457
  %v1836 = vpop.f32.mrb[0].mxu0
  %v1837 = vadd.f32 %v1534, %v1836
  %v1838 = vpop.f32.mrb[0].mxu0
  %v1839 = vadd.f32 %v1538, %v1838
  %v1840 = vpop.f32.mrb[0].mxu0
  %v1841 = vadd.f32 %v1534, %v1840
  %v1842 = vpop.f32.mrb[0].mxu0
  %v1843 = vadd.f32 %v1538, %v1842
  %1844 = vmatprep.mubr.bf16.mxu0 %v1460
  %1845 = vmatmul.mubr.bf16.gmra.mrb[0].mxu0 %v1459
  %v1846 = vpop.f32.mrb[0].mxu0
  %v1847 = vadd.f32 %v1534, %v1846
  %v1848 = vpop.f32.mrb[0].mxu0
  %v1849 = vadd.f32 %v1538, %v1848
  %v1850 = vpop.f32.mrb[0].mxu0
  %v1851 = vadd.f32 %v1534, %v1850
  %v1852 = vpop.f32.mrb[0].mxu0
  %v1853 = vadd.f32 %v1538, %v1852
  %1854 = vmatprep.mubr.bf16.mxu0 %v1462
  %1855 = vmatmul.mubr.bf16.gmra.mrb[0].mxu0 %v1461
  %v1856 = vpop.f32.mrb[0].mxu0
  %v1857 = vadd.f32 %v1534, %v1856
  %v1858 = vpop.f32.mrb[0].mxu0
  %v1859 = vadd.f32 %v1538, %v1858
  %v1860 = vpop.f32.mrb[0].mxu0
  %v1861 = vadd.f32 %v1534, %v1860
  %v1862 = vpop.f32.mrb[0].mxu0
  %v1863 = vadd.f32 %v1538, %v1862
  %1864 = vmatprep.mubr.bf16.mxu0 %v1464
  %1865 = vmatmul.mubr.bf16.gmra.mrb[0].mxu0 %v1463
  %v1866 = vpop.f32.mrb[0].mxu0
  %v1867 = vadd.f32 %v1534, %v1866
  %v1868 = vpop.f32.mrb[0].mxu0
  %v1869 = vadd.f32 %v1538, %v1868
  %v1870 = vpop.f32.mrb[0].mxu0
  %v1871 = vadd.f32 %v1534, %v1870
  %v1872 = vpop.f32.mrb[0].mxu0
  %v1873 = vadd.f32 %v1538, %v1872
  %1874 = vdwg.mxu0
  %1875 = vmatprep.subr.bf16.mxu0 0
  %1876 = vmatpush1.bf16.msra.mxu0 %v1708
  %1877 = vmatprep.subr.bf16.mxu0 0
  %1878 = vmatpush1.bf16.msra.mxu0 %v1711
  %1879 = vmatprep.subr.bf16.mxu0 0
  %1880 = vmatpush1.bf16.msra.mxu0 %v1714
  %1881 = vmatprep.subr.bf16.mxu0 0
  %1882 = vmatpush1.bf16.msra.mxu0 %v1717
  %1883 = vmatprep.subr.bf16.mxu0 0
  %1884 = vmatpush1.bf16.msra.mxu0 %v1720
  %1885 = vmatprep.subr.bf16.mxu0 0
  %1886 = vmatpush1.bf16.msra.mxu0 %v1723
  %1887 = vmatprep.subr.bf16.mxu0 0
  %1888 = vmatpush1.bf16.msra.mxu0 %v1726
  %1889 = vmatprep.subr.bf16.mxu0 0
  %1890 = vmatpush1.bf16.msra.mxu0 %v1729
  %1891 = vmatprep.subr.bf16.mxu0 0
  %1892 = vmatpush1.bf16.msra.mxu0 %v1732
  %1893 = vmatprep.subr.bf16.mxu0 0
  %1894 = vmatpush1.bf16.msra.mxu0 %v1735
  %1895 = vmatprep.subr.bf16.mxu0 0
  %1896 = vmatpush1.bf16.msra.mxu0 %v1738
  %1897 = vmatprep.subr.bf16.mxu0 0
  %1898 = vmatpush1.bf16.msra.mxu0 %v1741
  %1899 = vmatprep.subr.bf16.mxu0 0
  %1900 = vmatpush1.bf16.msra.mxu0 %v1744
  %1901 = vmatprep.subr.bf16.mxu0 0
  %1902 = vmatpush1.bf16.msra.mxu0 %v1747
  %1903 = vmatprep.subr.bf16.mxu0 0
  %1904 = vmatpush1.bf16.msra.mxu0 %v1750
  %1905 = vmatprep.subr.bf16.mxu0 0
  %1906 = vmatpush1.bf16.msra.mxu0 %v1753
  %1907 = vmatprep.mubr.bf16.mxu0 %v1458
  %1908 = vmatmul.mubr.bf16.gmra.mrb[0].mxu0 %v1457
  %v1909 = vpop.f32.mrb[0].mxu0
  %v1910 = vadd.f32 %v1542, %v1909
  %v1911 = vpop.f32.mrb[0].mxu0
  %v1912 = vpop.f32.mrb[0].mxu0
  %v1913 = vadd.f32 %v1542, %v1912
  %v1914 = vpop.f32.mrb[0].mxu0
  %1915 = vmatprep.mubr.bf16.mxu0 %v1460
  %1916 = vmatmul.mubr.bf16.gmra.mrb[0].mxu0 %v1459
  %v1917 = vpop.f32.mrb[0].mxu0
  %v1918 = vadd.f32 %v1542, %v1917
  %v1919 = vpop.f32.mrb[0].mxu0
  %v1920 = vpop.f32.mrb[0].mxu0
  %v1921 = vadd.f32 %v1542, %v1920
  %v1922 = vpop.f32.mrb[0].mxu0
  %1923 = vmatprep.mubr.bf16.mxu0 %v1462
  %1924 = vmatmul.mubr.bf16.gmra.mrb[0].mxu0 %v1461
  %v1925 = vpop.f32.mrb[0].mxu0
  %v1926 = vadd.f32 %v1542, %v1925
  %v1927 = vpop.f32.mrb[0].mxu0
  %v1928 = vpop.f32.mrb[0].mxu0
  %v1929 = vadd.f32 %v1542, %v1928
  %v1930 = vpop.f32.mrb[0].mxu0
  %1931 = vmatprep.mubr.bf16.mxu0 %v1464
  %1932 = vmatmul.mubr.bf16.gmra.mrb[0].mxu0 %v1463
  %v1933 = vpop.f32.mrb[0].mxu0
  %v1934 = vadd.f32 %v1542, %v1933
  %v1935 = vpop.f32.mrb[0].mxu0
  %v1936 = vpop.f32.mrb[0].mxu0
  %v1937 = vadd.f32 %v1542, %v1936
  %v1938 = vpop.f32.mrb[0].mxu0
  %1939 = vdwg.mxu0
  %1940 = vst [vmem:[%s6] sm:$0xff] %v1837
  %1941 = vst [vmem:[%s6 + $0x8] sm:$0xff] %v1839
  %1942 = vst [vmem:[%s6 + $0x10] sm:$0xff] %v1910
  %1943 = vst [vmem:[%s6 + $0x18] sm:$0xff] %v1841
  %1944 = vst [vmem:[%s6 + $0x20] sm:$0xff] %v1843
  %1945 = vst [vmem:[%s6 + $0x28] sm:$0xff] %v1913
  %1946 = vst [vmem:[%s6 + $0x30] sm:$0xff] %v1847
  %1947 = vst [vmem:[%s6 + $0x38] sm:$0xff] %v1849
  %1948 = vst [vmem:[%s6 + $0x40] sm:$0xff] %v1918
  %1949 = vst [vmem:[%s6 + $0x48] sm:$0xff] %v1851
  %1950 = vst [vmem:[%s6 + $0x50] sm:$0xff] %v1853
  %1951 = vst [vmem:[%s6 + $0x58] sm:$0xff] %v1921
  %1952 = vst [vmem:[%s6 + $0x60] sm:$0xff] %v1857
  %1953 = vst [vmem:[%s6 + $0x68] sm:$0xff] %v1859
  %1954 = vst [vmem:[%s6 + $0x70] sm:$0xff] %v1926
  %1955 = vst [vmem:[%s6 + $0x78] sm:$0xff] %v1861
  %1956 = vst [vmem:[%s6 + $0x80] sm:$0xff] %v1863
  %1957 = vst [vmem:[%s6 + $0x88] sm:$0xff] %v1929
  %1958 = vst [vmem:[%s6 + $0x90] sm:$0xff] %v1867
  %1959 = vst [vmem:[%s6 + $0x98] sm:$0xff] %v1869
  %1960 = vst [vmem:[%s6 + $0xa0] sm:$0xff] %v1934
  %1961 = vst [vmem:[%s6 + $0xa8] sm:$0xff] %v1871
  %1962 = vst [vmem:[%s6 + $0xb0] sm:$0xff] %v1873
  %1963 = vst [vmem:[%s6 + $0xb8] sm:$0xff] %v1937
  // Predicated region
  $region22: #{simple_enhancer_forward.3} parent=0 // pred_check
    _
  $region23: #{simple_enhancer_forward.3} parent=0 // pred_check_branch
    %1965 = sbr.rel (0) target = $region25
  $region24: #{simple_enhancer_forward.3} parent=0 // pred_region
    _
  $region25: #{simple_enhancer_forward.3} parent=0 // pred_fallthru
    _
  // Predicated region
  $region26: #{simple_enhancer_forward.3} parent=0 // pred_check
    _
  $region27: #{simple_enhancer_forward.3} parent=0 // pred_check_branch
    %1967 = sbr.rel (0) target = $region29
  $region28: #{simple_enhancer_forward.3} parent=0 // pred_region
    _
  $region29: #{simple_enhancer_forward.3} parent=0 // pred_fallthru
    _
  // Predicated region
  $region30: #{simple_enhancer_forward.3} parent=0 // pred_check
    _
  $region31: #{simple_enhancer_forward.3} parent=0 // pred_check_branch
    %1969 = sbr.rel (0) target = $region33
  $region32: #{simple_enhancer_forward.3} parent=0 // pred_region
    _
  $region33: #{simple_enhancer_forward.3} parent=0 // pred_fallthru
    _
  // Predicated region
  $region34: #{simple_enhancer_forward.3} parent=0 // pred_check
    _
  $region35: #{simple_enhancer_forward.3} parent=0 // pred_check_branch
    %1971 = sbr.rel (0) target = $region37
  $region36: #{simple_enhancer_forward.3} parent=0 // pred_region
    _
  $region37: #{simple_enhancer_forward.3} parent=0 // pred_fallthru
    _

</llo_original>
